<compile_context>
chip_gen: v7x
topology: tpu7x:2x2x1
jax: 0.10.0
libtpu: 0.0.40
codegen_flags: <defaults>
</compile_context>

<pallas_src>
import math
import functools

import jax
import jax.numpy as jnp
from jax import lax
from jax.experimental import pallas as pl
from jax.experimental.pallas import tpu as pltpu


# --------------------------------------------------------------------------
# factorize table (copied from the reference)
# --------------------------------------------------------------------------
_FACTORIZE = {
    (1, 3): [1, 1], (1, 4): [1, 1, 1], (3, 3): [1, 3], (3, 4): [1, 1, 3],
    (4, 3): [2, 2], (4, 4): [1, 2, 2], (8, 3): [2, 4], (8, 4): [2, 2, 2],
    (16, 3): [4, 4], (16, 4): [2, 2, 4], (32, 3): [4, 8], (32, 4): [2, 4, 4],
    (64, 3): [8, 8], (64, 4): [4, 4, 4], (128, 3): [8, 16],
    (128, 4): [4, 4, 8], (256, 3): [16, 16], (256, 4): [4, 8, 8],
    (512, 3): [16, 32], (512, 4): [8, 8, 8], (1024, 3): [32, 32],
    (1024, 4): [8, 8, 16],
}


def factorize(number, order):
    return _FACTORIZE[(number, order)]


# --------------------------------------------------------------------------
# tile-size helpers
# --------------------------------------------------------------------------
def _pick_tile_h(ho, wo, target_rows=1024):
    """Largest divisor th of Ho with th*Wo <= target_rows and a legal block."""
    divs = [d for d in range(1, ho + 1) if ho % d == 0]
    legal = [d for d in divs if (d * wo) % 8 == 0 or d == ho]
    small = [d for d in legal if d * wo <= target_rows]
    if small:
        return max(small)
    return min(legal)


def _pick_group_pack(groups, og):
    """Largest divisor of `groups` whose packed lane width stays <= 128."""
    g_pack = 1
    for d in range(1, groups + 1):
        if groups % d == 0 and d * og <= 128:
            g_pack = d
    return g_pack


# --------------------------------------------------------------------------
# Pallas kernel: K-fused im2col conv (per group-pack, batch, M-tile)
# --------------------------------------------------------------------------
def _make_conv_kernel(kh, kw, th, wo, stride, dilation, cg, og, g_pack):
    kk = kh * kw * cg          # fused K depth per group

    def kernel(x_ref, w_ref, b_ref, o_ref, col_ref):
        # x_ref:   (g_pack*stride*stride, Hq, Wq, Cg) bf16  phase-split input
        # w_ref:   (g_pack, kh*kw*Cg, Og)             bf16  per-group K-fused weight
        # b_ref:   (1, g_pack*Og)                     f32
        # o_ref:   (th*Wo, g_pack*Og)                 f32   lane-dense output tile
        # col_ref: (th*Wo, g_pack*kh*kw*Cg)           bf16  VMEM im2col scratch
        m = pl.program_id(2)
        row0 = m * th                                 # tile offset in output rows

        # ---- build the im2col slab once per tile (contiguous slices only) ----
        for gp in range(g_pack):
            for i in range(kh):
                qi, ai = divmod(i * dilation, stride)
                for j in range(kw):
                    qj, aj = divmod(j * dilation, stride)
                    pidx = gp * stride * stride + ai * stride + aj
                    tap = x_ref[pidx, pl.ds(row0 + qi, th), pl.ds(qj, wo), :]
                    c0 = gp * kk + (i * kw + j) * cg
                    col_ref[:, c0:c0 + cg] = tap.reshape(th * wo, cg)

        # ---- one K-fused MXU matmul per packed group; single lane-dense store ----
        outs = []
        for gp in range(g_pack):
            a = col_ref[:, gp * kk:(gp + 1) * kk]             # (th*Wo, kk) bf16
            outs.append(jnp.dot(a, w_ref[gp],
                                preferred_element_type=jnp.float32))
        res = outs[0] if g_pack == 1 else jnp.concatenate(outs, axis=-1)
        o_ref[...] = res + b_ref[...]

    return kernel


# --------------------------------------------------------------------------
# parameter init (mirrors the module's init_params, deterministic via PRNGKey)
# --------------------------------------------------------------------------
def rcp_o4_conv2d_init(key, in_channels, out_channels, kernel_size,
                       rank, groups=1, bias=True):
    order = 4
    in_shape = factorize(in_channels // groups, order)
    out_shape = factorize(out_channels // groups, order)
    kh, kw = kernel_size, kernel_size

    keys = jax.random.split(key, order + 1)
    kernels = []
    for l in range(order - 1):
        bound = math.sqrt(6.0 / (in_shape[l] + out_shape[l]))
        kernels.append(jax.random.uniform(
            keys[l], (in_shape[l], out_shape[l], rank),
            minval=-bound, maxval=bound, dtype=jnp.float32))
    bound = math.sqrt(6.0 / (kh * kw * rank + kh * kw * 1))
    kernels.append(jax.random.uniform(
        keys[order - 1], (groups, kh, kw, rank),
        minval=-bound, maxval=bound, dtype=jnp.float32))
    b = jnp.zeros((out_channels,), jnp.float32) if bias else None
    return kernels, b


# --------------------------------------------------------------------------
# RCP_O4_Conv2d forward
# --------------------------------------------------------------------------
def rcp_o4_conv2d_forward(x, kernels, bias_vec, *, in_channels, out_channels,
                          kernel_size, stride=1, padding=0, dilation=1,
                          groups=1):
    """x: NCHW float32.  Returns NCHW float32."""
    kh = kw = kernel_size
    k0, k1, k2, k3 = kernels
    G = groups
    Cg = in_channels // groups
    Og = out_channels // groups
    s = stride

    # ---- CP weight reconstruction (parameter glue, plain JAX) ----
    weights_l = jnp.einsum('iar,jbr->ijabr', k0, k1)
    weights_r = jnp.einsum('kcr,ghwr->ghwkcr', k2, k3)
    weights = jnp.einsum('ijabr,ghwkcr->gijkabchw', weights_l, weights_r)
    weights = weights.reshape(out_channels, Cg, kh, kw)

    # ---- lane packing of groups (Og < 128) ----
    g_pack = _pick_group_pack(G, Og)
    GB = G // g_pack
    KK = kh * kw * Cg

    # K-fused weight: (GB, g_pack, kh*kw*Cg, Og), K ordering = (i, j, c), bf16.
    w_k = weights.reshape(G, Og, Cg, kh, kw).transpose(0, 3, 4, 2, 1)
    w_k = w_k.reshape(GB, g_pack, KK, Og).astype(jnp.bfloat16)

    if bias_vec is None:
        bias_vec = jnp.zeros((out_channels,), jnp.float32)
    b_k = bias_vec.reshape(GB, 1, g_pack * Og).astype(jnp.float32)

    # ---- zero padding + stride-phase decomposition (padding_mode='zeros') ----
    p = padding
    N, _, H, W = x.shape
    Hp, Wp = H + 2 * p, W + 2 * p
    Ho = (Hp - dilation * (kh - 1) - 1) // s + 1
    Wo = (Wp - dilation * (kw - 1) - 1) // s + 1
    Hq = -(-Hp // s)
    Wq = -(-Wp // s)

    xb = x.astype(jnp.bfloat16)
    xb = jnp.pad(xb, ((0, 0), (0, 0), (p, p + Hq * s - Hp), (p, p + Wq * s - Wp)))
    # (N, C, Hq*s, Wq*s) -> (N, G*s*s, Hq, Wq, Cg): every in-kernel tap read is
    # a contiguous slice of one (Hq, Wq, Cg) stride-phase plane.
    x_ph = xb.reshape(N, G, Cg, Hq, s, Wq, s).transpose(0, 1, 4, 6, 3, 5, 2)
    x_ph = x_ph.reshape(N, G * s * s, Hq, Wq, Cg)
    # TODO(synk): fold pad / phase transpose / bf16 cast into the kernel DMA path.

    th = _pick_tile_h(Ho, Wo)
    m_tiles = Ho // th

    kernel = _make_conv_kernel(kh, kw, th, Wo, s, dilation, Cg, Og, g_pack)

    flops = 2 * N * Ho * Wo * out_channels * Cg * kh * kw
    bytes_accessed = (x_ph.size * 2            # each gb reads its own channel slice
                      + w_k.size * 2           # weights resident across N*M steps
                      + b_k.size * 4
                      + N * GB * Ho * Wo * g_pack * Og * 4)

    out = pl.pallas_call(
        kernel,
        out_shape=jax.ShapeDtypeStruct((N, GB, Ho * Wo, g_pack * Og), jnp.float32),
        # weight-invariant axes innermost: weights re-DMA'd only when gb changes.
        grid=(GB, N, m_tiles),
        in_specs=[
            pl.BlockSpec((None, g_pack * s * s, Hq, Wq, Cg),
                         lambda gb, n, m: (n, gb, 0, 0, 0)),
            pl.BlockSpec((None, g_pack, KK, Og),
                         lambda gb, n, m: (gb, 0, 0, 0)),
            pl.BlockSpec((None, 1, g_pack * Og),
                         lambda gb, n, m: (gb, 0, 0)),
        ],
        out_specs=pl.BlockSpec((None, None, th * Wo, g_pack * Og),
                               lambda gb, n, m: (n, gb, m, 0)),
        scratch_shapes=[pltpu.VMEM((th * Wo, g_pack * KK), jnp.bfloat16)],
        compiler_params=pltpu.CompilerParams(
            dimension_semantics=("parallel", "parallel", "parallel")),
        cost_estimate=pl.CostEstimate(flops=flops, transcendentals=0,
                                      bytes_accessed=bytes_accessed),
    )(x_ph, w_k, b_k)

    # (N, GB, Ho*Wo, g_pack*Og) -> NCHW (single layout transform on the output)
    out = out.reshape(N, GB, Ho, Wo, g_pack, Og).transpose(0, 1, 4, 5, 2, 3)
    return out.reshape(N, out_channels, Ho, Wo)


# --------------------------------------------------------------------------
# main
# --------------------------------------------------------------------------
if __name__ == "__main__":
    # small shapes consistent with the module
    batch, in_channels, out_channels = 2, 8, 16
    H = W = 16
    kernel_size, rank, stride, padding, dilation, groups = 3, 4, 1, 1, 1, 1

    key = jax.random.PRNGKey(0)
    kx, kp = jax.random.split(key)
    x = jax.random.normal(kx, (batch, in_channels, H, W), dtype=jnp.float32)

    kernels, bias_vec = rcp_o4_conv2d_init(
        kp, in_channels, out_channels, kernel_size, rank,
        groups=groups, bias=True)

    fwd = functools.partial(
        rcp_o4_conv2d_forward,
        in_channels=in_channels, out_channels=out_channels,
        kernel_size=kernel_size, stride=stride, padding=padding,
        dilation=dilation, groups=groups)

    out = jax.jit(fwd)(x, kernels, bias_vec)
    out = jax.block_until_ready(out)

    # reference: XLA conv with the same reconstructed weight, using the same
    # bf16-rounded operands (f32 accumulation) as the Pallas kernel.
    weights_l = jnp.einsum('iar,jbr->ijabr', kernels[0], kernels[1])
    weights_r = jnp.einsum('kcr,ghwr->ghwkcr', kernels[2], kernels[3])
    w_full = jnp.einsum('ijabr,ghwkcr->gijkabchw', weights_l, weights_r)
    w_full = w_full.reshape(out_channels, in_channels // groups,
                            kernel_size, kernel_size)
    x_bf = x.astype(jnp.bfloat16).astype(jnp.float32)
    w_bf = w_full.astype(jnp.bfloat16).astype(jnp.float32)
    ref = lax.conv_general_dilated(
        x_bf, w_bf, window_strides=(stride, stride),
        padding=[(padding, padding), (padding, padding)],
        rhs_dilation=(dilation, dilation),
        feature_group_count=groups,
        dimension_numbers=('NCHW', 'OIHW', 'NCHW'),
        precision=lax.Precision.HIGHEST)
    ref = ref + bias_vec[None, :, None, None]

    assert out.shape == (batch, out_channels, H, W), out.shape
    max_err = float(jnp.max(jnp.abs(out - ref)))
    assert jnp.allclose(out, ref, atol=2e-3, rtol=2e-3), max_err

    print("KERNEL_OK")
</pallas_src>

<mosaic_0001>
module attributes {stable_mosaic.version = 11 : i64} {
  func.func @kernel(%arg0: i32, %arg1: i32, %arg2: i32, %arg3: memref<1x1x18x18x8xbf16, #tpu.memory_space<vmem>>, %arg4: memref<1x1x72x16xbf16, #tpu.memory_space<vmem>>, %arg5: memref<1x1x16xf32, #tpu.memory_space<vmem>>, %arg6: memref<1x1x256x16xf32, #tpu.memory_space<vmem>>, %arg7: memref<256x72xbf16, #tpu.memory_space<vmem>>) attributes {dimension_semantics = [#tpu.dimension_semantics<parallel>, #tpu.dimension_semantics<parallel>, #tpu.dimension_semantics<parallel>], iteration_bounds = array<i64: 1, 2, 1>, scalar_prefetch = 0 : i64, scratch_operands = 1 : i64, tpu.core_type = #tpu.core_type<tc>, window_params = [{transform_indices = @transform_0, window_bounds = array<i64: 1, 1, 18, 18, 8>}, {transform_indices = @transform_1, window_bounds = array<i64: 1, 1, 72, 16>}, {transform_indices = @transform_2, window_bounds = array<i64: 1, 1, 16>}, {transform_indices = @transform_3, window_bounds = array<i64: 1, 1, 256, 16>}]} {
    %c16_i32 = arith.constant 16 : i32
    %0 = arith.muli %arg2, %c16_i32 : i32
    %c0_i32 = arith.constant 0 : i32
    %1 = arith.addi %0, %c0_i32 : i32
    %c0 = arith.constant 0 : index
    %c0_0 = arith.constant 0 : index
    %2 = arith.index_cast %1 : i32 to index
    %c0_1 = arith.constant 0 : index
    %c0_2 = arith.constant 0 : index
    %3 = vector.load %arg3[%c0, %c0_0, %2, %c0_1, %c0_2] : memref<1x1x18x18x8xbf16, #tpu.memory_space<vmem>>, vector<1x1x16x16x8xbf16>
    %4 = vector.shape_cast %3 : vector<1x1x16x16x8xbf16> to vector<16x16x8xbf16>
    %5 = vector.shape_cast %4 : vector<16x16x8xbf16> to vector<256x8xbf16>
    %c0_3 = arith.constant 0 : index
    %c0_4 = arith.constant 0 : index
    %6 = vector.load %arg7[%c0_3, %c0_4] : memref<256x72xbf16, #tpu.memory_space<vmem>>, vector<256x8xbf16>
    tpu.vector_store %arg7[%c0_3, %c0_4], %5 {strides = array<i32>} : memref<256x72xbf16, #tpu.memory_space<vmem>>, vector<256x8xbf16>,
    %c0_i32_5 = arith.constant 0 : i32
    %7 = arith.addi %0, %c0_i32_5 : i32
    %c0_6 = arith.constant 0 : index
    %c0_7 = arith.constant 0 : index
    %8 = arith.index_cast %7 : i32 to index
    %c1 = arith.constant 1 : index
    %c0_8 = arith.constant 0 : index
    %9 = vector.load %arg3[%c0_6, %c0_7, %8, %c1, %c0_8] : memref<1x1x18x18x8xbf16, #tpu.memory_space<vmem>>, vector<1x1x16x16x8xbf16>
    %10 = vector.shape_cast %9 : vector<1x1x16x16x8xbf16> to vector<16x16x8xbf16>
    %11 = vector.shape_cast %10 : vector<16x16x8xbf16> to vector<256x8xbf16>
    %c0_9 = arith.constant 0 : index
    %c8 = arith.constant 8 : index
    %12 = vector.load %arg7[%c0_9, %c8] : memref<256x72xbf16, #tpu.memory_space<vmem>>, vector<256x8xbf16>
    tpu.vector_store %arg7[%c0_9, %c8], %11 {strides = array<i32>} : memref<256x72xbf16, #tpu.memory_space<vmem>>, vector<256x8xbf16>,
    %c0_i32_10 = arith.constant 0 : i32
    %13 = arith.addi %0, %c0_i32_10 : i32
    %c0_11 = arith.constant 0 : index
    %c0_12 = arith.constant 0 : index
    %14 = arith.index_cast %13 : i32 to index
    %c2 = arith.constant 2 : index
    %c0_13 = arith.constant 0 : index
    %15 = vector.load %arg3[%c0_11, %c0_12, %14, %c2, %c0_13] : memref<1x1x18x18x8xbf16, #tpu.memory_space<vmem>>, vector<1x1x16x16x8xbf16>
    %16 = vector.shape_cast %15 : vector<1x1x16x16x8xbf16> to vector<16x16x8xbf16>
    %17 = vector.shape_cast %16 : vector<16x16x8xbf16> to vector<256x8xbf16>
    %c0_14 = arith.constant 0 : index
    %c16 = arith.constant 16 : index
    %18 = vector.load %arg7[%c0_14, %c16] : memref<256x72xbf16, #tpu.memory_space<vmem>>, vector<256x8xbf16>
    tpu.vector_store %arg7[%c0_14, %c16], %17 {strides = array<i32>} : memref<256x72xbf16, #tpu.memory_space<vmem>>, vector<256x8xbf16>,
    %c1_i32 = arith.constant 1 : i32
    %19 = arith.addi %0, %c1_i32 : i32
    %c0_15 = arith.constant 0 : index
    %c0_16 = arith.constant 0 : index
    %20 = arith.index_cast %19 : i32 to index
    %c0_17 = arith.constant 0 : index
    %c0_18 = arith.constant 0 : index
    %21 = vector.load %arg3[%c0_15, %c0_16, %20, %c0_17, %c0_18] : memref<1x1x18x18x8xbf16, #tpu.memory_space<vmem>>, vector<1x1x16x16x8xbf16>
    %22 = vector.shape_cast %21 : vector<1x1x16x16x8xbf16> to vector<16x16x8xbf16>
    %23 = vector.shape_cast %22 : vector<16x16x8xbf16> to vector<256x8xbf16>
    %c0_19 = arith.constant 0 : index
    %c24 = arith.constant 24 : index
    %24 = vector.load %arg7[%c0_19, %c24] : memref<256x72xbf16, #tpu.memory_space<vmem>>, vector<256x8xbf16>
    tpu.vector_store %arg7[%c0_19, %c24], %23 {strides = array<i32>} : memref<256x72xbf16, #tpu.memory_space<vmem>>, vector<256x8xbf16>,
    %c1_i32_20 = arith.constant 1 : i32
    %25 = arith.addi %0, %c1_i32_20 : i32
    %c0_21 = arith.constant 0 : index
    %c0_22 = arith.constant 0 : index
    %26 = arith.index_cast %25 : i32 to index
    %c1_23 = arith.constant 1 : index
    %c0_24 = arith.constant 0 : index
    %27 = vector.load %arg3[%c0_21, %c0_22, %26, %c1_23, %c0_24] : memref<1x1x18x18x8xbf16, #tpu.memory_space<vmem>>, vector<1x1x16x16x8xbf16>
    %28 = vector.shape_cast %27 : vector<1x1x16x16x8xbf16> to vector<16x16x8xbf16>
    %29 = vector.shape_cast %28 : vector<16x16x8xbf16> to vector<256x8xbf16>
    %c0_25 = arith.constant 0 : index
    %c32 = arith.constant 32 : index
    %30 = vector.load %arg7[%c0_25, %c32] : memref<256x72xbf16, #tpu.memory_space<vmem>>, vector<256x8xbf16>
    tpu.vector_store %arg7[%c0_25, %c32], %29 {strides = array<i32>} : memref<256x72xbf16, #tpu.memory_space<vmem>>, vector<256x8xbf16>,
    %c1_i32_26 = arith.constant 1 : i32
    %31 = arith.addi %0, %c1_i32_26 : i32
    %c0_27 = arith.constant 0 : index
    %c0_28 = arith.constant 0 : index
    %32 = arith.index_cast %31 : i32 to index
    %c2_29 = arith.constant 2 : index
    %c0_30 = arith.constant 0 : index
    %33 = vector.load %arg3[%c0_27, %c0_28, %32, %c2_29, %c0_30] : memref<1x1x18x18x8xbf16, #tpu.memory_space<vmem>>, vector<1x1x16x16x8xbf16>
    %34 = vector.shape_cast %33 : vector<1x1x16x16x8xbf16> to vector<16x16x8xbf16>
    %35 = vector.shape_cast %34 : vector<16x16x8xbf16> to vector<256x8xbf16>
    %c0_31 = arith.constant 0 : index
    %c40 = arith.constant 40 : index
    %36 = vector.load %arg7[%c0_31, %c40] : memref<256x72xbf16, #tpu.memory_space<vmem>>, vector<256x8xbf16>
    tpu.vector_store %arg7[%c0_31, %c40], %35 {strides = array<i32>} : memref<256x72xbf16, #tpu.memory_space<vmem>>, vector<256x8xbf16>,
    %c2_i32 = arith.constant 2 : i32
    %37 = arith.addi %0, %c2_i32 : i32
    %c0_32 = arith.constant 0 : index
    %c0_33 = arith.constant 0 : index
    %38 = arith.index_cast %37 : i32 to index
    %c0_34 = arith.constant 0 : index
    %c0_35 = arith.constant 0 : index
    %39 = vector.load %arg3[%c0_32, %c0_33, %38, %c0_34, %c0_35] : memref<1x1x18x18x8xbf16, #tpu.memory_space<vmem>>, vector<1x1x16x16x8xbf16>
    %40 = vector.shape_cast %39 : vector<1x1x16x16x8xbf16> to vector<16x16x8xbf16>
    %41 = vector.shape_cast %40 : vector<16x16x8xbf16> to vector<256x8xbf16>
    %c0_36 = arith.constant 0 : index
    %c48 = arith.constant 48 : index
    %42 = vector.load %arg7[%c0_36, %c48] : memref<256x72xbf16, #tpu.memory_space<vmem>>, vector<256x8xbf16>
    tpu.vector_store %arg7[%c0_36, %c48], %41 {strides = array<i32>} : memref<256x72xbf16, #tpu.memory_space<vmem>>, vector<256x8xbf16>,
    %c2_i32_37 = arith.constant 2 : i32
    %43 = arith.addi %0, %c2_i32_37 : i32
    %c0_38 = arith.constant 0 : index
    %c0_39 = arith.constant 0 : index
    %44 = arith.index_cast %43 : i32 to index
    %c1_40 = arith.constant 1 : index
    %c0_41 = arith.constant 0 : index
    %45 = vector.load %arg3[%c0_38, %c0_39, %44, %c1_40, %c0_41] : memref<1x1x18x18x8xbf16, #tpu.memory_space<vmem>>, vector<1x1x16x16x8xbf16>
    %46 = vector.shape_cast %45 : vector<1x1x16x16x8xbf16> to vector<16x16x8xbf16>
    %47 = vector.shape_cast %46 : vector<16x16x8xbf16> to vector<256x8xbf16>
    %c0_42 = arith.constant 0 : index
    %c56 = arith.constant 56 : index
    %48 = vector.load %arg7[%c0_42, %c56] : memref<256x72xbf16, #tpu.memory_space<vmem>>, vector<256x8xbf16>
    tpu.vector_store %arg7[%c0_42, %c56], %47 {strides = array<i32>} : memref<256x72xbf16, #tpu.memory_space<vmem>>, vector<256x8xbf16>,
    %c2_i32_43 = arith.constant 2 : i32
    %49 = arith.addi %0, %c2_i32_43 : i32
    %c0_44 = arith.constant 0 : index
    %c0_45 = arith.constant 0 : index
    %50 = arith.index_cast %49 : i32 to index
    %c2_46 = arith.constant 2 : index
    %c0_47 = arith.constant 0 : index
    %51 = vector.load %arg3[%c0_44, %c0_45, %50, %c2_46, %c0_47] : memref<1x1x18x18x8xbf16, #tpu.memory_space<vmem>>, vector<1x1x16x16x8xbf16>
    %52 = vector.shape_cast %51 : vector<1x1x16x16x8xbf16> to vector<16x16x8xbf16>
    %53 = vector.shape_cast %52 : vector<16x16x8xbf16> to vector<256x8xbf16>
    %c0_48 = arith.constant 0 : index
    %c64 = arith.constant 64 : index
    %54 = vector.load %arg7[%c0_48, %c64] : memref<256x72xbf16, #tpu.memory_space<vmem>>, vector<256x8xbf16>
    tpu.vector_store %arg7[%c0_48, %c64], %53 {strides = array<i32>} : memref<256x72xbf16, #tpu.memory_space<vmem>>, vector<256x8xbf16>,
    %c0_49 = arith.constant 0 : index
    %c0_50 = arith.constant 0 : index
    %55 = vector.load %arg7[%c0_49, %c0_50] : memref<256x72xbf16, #tpu.memory_space<vmem>>, vector<256x72xbf16>
    %c0_51 = arith.constant 0 : index
    %c0_52 = arith.constant 0 : index
    %c0_53 = arith.constant 0 : index
    %c0_54 = arith.constant 0 : index
    %56 = vector.load %arg4[%c0_51, %c0_52, %c0_53, %c0_54] : memref<1x1x72x16xbf16, #tpu.memory_space<vmem>>, vector<1x1x72x16xbf16>
    %57 = vector.shape_cast %56 : vector<1x1x72x16xbf16> to vector<72x16xbf16>
    %cst = arith.constant dense<0.000000e+00> : vector<256x16xf32>
    %58 = tpu.matmul %55, %57, %cst {dimension_numbers = #tpu.dot_dimension_numbers<[1], [0], [0], [1], [0, 0, 1, 1], [], []>} : vector<256x72xbf16>, vector<72x16xbf16>, vector<256x16xf32> -> vector<256x16xf32>
    %c0_55 = arith.constant 0 : index
    %c0_56 = arith.constant 0 : index
    %c0_57 = arith.constant 0 : index
    %59 = vector.load %arg5[%c0_55, %c0_56, %c0_57] : memref<1x1x16xf32, #tpu.memory_space<vmem>>, vector<1x1x16xf32>
    %60 = vector.shape_cast %59 : vector<1x1x16xf32> to vector<1x16xf32>
    %61 = vector.broadcast %60 : vector<1x16xf32> to vector<256x16xf32>
    %62 = arith.addf %58, %61 : vector<256x16xf32>
    %c0_58 = arith.constant 0 : index
    %c0_59 = arith.constant 0 : index
    %c0_60 = arith.constant 0 : index
    %c0_61 = arith.constant 0 : index
    %63 = vector.load %arg6[%c0_58, %c0_59, %c0_60, %c0_61] : memref<1x1x256x16xf32, #tpu.memory_space<vmem>>, vector<1x1x256x16xf32>
    %64 = vector.shape_cast %63 : vector<1x1x256x16xf32> to vector<256x16xf32>
    %65 = vector.shape_cast %62 : vector<256x16xf32> to vector<1x1x256x16xf32>
    tpu.vector_store %arg6[%c0_58, %c0_59, %c0_60, %c0_61], %65 {strides = array<i32>} : memref<1x1x256x16xf32, #tpu.memory_space<vmem>>, vector<1x1x256x16xf32>,
    return
  }
  func.func @transform_0(%arg0: i32, %arg1: i32, %arg2: i32) -> (i32, i32, i32, i32, i32) {
    %c0_i32 = arith.constant 0 : i32
    %c0_i32_0 = arith.constant 0 : i32
    %c0_i32_1 = arith.constant 0 : i32
    %c0_i32_2 = arith.constant 0 : i32
    return %arg1, %arg0, %c0_i32, %c0_i32_0, %c0_i32_1 : i32, i32, i32, i32, i32
  }
  func.func @transform_1(%arg0: i32, %arg1: i32, %arg2: i32) -> (i32, i32, i32, i32) {
    %c0_i32 = arith.constant 0 : i32
    %c0_i32_0 = arith.constant 0 : i32
    %c0_i32_1 = arith.constant 0 : i32
    %c0_i32_2 = arith.constant 0 : i32
    return %arg0, %c0_i32, %c0_i32_0, %c0_i32_1 : i32, i32, i32, i32
  }
  func.func @transform_2(%arg0: i32, %arg1: i32, %arg2: i32) -> (i32, i32, i32) {
    %c0_i32 = arith.constant 0 : i32
    %c0_i32_0 = arith.constant 0 : i32
    %c0_i32_1 = arith.constant 0 : i32
    return %arg0, %c0_i32, %c0_i32_0 : i32, i32, i32
  }
  func.func @transform_3(%arg0: i32, %arg1: i32, %arg2: i32) -> (i32, i32, i32, i32) {
    %c0_i32 = arith.constant 0 : i32
    %c0_i32_0 = arith.constant 0 : i32
    return %arg1, %arg0, %arg2, %c0_i32 : i32, i32, i32, i32
  }
}

</mosaic_0001>

<llo_original>
// kernel: rcp_o4_conv2d_forward.1
$region0: #{rcp_o4_conv2d_forward.1}
  #allocation0 [shape = 'u32[]', space=smem, size = 0x4, offset = 0x4, fixed_abs, tag = 'smem constant byte address 0x4 - core index']
  #allocation1 [shape = 'u32[144,128]{1,0:T(1,128)}', space=vmem, size = 0x12000, scoped, tag = 'internal scratch']
  #allocation2 [shape = 'bf16[256,72]{1,0:T(16,128)(2,1)}', space=vmem, size = 0x10000, scoped, tag = 'scratch operand']
  %s0 = inlined_call_operand.vmem [shape: bf16[2,1,18,18,8], index: 0, kind: input, shape index: {}]
  %s1 = inlined_call_operand.vmem [shape: bf16[1,1,72,16], index: 1, kind: input, shape index: {}]
  %s2 = inlined_call_operand.vmem [shape: f32[1,1,16], index: 2, kind: input, shape index: {}]
  %s3 = inlined_call_operand.vmem [shape: f32[2,1,256,16], index: 3, kind: output, shape index: {}]
  %s4 = sld [smem:[#allocation0]]
  $region45: #{rcp_o4_conv2d_forward.1} parent=0
    _
  %s6 = ssub.s32 1, %s4
  %s7 = scalar_select 0, %s6, %s4
  loop: start=0, step=1, limit=4
  $region2: #{rcp_o4_conv2d_forward.1} parent=0 // loop_pre_header
    _
  $region3: #{rcp_o4_conv2d_forward.1} parent=0 // loop_header
    %s9 = sphi 0, %s13
    %p10 = scmp.ge.s32.totalorder %s9, 4
    %s16 = sphi 0, %s35
    %s17 = sphi 0, %s31
    %s18 = sphi 0, %s27
    %s19 = sphi 0, %s16
    %s20 = sphi 0, %s17
    %s21 = sphi 0, %s18
    %s22 = sphi 0, %s19
    %s23 = sphi 0, %s20
    %s24 = sphi 0, %s21
    %s40 = sphi 0, %s42
    %s43 = sphi 0, %s40
    %s44 = sphi 0, %s43
    %s60 = sphi 0, %s44
    %s66 = sphi 0, %s68
    %s69 = sphi 0, %s66
    %s70 = sphi 0, %s69
    %s86 = sphi 0, %s70
    %s92 = sphi 0, %s94
    %s95 = sphi 0, %s92
    %s96 = sphi 0, %s95
    %s112 = sphi 0, %s96
    %s122 = sphi 0, %s124
    %s125 = sphi 0, %s122
    %s126 = sphi 0, %s125
    %s142 = sphi 0, %s126
  $region4: #{rcp_o4_conv2d_forward.1} parent=0 // loop_header_branch
    %12 = sbr.rel (%p10) target = $region8
  $region5: #{rcp_o4_conv2d_forward.1} parent=0 // loop_body
    %s14 = ssub.s32 %s9, 1
    %s15 = ssub.s32 %s9, 2
    %s25 = sadd.s32 1, %s18
    %p26 = scmp.ge.s32.totalorder %s25, 1
    %s27 = scalar_select %p26, 0, %s25
    %s28 = sadd.s32 1, %s17
    %s29 = scalar_select %p26, %s28, %s17
    %p30 = scmp.ge.s32.totalorder %s29, 2
    %s31 = scalar_select %p30, 0, %s29
    %s32 = sadd.s32 1, %s16
    %s33 = scalar_select %p30, %s32, %s16
    %p34 = scmp.ge.s32.totalorder %s33, 1
    %s35 = scalar_select %p34, 0, %s33
    %s36 = ssub.s32 %s17, %s31
    %s37 = ssub.s32 %s16, %s35
    %s38 = sor.u32 %s36, %s37
    %p39 = scmp.eq.s32.totalorder %s38, 0
    %s41 = sadd.s32 %s40, 1
    %s42 = scalar_select %p39, %s40, %s41
    %p45 = pneg %p39
    %p46 = scmp.eq.s32.totalorder %s9, 1
    %p47 = por %p45, %p46
    %p48 = scmp.ne.s32.totalorder %s40, %s43
    %p49 = scmp.eq.s32.totalorder %s9, 0
    %p50 = por %p48, %p49
    %p51 = scmp.ne.s32.totalorder %s40, %s43
    %p52 = scmp.eq.s32.totalorder %s14, 1
    %p53 = por %p51, %p52
    %p54 = scmp.ne.s32.totalorder %s43, %s44
    %p55 = scmp.eq.s32.totalorder %s14, 0
    %p56 = por %p54, %p55
    %p57 = scmp.ne.s32.totalorder %s43, %s44
    %p58 = scmp.eq.s32.totalorder %s15, 1
    %p59 = por %p57, %p58
    %p61 = scmp.ne.s32.totalorder %s44, %s60
    %p62 = scmp.eq.s32.totalorder %s15, 0
    %p63 = por %p61, %p62
    %s64 = ssub.s32 %s16, %s35
    %p65 = scmp.eq.s32.totalorder %s64, 0
    %s67 = sadd.s32 %s66, 1
    %s68 = scalar_select %p65, %s66, %s67
    %p71 = pneg %p65
    %p72 = scmp.eq.s32.totalorder %s9, 1
    %p73 = por %p71, %p72
    %p74 = scmp.ne.s32.totalorder %s66, %s69
    %p75 = scmp.eq.s32.totalorder %s9, 0
    %p76 = por %p74, %p75
    %p77 = scmp.ne.s32.totalorder %s66, %s69
    %p78 = scmp.eq.s32.totalorder %s14, 1
    %p79 = por %p77, %p78
    %p80 = scmp.ne.s32.totalorder %s69, %s70
    %p81 = scmp.eq.s32.totalorder %s14, 0
    %p82 = por %p80, %p81
    %p83 = scmp.ne.s32.totalorder %s69, %s70
    %p84 = scmp.eq.s32.totalorder %s15, 1
    %p85 = por %p83, %p84
    %p87 = scmp.ne.s32.totalorder %s70, %s86
    %p88 = scmp.eq.s32.totalorder %s15, 0
    %p89 = por %p87, %p88
    %s90 = ssub.s32 %s16, %s35
    %p91 = scmp.eq.s32.totalorder %s90, 0
    %s93 = sadd.s32 %s92, 1
    %s94 = scalar_select %p91, %s92, %s93
    %p97 = pneg %p91
    %p98 = scmp.eq.s32.totalorder %s9, 1
    %p99 = por %p97, %p98
    %p100 = scmp.ne.s32.totalorder %s92, %s95
    %p101 = scmp.eq.s32.totalorder %s9, 0
    %p102 = por %p100, %p101
    %p103 = scmp.ne.s32.totalorder %s92, %s95
    %p104 = scmp.eq.s32.totalorder %s14, 1
    %p105 = por %p103, %p104
    %p106 = scmp.ne.s32.totalorder %s95, %s96
    %p107 = scmp.eq.s32.totalorder %s14, 0
    %p108 = por %p106, %p107
    %p109 = scmp.ne.s32.totalorder %s95, %s96
    %p110 = scmp.eq.s32.totalorder %s15, 1
    %p111 = por %p109, %p110
    %p113 = scmp.ne.s32.totalorder %s96, %s112
    %p114 = scmp.eq.s32.totalorder %s15, 0
    %p115 = por %p113, %p114
    %s116 = ssub.s32 %s17, %s31
    %s117 = ssub.s32 %s16, %s35
    %s118 = sor.u32 %s116, %s117
    %s119 = ssub.s32 %s18, %s27
    %s120 = sor.u32 %s118, %s119
    %p121 = scmp.eq.s32.totalorder %s120, 0
    %s123 = sadd.s32 %s122, 1
    %s124 = scalar_select %p121, %s122, %s123
    %p127 = pneg %p121
    %p128 = scmp.eq.s32.totalorder %s9, 1
    %p129 = por %p127, %p128
    %p130 = scmp.ne.s32.totalorder %s122, %s125
    %p131 = scmp.eq.s32.totalorder %s9, 0
    %p132 = por %p130, %p131
    %p133 = scmp.ne.s32.totalorder %s122, %s125
    %p134 = scmp.eq.s32.totalorder %s14, 1
    %p135 = por %p133, %p134
    %p136 = scmp.ne.s32.totalorder %s125, %s126
    %p137 = scmp.eq.s32.totalorder %s14, 0
    %p138 = por %p136, %p137
    %p139 = scmp.ne.s32.totalorder %s125, %s126
    %p140 = scmp.eq.s32.totalorder %s15, 1
    %p141 = por %p139, %p140
    %p143 = scmp.ne.s32.totalorder %s126, %s142
    %p144 = scmp.eq.s32.totalorder %s15, 0
    %p145 = por %p143, %p144
    %p146 = scmp.le.s32.totalorder 1, %s9
    %p147 = scmp.lt.s32.totalorder %s9, 3
    %p148 = pnand %p146, %p147
    %p149 = pneg %p148
    // Predicated region
    $region9: #{rcp_o4_conv2d_forward.1} parent=5 // pred_check
      _
    $region10: #{rcp_o4_conv2d_forward.1} parent=5 // pred_check_branch
      %151 = sbr.rel (%p148) target = $region12
    $region11: #{rcp_o4_conv2d_forward.1} parent=5 // pred_region
      %s152 = ssub.s32 %s9, 1
      // Predicated region
      $region13: #{rcp_o4_conv2d_forward.1} parent=11 // pred_check
        %p153 = pneg %p82
      $region14: #{rcp_o4_conv2d_forward.1} parent=11 // pred_check_branch
        %155 = sbr.rel (%p153) target = $region16
      $region15: #{rcp_o4_conv2d_forward.1} parent=11 // pred_region
        %p156 = scmp.lt.s32.totalorder %s19, 0
        %s157 = scalar_select %p156, %s19, 0
        %s158 = smul.addr %s157, 9
        %s159 = smul.addr %s158, 4
        %s160 = scalar_lea.vmem %s1, %s159
      $region16: #{rcp_o4_conv2d_forward.1} parent=11 // pred_fallthru
        _
      // Predicated region
      $region17: #{rcp_o4_conv2d_forward.1} parent=11 // pred_check
        %p161 = pneg %p108
      $region18: #{rcp_o4_conv2d_forward.1} parent=11 // pred_check_branch
        %163 = sbr.rel (%p161) target = $region20
      $region19: #{rcp_o4_conv2d_forward.1} parent=11 // pred_region
        %p164 = scmp.lt.s32.totalorder %s19, 0
        %s165 = scalar_select %p164, %s19, 0
        %s166 = scalar_lea.vmem %s2, %s165
      $region20: #{rcp_o4_conv2d_forward.1} parent=11 // pred_fallthru
        _
    $region12: #{rcp_o4_conv2d_forward.1} parent=5 // pred_fallthru
      _
    %p167 = scmp.lt.s32.totalorder %s9, 2
    // Predicated region
    $region21: #{rcp_o4_conv2d_forward.1} parent=5 // pred_check
      %p168 = pneg %p167
    $region22: #{rcp_o4_conv2d_forward.1} parent=5 // pred_check_branch
      %170 = sbr.rel (%p168) target = $region24
    $region23: #{rcp_o4_conv2d_forward.1} parent=5 // pred_region
      // Predicated region
      $region25: #{rcp_o4_conv2d_forward.1} parent=23 // pred_check
        %p171 = pneg %p50
      $region26: #{rcp_o4_conv2d_forward.1} parent=23 // pred_check_branch
        %173 = sbr.rel (%p171) target = $region28
      $region27: #{rcp_o4_conv2d_forward.1} parent=23 // pred_region
        %p174 = scmp.lt.s32.totalorder %s17, 1
        %s175 = scalar_select %p174, %s17, 1
        %p176 = scmp.lt.s32.totalorder %s16, 0
        %s177 = scalar_select %p176, %s16, 0
        %s178 = smul.addr %s177, 54
        %s179 = smul.addr %s175, 54
        %s180 = sadd.s32 %s178, %s179
        %s181 = smul.addr %s180, 4
        %s182 = scalar_lea.vmem %s0, %s181
      $region28: #{rcp_o4_conv2d_forward.1} parent=23 // pred_fallthru
        _
    $region24: #{rcp_o4_conv2d_forward.1} parent=5 // pred_fallthru
      _
    %p183 = scmp.le.s32.totalorder 1, %s9
    %p184 = scmp.lt.s32.totalorder %s9, 3
    %p185 = pnand %p183, %p184
    %p186 = pneg %p185
    // Predicated region
    $region29: #{rcp_o4_conv2d_forward.1} parent=5 // pred_check
      _
    $region30: #{rcp_o4_conv2d_forward.1} parent=5 // pred_check_branch
      %188 = sbr.rel (%p185) target = $region32
    $region31: #{rcp_o4_conv2d_forward.1} parent=5 // pred_region
      %s189 = ssub.s32 %s9, 1
      %p190 = scmp.lt.s32.totalorder %s20, 1
      %s191 = scalar_select %p190, %s20, 1
      %p192 = scmp.lt.s32.totalorder %s19, 0
      %s193 = scalar_select %p192, %s19, 0
      %s194 = smul.addr %s193, 54
      %s195 = smul.addr %s191, 54
      %s196 = sadd.s32 %s194, %s195
      %s197 = smul.addr %s196, 4
      %s198 = scalar_lea.vmem %s0, %s197
      %p199 = pneg %p56
      %p200 = pneg %p53
      %p201 = scmp.lt.s32.totalorder %s19, 0
      %s202 = scalar_select %p201, %s19, 0
      %s203 = smul.addr %s202, 9
      %s204 = smul.addr %s203, 4
      %s205 = scalar_lea.vmem %s1, %s204
      %p206 = pneg %p82
      %p207 = pneg %p79
      %p208 = scmp.lt.s32.totalorder %s19, 0
      %s209 = scalar_select %p208, %s19, 0
      %s210 = scalar_lea.vmem %s2, %s209
      %p211 = pneg %p108
      %p212 = pneg %p105
      %p213 = pneg %p138
      %p214 = pneg %p135
      %s215 = smul.u32 32, %s21
      %p216 = scmp.lt.s32.totalorder %s20, 1
      %s217 = scalar_select %p216, %s20, 1
      %p218 = scmp.lt.s32.totalorder %s19, 0
      %s219 = scalar_select %p218, %s19, 0
      %p220 = scmp.lt.s32.totalorder %s215, 31
      %s221 = scalar_select %p220, %s215, 31
      %s222 = smul.addr %s219, 32
      %s223 = sadd.s32 %s221, %s222
      %s224 = smul.addr %s217, 32
      %s225 = sadd.s32 %s223, %s224
      %s226 = smul.addr %s225, 8
      %s227 = scalar_lea.vmem %s3, %s226
      %p228 = scmp.lt.s32.totalorder %s20, 1
      %s229 = scalar_select %p228, %s20, 1
      %p230 = scmp.lt.s32.totalorder %s19, 0
      %s231 = scalar_select %p230, %s19, 0
      %s232 = smul.addr %s231, 54
      %s233 = smul.addr %s229, 54
      %s234 = sadd.s32 %s232, %s233
      %s235 = smul.addr %s234, 4
      %s236 = scalar_lea.vmem %s0, %s235
      %p237 = scmp.lt.s32.totalorder %s19, 0
      %s238 = scalar_select %p237, %s19, 0
      %s239 = smul.addr %s238, 9
      %s240 = smul.addr %s239, 4
      %s241 = scalar_lea.vmem %s1, %s240
      %p242 = scmp.lt.s32.totalorder %s19, 0
      %s243 = scalar_select %p242, %s19, 0
      %s244 = scalar_lea.vmem %s2, %s243
      %s245 = smul.u32 32, %s21
      %p246 = scmp.lt.s32.totalorder %s20, 1
      %s247 = scalar_select %p246, %s20, 1
      %p248 = scmp.lt.s32.totalorder %s19, 0
      %s249 = scalar_select %p248, %s19, 0
      %p250 = scmp.lt.s32.totalorder %s245, 31
      %s251 = scalar_select %p250, %s245, 31
      %s252 = smul.addr %s249, 32
      %s253 = sadd.s32 %s251, %s252
      %s254 = smul.addr %s247, 32
      %s255 = sadd.s32 %s253, %s254
      %s256 = smul.addr %s255, 8
      %s257 = scalar_lea.vmem %s3, %s256
      %s258 = smul.u32 32, %s21
      %s260 = smul.u32 %s21, 16
      %s261 = smul.u32 %s260, 3
      %s262 = smul.addr %s261, 4
      %s263 = scalar_lea.vmem %s236, %s262
      %v264 = vld [vmem:[%s263] sm:$0xf]
      %v265 = vld [vmem:[%s263 + $0x4] sm:$0xf]
      %v266 = vld [vmem:[%s263 + $0xc] sm:$0xf]
      %v267 = vld [vmem:[%s263 + $0x10] sm:$0xf]
      %v268 = vld [vmem:[%s263 + $0x18] sm:$0xf]
      %v269 = vld [vmem:[%s263 + $0x1c] sm:$0xf]
      %v270 = vld [vmem:[%s263 + $0x24] sm:$0xf]
      %v271 = vld [vmem:[%s263 + $0x28] sm:$0xf]
      %v272 = vld [vmem:[%s263 + $0x30] sm:$0xf]
      %v273 = vld [vmem:[%s263 + $0x34] sm:$0xf]
      %v274 = vld [vmem:[%s263 + $0x3c] sm:$0xf]
      %v275 = vld [vmem:[%s263 + $0x40] sm:$0xf]
      %v276 = vld [vmem:[%s263 + $0x48] sm:$0xf]
      %v277 = vld [vmem:[%s263 + $0x4c] sm:$0xf]
      %v278 = vld [vmem:[%s263 + $0x54] sm:$0xf]
      %v279 = vld [vmem:[%s263 + $0x58] sm:$0xf]
      %v280 = vld [vmem:[%s263 + $0x60] sm:$0xf]
      %v281 = vld [vmem:[%s263 + $0x64] sm:$0xf]
      %v282 = vld [vmem:[%s263 + $0x6c] sm:$0xf]
      %v283 = vld [vmem:[%s263 + $0x70] sm:$0xf]
      %v284 = vld [vmem:[%s263 + $0x78] sm:$0xf]
      %v285 = vld [vmem:[%s263 + $0x7c] sm:$0xf]
      %v286 = vld [vmem:[%s263 + $0x84] sm:$0xf]
      %v287 = vld [vmem:[%s263 + $0x88] sm:$0xf]
      %v288 = vld [vmem:[%s263 + $0x90] sm:$0xf]
      %v289 = vld [vmem:[%s263 + $0x94] sm:$0xf]
      %v290 = vld [vmem:[%s263 + $0x9c] sm:$0xf]
      %v291 = vld [vmem:[%s263 + $0xa0] sm:$0xf]
      %v292 = vld [vmem:[%s263 + $0xa8] sm:$0xf]
      %v293 = vld [vmem:[%s263 + $0xac] sm:$0xf]
      %v294 = vld [vmem:[%s263 + $0xb4] sm:$0xf]
      %v295 = vld [vmem:[%s263 + $0xb8] sm:$0xf]
      %v328 = vunpack.c.l.b16 %v264
      %v329 = vunpack.c.l.b16 %v265
      %v330 = vunpack.c.l.b16 %v266
      %v331 = vunpack.c.l.b16 %v267
      %v332 = vunpack.c.l.b16 %v268
      %v333 = vunpack.c.l.b16 %v269
      %v334 = vunpack.c.l.b16 %v270
      %v335 = vunpack.c.l.b16 %v271
      %v336 = vunpack.c.l.b16 %v272
      %v337 = vunpack.c.l.b16 %v273
      %v338 = vunpack.c.l.b16 %v274
      %v339 = vunpack.c.l.b16 %v275
      %v340 = vunpack.c.l.b16 %v276
      %v341 = vunpack.c.l.b16 %v277
      %v342 = vunpack.c.l.b16 %v278
      %v343 = vunpack.c.l.b16 %v279
      %v344 = vunpack.c.l.b16 %v280
      %v345 = vunpack.c.l.b16 %v281
      %v346 = vunpack.c.l.b16 %v282
      %v347 = vunpack.c.l.b16 %v283
      %v348 = vunpack.c.l.b16 %v284
      %v349 = vunpack.c.l.b16 %v285
      %v350 = vunpack.c.l.b16 %v286
      %v351 = vunpack.c.l.b16 %v287
      %v352 = vunpack.c.l.b16 %v288
      %v353 = vunpack.c.l.b16 %v289
      %v354 = vunpack.c.l.b16 %v290
      %v355 = vunpack.c.l.b16 %v291
      %v356 = vunpack.c.l.b16 %v292
      %v357 = vunpack.c.l.b16 %v293
      %v358 = vunpack.c.l.b16 %v294
      %v359 = vunpack.c.l.b16 %v295
      %v360 = vpack.c.b16 %v329, %v328
      %v361 = vpack.c.b16 %v331, %v330
      %v362 = vpack.c.b16 %v333, %v332
      %v363 = vpack.c.b16 %v335, %v334
      %v364 = vpack.c.b16 %v337, %v336
      %v365 = vpack.c.b16 %v339, %v338
      %v366 = vpack.c.b16 %v341, %v340
      %v367 = vpack.c.b16 %v343, %v342
      %v368 = vpack.c.b16 %v345, %v344
      %v369 = vpack.c.b16 %v347, %v346
      %v370 = vpack.c.b16 %v349, %v348
      %v371 = vpack.c.b16 %v351, %v350
      %v372 = vpack.c.b16 %v353, %v352
      %v373 = vpack.c.b16 %v355, %v354
      %v374 = vpack.c.b16 %v357, %v356
      %v375 = vpack.c.b16 %v359, %v358
      %vm392 = vcmask 64512
      %393 = vst.msk [vmem:[#allocation2] sm:$0xff] %vm392, %v360
      %394 = vst.msk [vmem:[#allocation2 + $0x8] sm:$0xff] %vm392, %v361
      %395 = vst.msk [vmem:[#allocation2 + $0x10] sm:$0xff] %vm392, %v362
      %396 = vst.msk [vmem:[#allocation2 + $0x18] sm:$0xff] %vm392, %v363
      %397 = vst.msk [vmem:[#allocation2 + $0x20] sm:$0xff] %vm392, %v364
      %398 = vst.msk [vmem:[#allocation2 + $0x28] sm:$0xff] %vm392, %v365
      %399 = vst.msk [vmem:[#allocation2 + $0x30] sm:$0xff] %vm392, %v366
      %400 = vst.msk [vmem:[#allocation2 + $0x38] sm:$0xff] %vm392, %v367
      %401 = vst.msk [vmem:[#allocation2 + $0x40] sm:$0xff] %vm392, %v368
      %402 = vst.msk [vmem:[#allocation2 + $0x48] sm:$0xff] %vm392, %v369
      %403 = vst.msk [vmem:[#allocation2 + $0x50] sm:$0xff] %vm392, %v370
      %404 = vst.msk [vmem:[#allocation2 + $0x58] sm:$0xff] %vm392, %v371
      %405 = vst.msk [vmem:[#allocation2 + $0x60] sm:$0xff] %vm392, %v372
      %406 = vst.msk [vmem:[#allocation2 + $0x68] sm:$0xff] %vm392, %v373
      %407 = vst.msk [vmem:[#allocation2 + $0x70] sm:$0xff] %vm392, %v374
      %408 = vst.msk [vmem:[#allocation2 + $0x78] sm:$0xff] %vm392, %v375
      %v409 = vld [vmem:[%s263] sm:$0xf]
      %v410 = vld [vmem:[%s263 + $0x4] sm:$0xf]
      %v411 = vld [vmem:[%s263 + $0x8] sm:$0x1]
      %v412 = vld [vmem:[%s263 + $0xc] sm:$0xf]
      %v413 = vld [vmem:[%s263 + $0x10] sm:$0xf]
      %v414 = vld [vmem:[%s263 + $0x14] sm:$0x1]
      %v415 = vld [vmem:[%s263 + $0x18] sm:$0xf]
      %v416 = vld [vmem:[%s263 + $0x1c] sm:$0xf]
      %v417 = vld [vmem:[%s263 + $0x20] sm:$0x1]
      %v418 = vld [vmem:[%s263 + $0x24] sm:$0xf]
      %v419 = vld [vmem:[%s263 + $0x28] sm:$0xf]
      %v420 = vld [vmem:[%s263 + $0x2c] sm:$0x1]
      %v421 = vld [vmem:[%s263 + $0x30] sm:$0xf]
      %v422 = vld [vmem:[%s263 + $0x34] sm:$0xf]
      %v423 = vld [vmem:[%s263 + $0x38] sm:$0x1]
      %v424 = vld [vmem:[%s263 + $0x3c] sm:$0xf]
      %v425 = vld [vmem:[%s263 + $0x40] sm:$0xf]
      %v426 = vld [vmem:[%s263 + $0x44] sm:$0x1]
      %v427 = vld [vmem:[%s263 + $0x48] sm:$0xf]
      %v428 = vld [vmem:[%s263 + $0x4c] sm:$0xf]
      %v429 = vld [vmem:[%s263 + $0x50] sm:$0x1]
      %v430 = vld [vmem:[%s263 + $0x54] sm:$0xf]
      %v431 = vld [vmem:[%s263 + $0x58] sm:$0xf]
      %v432 = vld [vmem:[%s263 + $0x5c] sm:$0x1]
      %v433 = vld [vmem:[%s263 + $0x60] sm:$0xf]
      %v434 = vld [vmem:[%s263 + $0x64] sm:$0xf]
      %v435 = vld [vmem:[%s263 + $0x68] sm:$0x1]
      %v436 = vld [vmem:[%s263 + $0x6c] sm:$0xf]
      %v437 = vld [vmem:[%s263 + $0x70] sm:$0xf]
      %v438 = vld [vmem:[%s263 + $0x74] sm:$0x1]
      %v439 = vld [vmem:[%s263 + $0x78] sm:$0xf]
      %v440 = vld [vmem:[%s263 + $0x7c] sm:$0xf]
      %v441 = vld [vmem:[%s263 + $0x80] sm:$0x1]
      %v442 = vld [vmem:[%s263 + $0x84] sm:$0xf]
      %v443 = vld [vmem:[%s263 + $0x88] sm:$0xf]
      %v444 = vld [vmem:[%s263 + $0x8c] sm:$0x1]
      %v445 = vld [vmem:[%s263 + $0x90] sm:$0xf]
      %v446 = vld [vmem:[%s263 + $0x94] sm:$0xf]
      %v447 = vld [vmem:[%s263 + $0x98] sm:$0x1]
      %v448 = vld [vmem:[%s263 + $0x9c] sm:$0xf]
      %v449 = vld [vmem:[%s263 + $0xa0] sm:$0xf]
      %v450 = vld [vmem:[%s263 + $0xa4] sm:$0x1]
      %v451 = vld [vmem:[%s263 + $0xa8] sm:$0xf]
      %v452 = vld [vmem:[%s263 + $0xac] sm:$0xf]
      %v453 = vld [vmem:[%s263 + $0xb0] sm:$0x1]
      %v454 = vld [vmem:[%s263 + $0xb4] sm:$0xf]
      %v455 = vld [vmem:[%s263 + $0xb8] sm:$0xf]
      %v456 = vld [vmem:[%s263 + $0xbc] sm:$0x1]
      %vm457 = vsmask.f32 3328
      %vm458 = vsmask.f32 7440
      %vm459 = vmor %vm457, %vm458
      %v461 = vshrl.u32 %v409, 16
      %v463 = vrot.slane %v461, 4
      %v464 = vshll.u32 %v409, 16
      %v466 = vrot.slane %v464, 5
      %v467 = vor.u32 %v463, %v466
      %v468 = vrot.slane %v467, 4
      %v470 = vshll.u32 %v410, 16
      %v472 = vrot.slane %v470, 5
      %v473 = vsel %vm459, %v468, %v472
      %v474 = vshrl.u32 %v410, 16
      %v476 = vrot.slane %v474, 4
      %v477 = vor.u32 %v476, %v472
      %v478 = vrot.slane %v477, 4
      %v480 = vshll.u32 %v411, 16
      %v482 = vrot.slane %v480, 5
      %v483 = vsel %vm459, %v478, %v482
      %v485 = vshrl.u32 %v412, 16
      %v487 = vrot.slane %v485, 4
      %v488 = vshll.u32 %v412, 16
      %v490 = vrot.slane %v488, 5
      %v491 = vor.u32 %v487, %v490
      %v492 = vrot.slane %v491, 4
      %v494 = vshll.u32 %v413, 16
      %v496 = vrot.slane %v494, 5
      %v497 = vsel %vm459, %v492, %v496
      %v498 = vshrl.u32 %v413, 16
      %v500 = vrot.slane %v498, 4
      %v501 = vor.u32 %v500, %v496
      %v502 = vrot.slane %v501, 4
      %v504 = vshll.u32 %v414, 16
      %v506 = vrot.slane %v504, 5
      %v507 = vsel %vm459, %v502, %v506
      %v509 = vshrl.u32 %v415, 16
      %v511 = vrot.slane %v509, 4
      %v512 = vshll.u32 %v415, 16
      %v514 = vrot.slane %v512, 5
      %v515 = vor.u32 %v511, %v514
      %v516 = vrot.slane %v515, 4
      %v518 = vshll.u32 %v416, 16
      %v520 = vrot.slane %v518, 5
      %v521 = vsel %vm459, %v516, %v520
      %v522 = vshrl.u32 %v416, 16
      %v524 = vrot.slane %v522, 4
      %v525 = vor.u32 %v524, %v520
      %v526 = vrot.slane %v525, 4
      %v528 = vshll.u32 %v417, 16
      %v530 = vrot.slane %v528, 5
      %v531 = vsel %vm459, %v526, %v530
      %v533 = vshrl.u32 %v418, 16
      %v535 = vrot.slane %v533, 4
      %v536 = vshll.u32 %v418, 16
      %v538 = vrot.slane %v536, 5
      %v539 = vor.u32 %v535, %v538
      %v540 = vrot.slane %v539, 4
      %v542 = vshll.u32 %v419, 16
      %v544 = vrot.slane %v542, 5
      %v545 = vsel %vm459, %v540, %v544
      %v546 = vshrl.u32 %v419, 16
      %v548 = vrot.slane %v546, 4
      %v549 = vor.u32 %v548, %v544
      %v550 = vrot.slane %v549, 4
      %v552 = vshll.u32 %v420, 16
      %v554 = vrot.slane %v552, 5
      %v555 = vsel %vm459, %v550, %v554
      %v557 = vshrl.u32 %v421, 16
      %v559 = vrot.slane %v557, 4
      %v560 = vshll.u32 %v421, 16
      %v562 = vrot.slane %v560, 5
      %v563 = vor.u32 %v559, %v562
      %v564 = vrot.slane %v563, 4
      %v566 = vshll.u32 %v422, 16
      %v568 = vrot.slane %v566, 5
      %v569 = vsel %vm459, %v564, %v568
      %v570 = vshrl.u32 %v422, 16
      %v572 = vrot.slane %v570, 4
      %v573 = vor.u32 %v572, %v568
      %v574 = vrot.slane %v573, 4
      %v576 = vshll.u32 %v423, 16
      %v578 = vrot.slane %v576, 5
      %v579 = vsel %vm459, %v574, %v578
      %v581 = vshrl.u32 %v424, 16
      %v583 = vrot.slane %v581, 4
      %v584 = vshll.u32 %v424, 16
      %v586 = vrot.slane %v584, 5
      %v587 = vor.u32 %v583, %v586
      %v588 = vrot.slane %v587, 4
      %v590 = vshll.u32 %v425, 16
      %v592 = vrot.slane %v590, 5
      %v593 = vsel %vm459, %v588, %v592
      %v594 = vshrl.u32 %v425, 16
      %v596 = vrot.slane %v594, 4
      %v597 = vor.u32 %v596, %v592
      %v598 = vrot.slane %v597, 4
      %v600 = vshll.u32 %v426, 16
      %v602 = vrot.slane %v600, 5
      %v603 = vsel %vm459, %v598, %v602
      %v605 = vshrl.u32 %v427, 16
      %v607 = vrot.slane %v605, 4
      %v608 = vshll.u32 %v427, 16
      %v610 = vrot.slane %v608, 5
      %v611 = vor.u32 %v607, %v610
      %v612 = vrot.slane %v611, 4
      %v614 = vshll.u32 %v428, 16
      %v616 = vrot.slane %v614, 5
      %v617 = vsel %vm459, %v612, %v616
      %v618 = vshrl.u32 %v428, 16
      %v620 = vrot.slane %v618, 4
      %v621 = vor.u32 %v620, %v616
      %v622 = vrot.slane %v621, 4
      %v624 = vshll.u32 %v429, 16
      %v626 = vrot.slane %v624, 5
      %v627 = vsel %vm459, %v622, %v626
      %v629 = vshrl.u32 %v430, 16
      %v631 = vrot.slane %v629, 4
      %v632 = vshll.u32 %v430, 16
      %v634 = vrot.slane %v632, 5
      %v635 = vor.u32 %v631, %v634
      %v636 = vrot.slane %v635, 4
      %v638 = vshll.u32 %v431, 16
      %v640 = vrot.slane %v638, 5
      %v641 = vsel %vm459, %v636, %v640
      %v642 = vshrl.u32 %v431, 16
      %v644 = vrot.slane %v642, 4
      %v645 = vor.u32 %v644, %v640
      %v646 = vrot.slane %v645, 4
      %v648 = vshll.u32 %v432, 16
      %v650 = vrot.slane %v648, 5
      %v651 = vsel %vm459, %v646, %v650
      %v653 = vshrl.u32 %v433, 16
      %v655 = vrot.slane %v653, 4
      %v656 = vshll.u32 %v433, 16
      %v658 = vrot.slane %v656, 5
      %v659 = vor.u32 %v655, %v658
      %v660 = vrot.slane %v659, 4
      %v662 = vshll.u32 %v434, 16
      %v664 = vrot.slane %v662, 5
      %v665 = vsel %vm459, %v660, %v664
      %v666 = vshrl.u32 %v434, 16
      %v668 = vrot.slane %v666, 4
      %v669 = vor.u32 %v668, %v664
      %v670 = vrot.slane %v669, 4
      %v672 = vshll.u32 %v435, 16
      %v674 = vrot.slane %v672, 5
      %v675 = vsel %vm459, %v670, %v674
      %v677 = vshrl.u32 %v436, 16
      %v679 = vrot.slane %v677, 4
      %v680 = vshll.u32 %v436, 16
      %v682 = vrot.slane %v680, 5
      %v683 = vor.u32 %v679, %v682
      %v684 = vrot.slane %v683, 4
      %v686 = vshll.u32 %v437, 16
      %v688 = vrot.slane %v686, 5
      %v689 = vsel %vm459, %v684, %v688
      %v690 = vshrl.u32 %v437, 16
      %v692 = vrot.slane %v690, 4
      %v693 = vor.u32 %v692, %v688
      %v694 = vrot.slane %v693, 4
      %v696 = vshll.u32 %v438, 16
      %v698 = vrot.slane %v696, 5
      %v699 = vsel %vm459, %v694, %v698
      %v701 = vshrl.u32 %v439, 16
      %v703 = vrot.slane %v701, 4
      %v704 = vshll.u32 %v439, 16
      %v706 = vrot.slane %v704, 5
      %v707 = vor.u32 %v703, %v706
      %v708 = vrot.slane %v707, 4
      %v710 = vshll.u32 %v440, 16
      %v712 = vrot.slane %v710, 5
      %v713 = vsel %vm459, %v708, %v712
      %v714 = vshrl.u32 %v440, 16
      %v716 = vrot.slane %v714, 4
      %v717 = vor.u32 %v716, %v712
      %v718 = vrot.slane %v717, 4
      %v720 = vshll.u32 %v441, 16
      %v722 = vrot.slane %v720, 5
      %v723 = vsel %vm459, %v718, %v722
      %v725 = vshrl.u32 %v442, 16
      %v727 = vrot.slane %v725, 4
      %v728 = vshll.u32 %v442, 16
      %v730 = vrot.slane %v728, 5
      %v731 = vor.u32 %v727, %v730
      %v732 = vrot.slane %v731, 4
      %v734 = vshll.u32 %v443, 16
      %v736 = vrot.slane %v734, 5
      %v737 = vsel %vm459, %v732, %v736
      %v738 = vshrl.u32 %v443, 16
      %v740 = vrot.slane %v738, 4
      %v741 = vor.u32 %v740, %v736
      %v742 = vrot.slane %v741, 4
      %v744 = vshll.u32 %v444, 16
      %v746 = vrot.slane %v744, 5
      %v747 = vsel %vm459, %v742, %v746
      %v749 = vshrl.u32 %v445, 16
      %v751 = vrot.slane %v749, 4
      %v752 = vshll.u32 %v445, 16
      %v754 = vrot.slane %v752, 5
      %v755 = vor.u32 %v751, %v754
      %v756 = vrot.slane %v755, 4
      %v758 = vshll.u32 %v446, 16
      %v760 = vrot.slane %v758, 5
      %v761 = vsel %vm459, %v756, %v760
      %v762 = vshrl.u32 %v446, 16
      %v764 = vrot.slane %v762, 4
      %v765 = vor.u32 %v764, %v760
      %v766 = vrot.slane %v765, 4
      %v768 = vshll.u32 %v447, 16
      %v770 = vrot.slane %v768, 5
      %v771 = vsel %vm459, %v766, %v770
      %v773 = vshrl.u32 %v448, 16
      %v775 = vrot.slane %v773, 4
      %v776 = vshll.u32 %v448, 16
      %v778 = vrot.slane %v776, 5
      %v779 = vor.u32 %v775, %v778
      %v780 = vrot.slane %v779, 4
      %v782 = vshll.u32 %v449, 16
      %v784 = vrot.slane %v782, 5
      %v785 = vsel %vm459, %v780, %v784
      %v786 = vshrl.u32 %v449, 16
      %v788 = vrot.slane %v786, 4
      %v789 = vor.u32 %v788, %v784
      %v790 = vrot.slane %v789, 4
      %v792 = vshll.u32 %v450, 16
      %v794 = vrot.slane %v792, 5
      %v795 = vsel %vm459, %v790, %v794
      %v797 = vshrl.u32 %v451, 16
      %v799 = vrot.slane %v797, 4
      %v800 = vshll.u32 %v451, 16
      %v802 = vrot.slane %v800, 5
      %v803 = vor.u32 %v799, %v802
      %v804 = vrot.slane %v803, 4
      %v806 = vshll.u32 %v452, 16
      %v808 = vrot.slane %v806, 5
      %v809 = vsel %vm459, %v804, %v808
      %v810 = vshrl.u32 %v452, 16
      %v812 = vrot.slane %v810, 4
      %v813 = vor.u32 %v812, %v808
      %v814 = vrot.slane %v813, 4
      %v816 = vshll.u32 %v453, 16
      %v818 = vrot.slane %v816, 5
      %v819 = vsel %vm459, %v814, %v818
      %v821 = vshrl.u32 %v454, 16
      %v823 = vrot.slane %v821, 4
      %v824 = vshll.u32 %v454, 16
      %v826 = vrot.slane %v824, 5
      %v827 = vor.u32 %v823, %v826
      %v828 = vrot.slane %v827, 4
      %v830 = vshll.u32 %v455, 16
      %v832 = vrot.slane %v830, 5
      %v833 = vsel %vm459, %v828, %v832
      %v834 = vshrl.u32 %v455, 16
      %v836 = vrot.slane %v834, 4
      %v837 = vor.u32 %v836, %v832
      %v838 = vrot.slane %v837, 4
      %v840 = vshll.u32 %v456, 16
      %v842 = vrot.slane %v840, 5
      %v843 = vsel %vm459, %v838, %v842
      %v844 = vunpack.c.l.b16 %v473
      %v845 = vunpack.c.l.b16 %v483
      %v846 = vunpack.c.l.b16 %v497
      %v847 = vunpack.c.l.b16 %v507
      %v848 = vunpack.c.l.b16 %v521
      %v849 = vunpack.c.l.b16 %v531
      %v850 = vunpack.c.l.b16 %v545
      %v851 = vunpack.c.l.b16 %v555
      %v852 = vunpack.c.l.b16 %v569
      %v853 = vunpack.c.l.b16 %v579
      %v854 = vunpack.c.l.b16 %v593
      %v855 = vunpack.c.l.b16 %v603
      %v856 = vunpack.c.l.b16 %v617
      %v857 = vunpack.c.l.b16 %v627
      %v858 = vunpack.c.l.b16 %v641
      %v859 = vunpack.c.l.b16 %v651
      %v860 = vunpack.c.l.b16 %v665
      %v861 = vunpack.c.l.b16 %v675
      %v862 = vunpack.c.l.b16 %v689
      %v863 = vunpack.c.l.b16 %v699
      %v864 = vunpack.c.l.b16 %v713
      %v865 = vunpack.c.l.b16 %v723
      %v866 = vunpack.c.l.b16 %v737
      %v867 = vunpack.c.l.b16 %v747
      %v868 = vunpack.c.l.b16 %v761
      %v869 = vunpack.c.l.b16 %v771
      %v870 = vunpack.c.l.b16 %v785
      %v871 = vunpack.c.l.b16 %v795
      %v872 = vunpack.c.l.b16 %v809
      %v873 = vunpack.c.l.b16 %v819
      %v874 = vunpack.c.l.b16 %v833
      %v875 = vunpack.c.l.b16 %v843
      %v876 = vpack.c.b16 %v845, %v844
      %v877 = vpack.c.b16 %v847, %v846
      %v878 = vpack.c.b16 %v849, %v848
      %v879 = vpack.c.b16 %v851, %v850
      %v880 = vpack.c.b16 %v853, %v852
      %v881 = vpack.c.b16 %v855, %v854
      %v882 = vpack.c.b16 %v857, %v856
      %v883 = vpack.c.b16 %v859, %v858
      %v884 = vpack.c.b16 %v861, %v860
      %v885 = vpack.c.b16 %v863, %v862
      %v886 = vpack.c.b16 %v865, %v864
      %v887 = vpack.c.b16 %v867, %v866
      %v888 = vpack.c.b16 %v869, %v868
      %v889 = vpack.c.b16 %v871, %v870
      %v890 = vpack.c.b16 %v873, %v872
      %v891 = vpack.c.b16 %v875, %v874
      %892 = vrot.lane.b32.xlu0 %v876, 8
      %v893 = vpop.permute.xlu0 %892
      %894 = vrot.lane.b32.xlu0 %v877, 8
      %v895 = vpop.permute.xlu0 %894
      %896 = vrot.lane.b32.xlu0 %v878, 8
      %v897 = vpop.permute.xlu0 %896
      %898 = vrot.lane.b32.xlu0 %v879, 8
      %v899 = vpop.permute.xlu0 %898
      %900 = vrot.lane.b32.xlu0 %v880, 8
      %v901 = vpop.permute.xlu0 %900
      %902 = vrot.lane.b32.xlu0 %v881, 8
      %v903 = vpop.permute.xlu0 %902
      %904 = vrot.lane.b32.xlu0 %v882, 8
      %v905 = vpop.permute.xlu0 %904
      %906 = vrot.lane.b32.xlu0 %v883, 8
      %v907 = vpop.permute.xlu0 %906
      %908 = vrot.lane.b32.xlu0 %v884, 8
      %v909 = vpop.permute.xlu0 %908
      %910 = vrot.lane.b32.xlu0 %v885, 8
      %v911 = vpop.permute.xlu0 %910
      %912 = vrot.lane.b32.xlu0 %v886, 8
      %v913 = vpop.permute.xlu0 %912
      %914 = vrot.lane.b32.xlu0 %v887, 8
      %v915 = vpop.permute.xlu0 %914
      %916 = vrot.lane.b32.xlu0 %v888, 8
      %v917 = vpop.permute.xlu0 %916
      %918 = vrot.lane.b32.xlu0 %v889, 8
      %v919 = vpop.permute.xlu0 %918
      %920 = vrot.lane.b32.xlu0 %v890, 8
      %v921 = vpop.permute.xlu0 %920
      %922 = vrot.lane.b32.xlu0 %v891, 8
      %v923 = vpop.permute.xlu0 %922
      %vm940 = vcmask 130112
      %941 = vst.msk [vmem:[#allocation2] sm:$0xff] %vm940, %v893
      %942 = vst.msk [vmem:[#allocation2 + $0x8] sm:$0xff] %vm940, %v895
      %943 = vst.msk [vmem:[#allocation2 + $0x10] sm:$0xff] %vm940, %v897
      %944 = vst.msk [vmem:[#allocation2 + $0x18] sm:$0xff] %vm940, %v899
      %945 = vst.msk [vmem:[#allocation2 + $0x20] sm:$0xff] %vm940, %v901
      %946 = vst.msk [vmem:[#allocation2 + $0x28] sm:$0xff] %vm940, %v903
      %947 = vst.msk [vmem:[#allocation2 + $0x30] sm:$0xff] %vm940, %v905
      %948 = vst.msk [vmem:[#allocation2 + $0x38] sm:$0xff] %vm940, %v907
      %949 = vst.msk [vmem:[#allocation2 + $0x40] sm:$0xff] %vm940, %v909
      %950 = vst.msk [vmem:[#allocation2 + $0x48] sm:$0xff] %vm940, %v911
      %951 = vst.msk [vmem:[#allocation2 + $0x50] sm:$0xff] %vm940, %v913
      %952 = vst.msk [vmem:[#allocation2 + $0x58] sm:$0xff] %vm940, %v915
      %953 = vst.msk [vmem:[#allocation2 + $0x60] sm:$0xff] %vm940, %v917
      %954 = vst.msk [vmem:[#allocation2 + $0x68] sm:$0xff] %vm940, %v919
      %955 = vst.msk [vmem:[#allocation2 + $0x70] sm:$0xff] %vm940, %v921
      %956 = vst.msk [vmem:[#allocation2 + $0x78] sm:$0xff] %vm940, %v923
      %v957 = vld [vmem:[%s263] sm:$0xe]
      %v958 = vld [vmem:[%s263 + $0x4] sm:$0xf]
      %v959 = vld [vmem:[%s263 + $0x8] sm:$0x1]
      %v960 = vld [vmem:[%s263 + $0xc] sm:$0xe]
      %v961 = vld [vmem:[%s263 + $0x10] sm:$0xf]
      %v962 = vld [vmem:[%s263 + $0x14] sm:$0x1]
      %v963 = vld [vmem:[%s263 + $0x18] sm:$0xe]
      %v964 = vld [vmem:[%s263 + $0x1c] sm:$0xf]
      %v965 = vld [vmem:[%s263 + $0x20] sm:$0x1]
      %v966 = vld [vmem:[%s263 + $0x24] sm:$0xe]
      %v967 = vld [vmem:[%s263 + $0x28] sm:$0xf]
      %v968 = vld [vmem:[%s263 + $0x2c] sm:$0x1]
      %v969 = vld [vmem:[%s263 + $0x30] sm:$0xe]
      %v970 = vld [vmem:[%s263 + $0x34] sm:$0xf]
      %v971 = vld [vmem:[%s263 + $0x38] sm:$0x1]
      %v972 = vld [vmem:[%s263 + $0x3c] sm:$0xe]
      %v973 = vld [vmem:[%s263 + $0x40] sm:$0xf]
      %v974 = vld [vmem:[%s263 + $0x44] sm:$0x1]
      %v975 = vld [vmem:[%s263 + $0x48] sm:$0xe]
      %v976 = vld [vmem:[%s263 + $0x4c] sm:$0xf]
      %v977 = vld [vmem:[%s263 + $0x50] sm:$0x1]
      %v978 = vld [vmem:[%s263 + $0x54] sm:$0xe]
      %v979 = vld [vmem:[%s263 + $0x58] sm:$0xf]
      %v980 = vld [vmem:[%s263 + $0x5c] sm:$0x1]
      %v981 = vld [vmem:[%s263 + $0x60] sm:$0xe]
      %v982 = vld [vmem:[%s263 + $0x64] sm:$0xf]
      %v983 = vld [vmem:[%s263 + $0x68] sm:$0x1]
      %v984 = vld [vmem:[%s263 + $0x6c] sm:$0xe]
      %v985 = vld [vmem:[%s263 + $0x70] sm:$0xf]
      %v986 = vld [vmem:[%s263 + $0x74] sm:$0x1]
      %v987 = vld [vmem:[%s263 + $0x78] sm:$0xe]
      %v988 = vld [vmem:[%s263 + $0x7c] sm:$0xf]
      %v989 = vld [vmem:[%s263 + $0x80] sm:$0x1]
      %v990 = vld [vmem:[%s263 + $0x84] sm:$0xe]
      %v991 = vld [vmem:[%s263 + $0x88] sm:$0xf]
      %v992 = vld [vmem:[%s263 + $0x8c] sm:$0x1]
      %v993 = vld [vmem:[%s263 + $0x90] sm:$0xe]
      %v994 = vld [vmem:[%s263 + $0x94] sm:$0xf]
      %v995 = vld [vmem:[%s263 + $0x98] sm:$0x1]
      %v996 = vld [vmem:[%s263 + $0x9c] sm:$0xe]
      %v997 = vld [vmem:[%s263 + $0xa0] sm:$0xf]
      %v998 = vld [vmem:[%s263 + $0xa4] sm:$0x1]
      %v999 = vld [vmem:[%s263 + $0xa8] sm:$0xe]
      %v1000 = vld [vmem:[%s263 + $0xac] sm:$0xf]
      %v1001 = vld [vmem:[%s263 + $0xb0] sm:$0x1]
      %v1002 = vld [vmem:[%s263 + $0xb4] sm:$0xe]
      %v1003 = vld [vmem:[%s263 + $0xb8] sm:$0xf]
      %v1004 = vld [vmem:[%s263 + $0xbc] sm:$0x1]
      %vm1053 = vcmask 1042432
      %vm1054 = vcmask 1046532
      %vm1055 = vmor %vm1053, %vm1054
      %v1056 = vrot.slane %v957, 5
      %v1057 = vrot.slane %v1056, 4
      %v1058 = vrot.slane %v958, 5
      %v1059 = vsel %vm1055, %v1057, %v1058
      %v1060 = vrot.slane %v1058, 4
      %v1061 = vrot.slane %v959, 5
      %v1062 = vsel %vm1055, %v1060, %v1061
      %v1063 = vrot.slane %v960, 5
      %v1064 = vrot.slane %v1063, 4
      %v1065 = vrot.slane %v961, 5
      %v1066 = vsel %vm1055, %v1064, %v1065
      %v1067 = vrot.slane %v1065, 4
      %v1068 = vrot.slane %v962, 5
      %v1069 = vsel %vm1055, %v1067, %v1068
      %v1070 = vrot.slane %v963, 5
      %v1071 = vrot.slane %v1070, 4
      %v1072 = vrot.slane %v964, 5
      %v1073 = vsel %vm1055, %v1071, %v1072
      %v1074 = vrot.slane %v1072, 4
      %v1075 = vrot.slane %v965, 5
      %v1076 = vsel %vm1055, %v1074, %v1075
      %v1077 = vrot.slane %v966, 5
      %v1078 = vrot.slane %v1077, 4
      %v1079 = vrot.slane %v967, 5
      %v1080 = vsel %vm1055, %v1078, %v1079
      %v1081 = vrot.slane %v1079, 4
      %v1082 = vrot.slane %v968, 5
      %v1083 = vsel %vm1055, %v1081, %v1082
      %v1084 = vrot.slane %v969, 5
      %v1085 = vrot.slane %v1084, 4
      %v1086 = vrot.slane %v970, 5
      %v1087 = vsel %vm1055, %v1085, %v1086
      %v1088 = vrot.slane %v1086, 4
      %v1089 = vrot.slane %v971, 5
      %v1090 = vsel %vm1055, %v1088, %v1089
      %v1091 = vrot.slane %v972, 5
      %v1092 = vrot.slane %v1091, 4
      %v1093 = vrot.slane %v973, 5
      %v1094 = vsel %vm1055, %v1092, %v1093
      %v1095 = vrot.slane %v1093, 4
      %v1096 = vrot.slane %v974, 5
      %v1097 = vsel %vm1055, %v1095, %v1096
      %v1098 = vrot.slane %v975, 5
      %v1099 = vrot.slane %v1098, 4
      %v1100 = vrot.slane %v976, 5
      %v1101 = vsel %vm1055, %v1099, %v1100
      %v1102 = vrot.slane %v1100, 4
      %v1103 = vrot.slane %v977, 5
      %v1104 = vsel %vm1055, %v1102, %v1103
      %v1105 = vrot.slane %v978, 5
      %v1106 = vrot.slane %v1105, 4
      %v1107 = vrot.slane %v979, 5
      %v1108 = vsel %vm1055, %v1106, %v1107
      %v1109 = vrot.slane %v1107, 4
      %v1110 = vrot.slane %v980, 5
      %v1111 = vsel %vm1055, %v1109, %v1110
      %v1112 = vrot.slane %v981, 5
      %v1113 = vrot.slane %v1112, 4
      %v1114 = vrot.slane %v982, 5
      %v1115 = vsel %vm1055, %v1113, %v1114
      %v1116 = vrot.slane %v1114, 4
      %v1117 = vrot.slane %v983, 5
      %v1118 = vsel %vm1055, %v1116, %v1117
      %v1119 = vrot.slane %v984, 5
      %v1120 = vrot.slane %v1119, 4
      %v1121 = vrot.slane %v985, 5
      %v1122 = vsel %vm1055, %v1120, %v1121
      %v1123 = vrot.slane %v1121, 4
      %v1124 = vrot.slane %v986, 5
      %v1125 = vsel %vm1055, %v1123, %v1124
      %v1126 = vrot.slane %v987, 5
      %v1127 = vrot.slane %v1126, 4
      %v1128 = vrot.slane %v988, 5
      %v1129 = vsel %vm1055, %v1127, %v1128
      %v1130 = vrot.slane %v1128, 4
      %v1131 = vrot.slane %v989, 5
      %v1132 = vsel %vm1055, %v1130, %v1131
      %v1133 = vrot.slane %v990, 5
      %v1134 = vrot.slane %v1133, 4
      %v1135 = vrot.slane %v991, 5
      %v1136 = vsel %vm1055, %v1134, %v1135
      %v1137 = vrot.slane %v1135, 4
      %v1138 = vrot.slane %v992, 5
      %v1139 = vsel %vm1055, %v1137, %v1138
      %v1140 = vrot.slane %v993, 5
      %v1141 = vrot.slane %v1140, 4
      %v1142 = vrot.slane %v994, 5
      %v1143 = vsel %vm1055, %v1141, %v1142
      %v1144 = vrot.slane %v1142, 4
      %v1145 = vrot.slane %v995, 5
      %v1146 = vsel %vm1055, %v1144, %v1145
      %v1147 = vrot.slane %v996, 5
      %v1148 = vrot.slane %v1147, 4
      %v1149 = vrot.slane %v997, 5
      %v1150 = vsel %vm1055, %v1148, %v1149
      %v1151 = vrot.slane %v1149, 4
      %v1152 = vrot.slane %v998, 5
      %v1153 = vsel %vm1055, %v1151, %v1152
      %v1154 = vrot.slane %v999, 5
      %v1155 = vrot.slane %v1154, 4
      %v1156 = vrot.slane %v1000, 5
      %v1157 = vsel %vm1055, %v1155, %v1156
      %v1158 = vrot.slane %v1156, 4
      %v1159 = vrot.slane %v1001, 5
      %v1160 = vsel %vm1055, %v1158, %v1159
      %v1161 = vrot.slane %v1002, 5
      %v1162 = vrot.slane %v1161, 4
      %v1163 = vrot.slane %v1003, 5
      %v1164 = vsel %vm1055, %v1162, %v1163
      %v1165 = vrot.slane %v1163, 4
      %v1166 = vrot.slane %v1004, 5
      %v1167 = vsel %vm1055, %v1165, %v1166
      %v1168 = vunpack.c.l.b16 %v1059
      %v1169 = vunpack.c.l.b16 %v1062
      %v1170 = vunpack.c.l.b16 %v1066
      %v1171 = vunpack.c.l.b16 %v1069
      %v1172 = vunpack.c.l.b16 %v1073
      %v1173 = vunpack.c.l.b16 %v1076
      %v1174 = vunpack.c.l.b16 %v1080
      %v1175 = vunpack.c.l.b16 %v1083
      %v1176 = vunpack.c.l.b16 %v1087
      %v1177 = vunpack.c.l.b16 %v1090
      %v1178 = vunpack.c.l.b16 %v1094
      %v1179 = vunpack.c.l.b16 %v1097
      %v1180 = vunpack.c.l.b16 %v1101
      %v1181 = vunpack.c.l.b16 %v1104
      %v1182 = vunpack.c.l.b16 %v1108
      %v1183 = vunpack.c.l.b16 %v1111
      %v1184 = vunpack.c.l.b16 %v1115
      %v1185 = vunpack.c.l.b16 %v1118
      %v1186 = vunpack.c.l.b16 %v1122
      %v1187 = vunpack.c.l.b16 %v1125
      %v1188 = vunpack.c.l.b16 %v1129
      %v1189 = vunpack.c.l.b16 %v1132
      %v1190 = vunpack.c.l.b16 %v1136
      %v1191 = vunpack.c.l.b16 %v1139
      %v1192 = vunpack.c.l.b16 %v1143
      %v1193 = vunpack.c.l.b16 %v1146
      %v1194 = vunpack.c.l.b16 %v1150
      %v1195 = vunpack.c.l.b16 %v1153
      %v1196 = vunpack.c.l.b16 %v1157
      %v1197 = vunpack.c.l.b16 %v1160
      %v1198 = vunpack.c.l.b16 %v1164
      %v1199 = vunpack.c.l.b16 %v1167
      %v1200 = vpack.c.b16 %v1169, %v1168
      %v1201 = vpack.c.b16 %v1171, %v1170
      %v1202 = vpack.c.b16 %v1173, %v1172
      %v1203 = vpack.c.b16 %v1175, %v1174
      %v1204 = vpack.c.b16 %v1177, %v1176
      %v1205 = vpack.c.b16 %v1179, %v1178
      %v1206 = vpack.c.b16 %v1181, %v1180
      %v1207 = vpack.c.b16 %v1183, %v1182
      %v1208 = vpack.c.b16 %v1185, %v1184
      %v1209 = vpack.c.b16 %v1187, %v1186
      %v1210 = vpack.c.b16 %v1189, %v1188
      %v1211 = vpack.c.b16 %v1191, %v1190
      %v1212 = vpack.c.b16 %v1193, %v1192
      %v1213 = vpack.c.b16 %v1195, %v1194
      %v1214 = vpack.c.b16 %v1197, %v1196
      %v1215 = vpack.c.b16 %v1199, %v1198
      %1216 = vrot.lane.b32.xlu0 %v1200, 16
      %v1217 = vpop.permute.xlu0 %1216
      %1218 = vrot.lane.b32.xlu0 %v1201, 16
      %v1219 = vpop.permute.xlu0 %1218
      %1220 = vrot.lane.b32.xlu0 %v1202, 16
      %v1221 = vpop.permute.xlu0 %1220
      %1222 = vrot.lane.b32.xlu0 %v1203, 16
      %v1223 = vpop.permute.xlu0 %1222
      %1224 = vrot.lane.b32.xlu0 %v1204, 16
      %v1225 = vpop.permute.xlu0 %1224
      %1226 = vrot.lane.b32.xlu0 %v1205, 16
      %v1227 = vpop.permute.xlu0 %1226
      %1228 = vrot.lane.b32.xlu0 %v1206, 16
      %v1229 = vpop.permute.xlu0 %1228
      %1230 = vrot.lane.b32.xlu0 %v1207, 16
      %v1231 = vpop.permute.xlu0 %1230
      %1232 = vrot.lane.b32.xlu0 %v1208, 16
      %v1233 = vpop.permute.xlu0 %1232
      %1234 = vrot.lane.b32.xlu0 %v1209, 16
      %v1235 = vpop.permute.xlu0 %1234
      %1236 = vrot.lane.b32.xlu0 %v1210, 16
      %v1237 = vpop.permute.xlu0 %1236
      %1238 = vrot.lane.b32.xlu0 %v1211, 16
      %v1239 = vpop.permute.xlu0 %1238
      %1240 = vrot.lane.b32.xlu0 %v1212, 16
      %v1241 = vpop.permute.xlu0 %1240
      %1242 = vrot.lane.b32.xlu0 %v1213, 16
      %v1243 = vpop.permute.xlu0 %1242
      %1244 = vrot.lane.b32.xlu0 %v1214, 16
      %v1245 = vpop.permute.xlu0 %1244
      %1246 = vrot.lane.b32.xlu0 %v1215, 16
      %v1247 = vpop.permute.xlu0 %1246
      %vm1264 = vcmask 195712
      %1265 = vst.msk [vmem:[#allocation2] sm:$0xff] %vm1264, %v1217
      %1266 = vst.msk [vmem:[#allocation2 + $0x8] sm:$0xff] %vm1264, %v1219
      %1267 = vst.msk [vmem:[#allocation2 + $0x10] sm:$0xff] %vm1264, %v1221
      %1268 = vst.msk [vmem:[#allocation2 + $0x18] sm:$0xff] %vm1264, %v1223
      %1269 = vst.msk [vmem:[#allocation2 + $0x20] sm:$0xff] %vm1264, %v1225
      %1270 = vst.msk [vmem:[#allocation2 + $0x28] sm:$0xff] %vm1264, %v1227
      %1271 = vst.msk [vmem:[#allocation2 + $0x30] sm:$0xff] %vm1264, %v1229
      %1272 = vst.msk [vmem:[#allocation2 + $0x38] sm:$0xff] %vm1264, %v1231
      %1273 = vst.msk [vmem:[#allocation2 + $0x40] sm:$0xff] %vm1264, %v1233
      %1274 = vst.msk [vmem:[#allocation2 + $0x48] sm:$0xff] %vm1264, %v1235
      %1275 = vst.msk [vmem:[#allocation2 + $0x50] sm:$0xff] %vm1264, %v1237
      %1276 = vst.msk [vmem:[#allocation2 + $0x58] sm:$0xff] %vm1264, %v1239
      %1277 = vst.msk [vmem:[#allocation2 + $0x60] sm:$0xff] %vm1264, %v1241
      %1278 = vst.msk [vmem:[#allocation2 + $0x68] sm:$0xff] %vm1264, %v1243
      %1279 = vst.msk [vmem:[#allocation2 + $0x70] sm:$0xff] %vm1264, %v1245
      %1280 = vst.msk [vmem:[#allocation2 + $0x78] sm:$0xff] %vm1264, %v1247
      %s1281 = sadd.s32 %s260, 1
      %s1282 = smul.u32 %s1281, 3
      %s1283 = smul.addr %s1282, 4
      %s1284 = scalar_lea.vmem %s236, %s1283
      %v1285 = vld [vmem:[%s1284] sm:$0xf]
      %v1286 = vld [vmem:[%s1284 + $0x4] sm:$0xf]
      %v1287 = vld [vmem:[%s1284 + $0xc] sm:$0xf]
      %v1288 = vld [vmem:[%s1284 + $0x10] sm:$0xf]
      %v1289 = vld [vmem:[%s1284 + $0x18] sm:$0xf]
      %v1290 = vld [vmem:[%s1284 + $0x1c] sm:$0xf]
      %v1291 = vld [vmem:[%s1284 + $0x24] sm:$0xf]
      %v1292 = vld [vmem:[%s1284 + $0x28] sm:$0xf]
      %v1293 = vld [vmem:[%s1284 + $0x30] sm:$0xf]
      %v1294 = vld [vmem:[%s1284 + $0x34] sm:$0xf]
      %v1295 = vld [vmem:[%s1284 + $0x3c] sm:$0xf]
      %v1296 = vld [vmem:[%s1284 + $0x40] sm:$0xf]
      %v1297 = vld [vmem:[%s1284 + $0x48] sm:$0xf]
      %v1298 = vld [vmem:[%s1284 + $0x4c] sm:$0xf]
      %v1299 = vld [vmem:[%s1284 + $0x54] sm:$0xf]
      %v1300 = vld [vmem:[%s1284 + $0x58] sm:$0xf]
      %v1301 = vld [vmem:[%s1284 + $0x60] sm:$0xf]
      %v1302 = vld [vmem:[%s1284 + $0x64] sm:$0xf]
      %v1303 = vld [vmem:[%s1284 + $0x6c] sm:$0xf]
      %v1304 = vld [vmem:[%s1284 + $0x70] sm:$0xf]
      %v1305 = vld [vmem:[%s1284 + $0x78] sm:$0xf]
      %v1306 = vld [vmem:[%s1284 + $0x7c] sm:$0xf]
      %v1307 = vld [vmem:[%s1284 + $0x84] sm:$0xf]
      %v1308 = vld [vmem:[%s1284 + $0x88] sm:$0xf]
      %v1309 = vld [vmem:[%s1284 + $0x90] sm:$0xf]
      %v1310 = vld [vmem:[%s1284 + $0x94] sm:$0xf]
      %v1311 = vld [vmem:[%s1284 + $0x9c] sm:$0xf]
      %v1312 = vld [vmem:[%s1284 + $0xa0] sm:$0xf]
      %v1313 = vld [vmem:[%s1284 + $0xa8] sm:$0xf]
      %v1314 = vld [vmem:[%s1284 + $0xac] sm:$0xf]
      %v1315 = vld [vmem:[%s1284 + $0xb4] sm:$0xf]
      %v1316 = vld [vmem:[%s1284 + $0xb8] sm:$0xf]
      %v1349 = vunpack.c.l.b16 %v1285
      %v1350 = vunpack.c.l.b16 %v1286
      %v1351 = vunpack.c.l.b16 %v1287
      %v1352 = vunpack.c.l.b16 %v1288
      %v1353 = vunpack.c.l.b16 %v1289
      %v1354 = vunpack.c.l.b16 %v1290
      %v1355 = vunpack.c.l.b16 %v1291
      %v1356 = vunpack.c.l.b16 %v1292
      %v1357 = vunpack.c.l.b16 %v1293
      %v1358 = vunpack.c.l.b16 %v1294
      %v1359 = vunpack.c.l.b16 %v1295
      %v1360 = vunpack.c.l.b16 %v1296
      %v1361 = vunpack.c.l.b16 %v1297
      %v1362 = vunpack.c.l.b16 %v1298
      %v1363 = vunpack.c.l.b16 %v1299
      %v1364 = vunpack.c.l.b16 %v1300
      %v1365 = vunpack.c.l.b16 %v1301
      %v1366 = vunpack.c.l.b16 %v1302
      %v1367 = vunpack.c.l.b16 %v1303
      %v1368 = vunpack.c.l.b16 %v1304
      %v1369 = vunpack.c.l.b16 %v1305
      %v1370 = vunpack.c.l.b16 %v1306
      %v1371 = vunpack.c.l.b16 %v1307
      %v1372 = vunpack.c.l.b16 %v1308
      %v1373 = vunpack.c.l.b16 %v1309
      %v1374 = vunpack.c.l.b16 %v1310
      %v1375 = vunpack.c.l.b16 %v1311
      %v1376 = vunpack.c.l.b16 %v1312
      %v1377 = vunpack.c.l.b16 %v1313
      %v1378 = vunpack.c.l.b16 %v1314
      %v1379 = vunpack.c.l.b16 %v1315
      %v1380 = vunpack.c.l.b16 %v1316
      %v1381 = vpack.c.b16 %v1350, %v1349
      %v1382 = vpack.c.b16 %v1352, %v1351
      %v1383 = vpack.c.b16 %v1354, %v1353
      %v1384 = vpack.c.b16 %v1356, %v1355
      %v1385 = vpack.c.b16 %v1358, %v1357
      %v1386 = vpack.c.b16 %v1360, %v1359
      %v1387 = vpack.c.b16 %v1362, %v1361
      %v1388 = vpack.c.b16 %v1364, %v1363
      %v1389 = vpack.c.b16 %v1366, %v1365
      %v1390 = vpack.c.b16 %v1368, %v1367
      %v1391 = vpack.c.b16 %v1370, %v1369
      %v1392 = vpack.c.b16 %v1372, %v1371
      %v1393 = vpack.c.b16 %v1374, %v1373
      %v1394 = vpack.c.b16 %v1376, %v1375
      %v1395 = vpack.c.b16 %v1378, %v1377
      %v1396 = vpack.c.b16 %v1380, %v1379
      %1397 = vrot.lane.b32.xlu0 %v1381, 24
      %v1398 = vpop.permute.xlu0 %1397
      %1399 = vrot.lane.b32.xlu0 %v1382, 24
      %v1400 = vpop.permute.xlu0 %1399
      %1401 = vrot.lane.b32.xlu0 %v1383, 24
      %v1402 = vpop.permute.xlu0 %1401
      %1403 = vrot.lane.b32.xlu0 %v1384, 24
      %v1404 = vpop.permute.xlu0 %1403
      %1405 = vrot.lane.b32.xlu0 %v1385, 24
      %v1406 = vpop.permute.xlu0 %1405
      %1407 = vrot.lane.b32.xlu0 %v1386, 24
      %v1408 = vpop.permute.xlu0 %1407
      %1409 = vrot.lane.b32.xlu0 %v1387, 24
      %v1410 = vpop.permute.xlu0 %1409
      %1411 = vrot.lane.b32.xlu0 %v1388, 24
      %v1412 = vpop.permute.xlu0 %1411
      %1413 = vrot.lane.b32.xlu0 %v1389, 24
      %v1414 = vpop.permute.xlu0 %1413
      %1415 = vrot.lane.b32.xlu0 %v1390, 24
      %v1416 = vpop.permute.xlu0 %1415
      %1417 = vrot.lane.b32.xlu0 %v1391, 24
      %v1418 = vpop.permute.xlu0 %1417
      %1419 = vrot.lane.b32.xlu0 %v1392, 24
      %v1420 = vpop.permute.xlu0 %1419
      %1421 = vrot.lane.b32.xlu0 %v1393, 24
      %v1422 = vpop.permute.xlu0 %1421
      %1423 = vrot.lane.b32.xlu0 %v1394, 24
      %v1424 = vpop.permute.xlu0 %1423
      %1425 = vrot.lane.b32.xlu0 %v1395, 24
      %v1426 = vpop.permute.xlu0 %1425
      %1427 = vrot.lane.b32.xlu0 %v1396, 24
      %v1428 = vpop.permute.xlu0 %1427
      %vm1445 = vcmask 261312
      %1446 = vst.msk [vmem:[#allocation2] sm:$0xff] %vm1445, %v1398
      %1447 = vst.msk [vmem:[#allocation2 + $0x8] sm:$0xff] %vm1445, %v1400
      %1448 = vst.msk [vmem:[#allocation2 + $0x10] sm:$0xff] %vm1445, %v1402
      %1449 = vst.msk [vmem:[#allocation2 + $0x18] sm:$0xff] %vm1445, %v1404
      %1450 = vst.msk [vmem:[#allocation2 + $0x20] sm:$0xff] %vm1445, %v1406
      %1451 = vst.msk [vmem:[#allocation2 + $0x28] sm:$0xff] %vm1445, %v1408
      %1452 = vst.msk [vmem:[#allocation2 + $0x30] sm:$0xff] %vm1445, %v1410
      %1453 = vst.msk [vmem:[#allocation2 + $0x38] sm:$0xff] %vm1445, %v1412
      %1454 = vst.msk [vmem:[#allocation2 + $0x40] sm:$0xff] %vm1445, %v1414
      %1455 = vst.msk [vmem:[#allocation2 + $0x48] sm:$0xff] %vm1445, %v1416
      %1456 = vst.msk [vmem:[#allocation2 + $0x50] sm:$0xff] %vm1445, %v1418
      %1457 = vst.msk [vmem:[#allocation2 + $0x58] sm:$0xff] %vm1445, %v1420
      %1458 = vst.msk [vmem:[#allocation2 + $0x60] sm:$0xff] %vm1445, %v1422
      %1459 = vst.msk [vmem:[#allocation2 + $0x68] sm:$0xff] %vm1445, %v1424
      %1460 = vst.msk [vmem:[#allocation2 + $0x70] sm:$0xff] %vm1445, %v1426
      %1461 = vst.msk [vmem:[#allocation2 + $0x78] sm:$0xff] %vm1445, %v1428
      %v1462 = vld [vmem:[%s1284] sm:$0xf]
      %v1463 = vld [vmem:[%s1284 + $0x4] sm:$0xf]
      %v1464 = vld [vmem:[%s1284 + $0x8] sm:$0x1]
      %v1465 = vld [vmem:[%s1284 + $0xc] sm:$0xf]
      %v1466 = vld [vmem:[%s1284 + $0x10] sm:$0xf]
      %v1467 = vld [vmem:[%s1284 + $0x14] sm:$0x1]
      %v1468 = vld [vmem:[%s1284 + $0x18] sm:$0xf]
      %v1469 = vld [vmem:[%s1284 + $0x1c] sm:$0xf]
      %v1470 = vld [vmem:[%s1284 + $0x20] sm:$0x1]
      %v1471 = vld [vmem:[%s1284 + $0x24] sm:$0xf]
      %v1472 = vld [vmem:[%s1284 + $0x28] sm:$0xf]
      %v1473 = vld [vmem:[%s1284 + $0x2c] sm:$0x1]
      %v1474 = vld [vmem:[%s1284 + $0x30] sm:$0xf]
      %v1475 = vld [vmem:[%s1284 + $0x34] sm:$0xf]
      %v1476 = vld [vmem:[%s1284 + $0x38] sm:$0x1]
      %v1477 = vld [vmem:[%s1284 + $0x3c] sm:$0xf]
      %v1478 = vld [vmem:[%s1284 + $0x40] sm:$0xf]
      %v1479 = vld [vmem:[%s1284 + $0x44] sm:$0x1]
      %v1480 = vld [vmem:[%s1284 + $0x48] sm:$0xf]
      %v1481 = vld [vmem:[%s1284 + $0x4c] sm:$0xf]
      %v1482 = vld [vmem:[%s1284 + $0x50] sm:$0x1]
      %v1483 = vld [vmem:[%s1284 + $0x54] sm:$0xf]
      %v1484 = vld [vmem:[%s1284 + $0x58] sm:$0xf]
      %v1485 = vld [vmem:[%s1284 + $0x5c] sm:$0x1]
      %v1486 = vld [vmem:[%s1284 + $0x60] sm:$0xf]
      %v1487 = vld [vmem:[%s1284 + $0x64] sm:$0xf]
      %v1488 = vld [vmem:[%s1284 + $0x68] sm:$0x1]
      %v1489 = vld [vmem:[%s1284 + $0x6c] sm:$0xf]
      %v1490 = vld [vmem:[%s1284 + $0x70] sm:$0xf]
      %v1491 = vld [vmem:[%s1284 + $0x74] sm:$0x1]
      %v1492 = vld [vmem:[%s1284 + $0x78] sm:$0xf]
      %v1493 = vld [vmem:[%s1284 + $0x7c] sm:$0xf]
      %v1494 = vld [vmem:[%s1284 + $0x80] sm:$0x1]
      %v1495 = vld [vmem:[%s1284 + $0x84] sm:$0xf]
      %v1496 = vld [vmem:[%s1284 + $0x88] sm:$0xf]
      %v1497 = vld [vmem:[%s1284 + $0x8c] sm:$0x1]
      %v1498 = vld [vmem:[%s1284 + $0x90] sm:$0xf]
      %v1499 = vld [vmem:[%s1284 + $0x94] sm:$0xf]
      %v1500 = vld [vmem:[%s1284 + $0x98] sm:$0x1]
      %v1501 = vld [vmem:[%s1284 + $0x9c] sm:$0xf]
      %v1502 = vld [vmem:[%s1284 + $0xa0] sm:$0xf]
      %v1503 = vld [vmem:[%s1284 + $0xa4] sm:$0x1]
      %v1504 = vld [vmem:[%s1284 + $0xa8] sm:$0xf]
      %v1505 = vld [vmem:[%s1284 + $0xac] sm:$0xf]
      %v1506 = vld [vmem:[%s1284 + $0xb0] sm:$0x1]
      %v1507 = vld [vmem:[%s1284 + $0xb4] sm:$0xf]
      %v1508 = vld [vmem:[%s1284 + $0xb8] sm:$0xf]
      %v1509 = vld [vmem:[%s1284 + $0xbc] sm:$0x1]
      %v1511 = vshrl.u32 %v1462, 16
      %v1513 = vrot.slane %v1511, 4
      %v1514 = vshll.u32 %v1462, 16
      %v1516 = vrot.slane %v1514, 5
      %v1517 = vor.u32 %v1513, %v1516
      %v1518 = vrot.slane %v1517, 4
      %v1520 = vshll.u32 %v1463, 16
      %v1522 = vrot.slane %v1520, 5
      %v1523 = vsel %vm459, %v1518, %v1522
      %v1524 = vshrl.u32 %v1463, 16
      %v1526 = vrot.slane %v1524, 4
      %v1527 = vor.u32 %v1526, %v1522
      %v1528 = vrot.slane %v1527, 4
      %v1530 = vshll.u32 %v1464, 16
      %v1532 = vrot.slane %v1530, 5
      %v1533 = vsel %vm459, %v1528, %v1532
      %v1535 = vshrl.u32 %v1465, 16
      %v1537 = vrot.slane %v1535, 4
      %v1538 = vshll.u32 %v1465, 16
      %v1540 = vrot.slane %v1538, 5
      %v1541 = vor.u32 %v1537, %v1540
      %v1542 = vrot.slane %v1541, 4
      %v1544 = vshll.u32 %v1466, 16
      %v1546 = vrot.slane %v1544, 5
      %v1547 = vsel %vm459, %v1542, %v1546
      %v1548 = vshrl.u32 %v1466, 16
      %v1550 = vrot.slane %v1548, 4
      %v1551 = vor.u32 %v1550, %v1546
      %v1552 = vrot.slane %v1551, 4
      %v1554 = vshll.u32 %v1467, 16
      %v1556 = vrot.slane %v1554, 5
      %v1557 = vsel %vm459, %v1552, %v1556
      %v1559 = vshrl.u32 %v1468, 16
      %v1561 = vrot.slane %v1559, 4
      %v1562 = vshll.u32 %v1468, 16
      %v1564 = vrot.slane %v1562, 5
      %v1565 = vor.u32 %v1561, %v1564
      %v1566 = vrot.slane %v1565, 4
      %v1568 = vshll.u32 %v1469, 16
      %v1570 = vrot.slane %v1568, 5
      %v1571 = vsel %vm459, %v1566, %v1570
      %v1572 = vshrl.u32 %v1469, 16
      %v1574 = vrot.slane %v1572, 4
      %v1575 = vor.u32 %v1574, %v1570
      %v1576 = vrot.slane %v1575, 4
      %v1578 = vshll.u32 %v1470, 16
      %v1580 = vrot.slane %v1578, 5
      %v1581 = vsel %vm459, %v1576, %v1580
      %v1583 = vshrl.u32 %v1471, 16
      %v1585 = vrot.slane %v1583, 4
      %v1586 = vshll.u32 %v1471, 16
      %v1588 = vrot.slane %v1586, 5
      %v1589 = vor.u32 %v1585, %v1588
      %v1590 = vrot.slane %v1589, 4
      %v1592 = vshll.u32 %v1472, 16
      %v1594 = vrot.slane %v1592, 5
      %v1595 = vsel %vm459, %v1590, %v1594
      %v1596 = vshrl.u32 %v1472, 16
      %v1598 = vrot.slane %v1596, 4
      %v1599 = vor.u32 %v1598, %v1594
      %v1600 = vrot.slane %v1599, 4
      %v1602 = vshll.u32 %v1473, 16
      %v1604 = vrot.slane %v1602, 5
      %v1605 = vsel %vm459, %v1600, %v1604
      %v1607 = vshrl.u32 %v1474, 16
      %v1609 = vrot.slane %v1607, 4
      %v1610 = vshll.u32 %v1474, 16
      %v1612 = vrot.slane %v1610, 5
      %v1613 = vor.u32 %v1609, %v1612
      %v1614 = vrot.slane %v1613, 4
      %v1616 = vshll.u32 %v1475, 16
      %v1618 = vrot.slane %v1616, 5
      %v1619 = vsel %vm459, %v1614, %v1618
      %v1620 = vshrl.u32 %v1475, 16
      %v1622 = vrot.slane %v1620, 4
      %v1623 = vor.u32 %v1622, %v1618
      %v1624 = vrot.slane %v1623, 4
      %v1626 = vshll.u32 %v1476, 16
      %v1628 = vrot.slane %v1626, 5
      %v1629 = vsel %vm459, %v1624, %v1628
      %v1631 = vshrl.u32 %v1477, 16
      %v1633 = vrot.slane %v1631, 4
      %v1634 = vshll.u32 %v1477, 16
      %v1636 = vrot.slane %v1634, 5
      %v1637 = vor.u32 %v1633, %v1636
      %v1638 = vrot.slane %v1637, 4
      %v1640 = vshll.u32 %v1478, 16
      %v1642 = vrot.slane %v1640, 5
      %v1643 = vsel %vm459, %v1638, %v1642
      %v1644 = vshrl.u32 %v1478, 16
      %v1646 = vrot.slane %v1644, 4
      %v1647 = vor.u32 %v1646, %v1642
      %v1648 = vrot.slane %v1647, 4
      %v1650 = vshll.u32 %v1479, 16
      %v1652 = vrot.slane %v1650, 5
      %v1653 = vsel %vm459, %v1648, %v1652
      %v1655 = vshrl.u32 %v1480, 16
      %v1657 = vrot.slane %v1655, 4
      %v1658 = vshll.u32 %v1480, 16
      %v1660 = vrot.slane %v1658, 5
      %v1661 = vor.u32 %v1657, %v1660
      %v1662 = vrot.slane %v1661, 4
      %v1664 = vshll.u32 %v1481, 16
      %v1666 = vrot.slane %v1664, 5
      %v1667 = vsel %vm459, %v1662, %v1666
      %v1668 = vshrl.u32 %v1481, 16
      %v1670 = vrot.slane %v1668, 4
      %v1671 = vor.u32 %v1670, %v1666
      %v1672 = vrot.slane %v1671, 4
      %v1674 = vshll.u32 %v1482, 16
      %v1676 = vrot.slane %v1674, 5
      %v1677 = vsel %vm459, %v1672, %v1676
      %v1679 = vshrl.u32 %v1483, 16
      %v1681 = vrot.slane %v1679, 4
      %v1682 = vshll.u32 %v1483, 16
      %v1684 = vrot.slane %v1682, 5
      %v1685 = vor.u32 %v1681, %v1684
      %v1686 = vrot.slane %v1685, 4
      %v1688 = vshll.u32 %v1484, 16
      %v1690 = vrot.slane %v1688, 5
      %v1691 = vsel %vm459, %v1686, %v1690
      %v1692 = vshrl.u32 %v1484, 16
      %v1694 = vrot.slane %v1692, 4
      %v1695 = vor.u32 %v1694, %v1690
      %v1696 = vrot.slane %v1695, 4
      %v1698 = vshll.u32 %v1485, 16
      %v1700 = vrot.slane %v1698, 5
      %v1701 = vsel %vm459, %v1696, %v1700
      %v1703 = vshrl.u32 %v1486, 16
      %v1705 = vrot.slane %v1703, 4
      %v1706 = vshll.u32 %v1486, 16
      %v1708 = vrot.slane %v1706, 5
      %v1709 = vor.u32 %v1705, %v1708
      %v1710 = vrot.slane %v1709, 4
      %v1712 = vshll.u32 %v1487, 16
      %v1714 = vrot.slane %v1712, 5
      %v1715 = vsel %vm459, %v1710, %v1714
      %v1716 = vshrl.u32 %v1487, 16
      %v1718 = vrot.slane %v1716, 4
      %v1719 = vor.u32 %v1718, %v1714
      %v1720 = vrot.slane %v1719, 4
      %v1722 = vshll.u32 %v1488, 16
      %v1724 = vrot.slane %v1722, 5
      %v1725 = vsel %vm459, %v1720, %v1724
      %v1727 = vshrl.u32 %v1489, 16
      %v1729 = vrot.slane %v1727, 4
      %v1730 = vshll.u32 %v1489, 16
      %v1732 = vrot.slane %v1730, 5
      %v1733 = vor.u32 %v1729, %v1732
      %v1734 = vrot.slane %v1733, 4
      %v1736 = vshll.u32 %v1490, 16
      %v1738 = vrot.slane %v1736, 5
      %v1739 = vsel %vm459, %v1734, %v1738
      %v1740 = vshrl.u32 %v1490, 16
      %v1742 = vrot.slane %v1740, 4
      %v1743 = vor.u32 %v1742, %v1738
      %v1744 = vrot.slane %v1743, 4
      %v1746 = vshll.u32 %v1491, 16
      %v1748 = vrot.slane %v1746, 5
      %v1749 = vsel %vm459, %v1744, %v1748
      %v1751 = vshrl.u32 %v1492, 16
      %v1753 = vrot.slane %v1751, 4
      %v1754 = vshll.u32 %v1492, 16
      %v1756 = vrot.slane %v1754, 5
      %v1757 = vor.u32 %v1753, %v1756
      %v1758 = vrot.slane %v1757, 4
      %v1760 = vshll.u32 %v1493, 16
      %v1762 = vrot.slane %v1760, 5
      %v1763 = vsel %vm459, %v1758, %v1762
      %v1764 = vshrl.u32 %v1493, 16
      %v1766 = vrot.slane %v1764, 4
      %v1767 = vor.u32 %v1766, %v1762
      %v1768 = vrot.slane %v1767, 4
      %v1770 = vshll.u32 %v1494, 16
      %v1772 = vrot.slane %v1770, 5
      %v1773 = vsel %vm459, %v1768, %v1772
      %v1775 = vshrl.u32 %v1495, 16
      %v1777 = vrot.slane %v1775, 4
      %v1778 = vshll.u32 %v1495, 16
      %v1780 = vrot.slane %v1778, 5
      %v1781 = vor.u32 %v1777, %v1780
      %v1782 = vrot.slane %v1781, 4
      %v1784 = vshll.u32 %v1496, 16
      %v1786 = vrot.slane %v1784, 5
      %v1787 = vsel %vm459, %v1782, %v1786
      %v1788 = vshrl.u32 %v1496, 16
      %v1790 = vrot.slane %v1788, 4
      %v1791 = vor.u32 %v1790, %v1786
      %v1792 = vrot.slane %v1791, 4
      %v1794 = vshll.u32 %v1497, 16
      %v1796 = vrot.slane %v1794, 5
      %v1797 = vsel %vm459, %v1792, %v1796
      %v1799 = vshrl.u32 %v1498, 16
      %v1801 = vrot.slane %v1799, 4
      %v1802 = vshll.u32 %v1498, 16
      %v1804 = vrot.slane %v1802, 5
      %v1805 = vor.u32 %v1801, %v1804
      %v1806 = vrot.slane %v1805, 4
      %v1808 = vshll.u32 %v1499, 16
      %v1810 = vrot.slane %v1808, 5
      %v1811 = vsel %vm459, %v1806, %v1810
      %v1812 = vshrl.u32 %v1499, 16
      %v1814 = vrot.slane %v1812, 4
      %v1815 = vor.u32 %v1814, %v1810
      %v1816 = vrot.slane %v1815, 4
      %v1818 = vshll.u32 %v1500, 16
      %v1820 = vrot.slane %v1818, 5
      %v1821 = vsel %vm459, %v1816, %v1820
      %v1823 = vshrl.u32 %v1501, 16
      %v1825 = vrot.slane %v1823, 4
      %v1826 = vshll.u32 %v1501, 16
      %v1828 = vrot.slane %v1826, 5
      %v1829 = vor.u32 %v1825, %v1828
      %v1830 = vrot.slane %v1829, 4
      %v1832 = vshll.u32 %v1502, 16
      %v1834 = vrot.slane %v1832, 5
      %v1835 = vsel %vm459, %v1830, %v1834
      %v1836 = vshrl.u32 %v1502, 16
      %v1838 = vrot.slane %v1836, 4
      %v1839 = vor.u32 %v1838, %v1834
      %v1840 = vrot.slane %v1839, 4
      %v1842 = vshll.u32 %v1503, 16
      %v1844 = vrot.slane %v1842, 5
      %v1845 = vsel %vm459, %v1840, %v1844
      %v1847 = vshrl.u32 %v1504, 16
      %v1849 = vrot.slane %v1847, 4
      %v1850 = vshll.u32 %v1504, 16
      %v1852 = vrot.slane %v1850, 5
      %v1853 = vor.u32 %v1849, %v1852
      %v1854 = vrot.slane %v1853, 4
      %v1856 = vshll.u32 %v1505, 16
      %v1858 = vrot.slane %v1856, 5
      %v1859 = vsel %vm459, %v1854, %v1858
      %v1860 = vshrl.u32 %v1505, 16
      %v1862 = vrot.slane %v1860, 4
      %v1863 = vor.u32 %v1862, %v1858
      %v1864 = vrot.slane %v1863, 4
      %v1866 = vshll.u32 %v1506, 16
      %v1868 = vrot.slane %v1866, 5
      %v1869 = vsel %vm459, %v1864, %v1868
      %v1871 = vshrl.u32 %v1507, 16
      %v1873 = vrot.slane %v1871, 4
      %v1874 = vshll.u32 %v1507, 16
      %v1876 = vrot.slane %v1874, 5
      %v1877 = vor.u32 %v1873, %v1876
      %v1878 = vrot.slane %v1877, 4
      %v1880 = vshll.u32 %v1508, 16
      %v1882 = vrot.slane %v1880, 5
      %v1883 = vsel %vm459, %v1878, %v1882
      %v1884 = vshrl.u32 %v1508, 16
      %v1886 = vrot.slane %v1884, 4
      %v1887 = vor.u32 %v1886, %v1882
      %v1888 = vrot.slane %v1887, 4
      %v1890 = vshll.u32 %v1509, 16
      %v1892 = vrot.slane %v1890, 5
      %v1893 = vsel %vm459, %v1888, %v1892
      %v1894 = vunpack.c.l.b16 %v1523
      %v1895 = vunpack.c.l.b16 %v1533
      %v1896 = vunpack.c.l.b16 %v1547
      %v1897 = vunpack.c.l.b16 %v1557
      %v1898 = vunpack.c.l.b16 %v1571
      %v1899 = vunpack.c.l.b16 %v1581
      %v1900 = vunpack.c.l.b16 %v1595
      %v1901 = vunpack.c.l.b16 %v1605
      %v1902 = vunpack.c.l.b16 %v1619
      %v1903 = vunpack.c.l.b16 %v1629
      %v1904 = vunpack.c.l.b16 %v1643
      %v1905 = vunpack.c.l.b16 %v1653
      %v1906 = vunpack.c.l.b16 %v1667
      %v1907 = vunpack.c.l.b16 %v1677
      %v1908 = vunpack.c.l.b16 %v1691
      %v1909 = vunpack.c.l.b16 %v1701
      %v1910 = vunpack.c.l.b16 %v1715
      %v1911 = vunpack.c.l.b16 %v1725
      %v1912 = vunpack.c.l.b16 %v1739
      %v1913 = vunpack.c.l.b16 %v1749
      %v1914 = vunpack.c.l.b16 %v1763
      %v1915 = vunpack.c.l.b16 %v1773
      %v1916 = vunpack.c.l.b16 %v1787
      %v1917 = vunpack.c.l.b16 %v1797
      %v1918 = vunpack.c.l.b16 %v1811
      %v1919 = vunpack.c.l.b16 %v1821
      %v1920 = vunpack.c.l.b16 %v1835
      %v1921 = vunpack.c.l.b16 %v1845
      %v1922 = vunpack.c.l.b16 %v1859
      %v1923 = vunpack.c.l.b16 %v1869
      %v1924 = vunpack.c.l.b16 %v1883
      %v1925 = vunpack.c.l.b16 %v1893
      %v1926 = vpack.c.b16 %v1895, %v1894
      %v1927 = vpack.c.b16 %v1897, %v1896
      %v1928 = vpack.c.b16 %v1899, %v1898
      %v1929 = vpack.c.b16 %v1901, %v1900
      %v1930 = vpack.c.b16 %v1903, %v1902
      %v1931 = vpack.c.b16 %v1905, %v1904
      %v1932 = vpack.c.b16 %v1907, %v1906
      %v1933 = vpack.c.b16 %v1909, %v1908
      %v1934 = vpack.c.b16 %v1911, %v1910
      %v1935 = vpack.c.b16 %v1913, %v1912
      %v1936 = vpack.c.b16 %v1915, %v1914
      %v1937 = vpack.c.b16 %v1917, %v1916
      %v1938 = vpack.c.b16 %v1919, %v1918
      %v1939 = vpack.c.b16 %v1921, %v1920
      %v1940 = vpack.c.b16 %v1923, %v1922
      %v1941 = vpack.c.b16 %v1925, %v1924
      %1942 = vrot.lane.b32.xlu0 %v1926, 32
      %v1943 = vpop.permute.xlu0 %1942
      %1944 = vrot.lane.b32.xlu0 %v1927, 32
      %v1945 = vpop.permute.xlu0 %1944
      %1946 = vrot.lane.b32.xlu0 %v1928, 32
      %v1947 = vpop.permute.xlu0 %1946
      %1948 = vrot.lane.b32.xlu0 %v1929, 32
      %v1949 = vpop.permute.xlu0 %1948
      %1950 = vrot.lane.b32.xlu0 %v1930, 32
      %v1951 = vpop.permute.xlu0 %1950
      %1952 = vrot.lane.b32.xlu0 %v1931, 32
      %v1953 = vpop.permute.xlu0 %1952
      %1954 = vrot.lane.b32.xlu0 %v1932, 32
      %v1955 = vpop.permute.xlu0 %1954
      %1956 = vrot.lane.b32.xlu0 %v1933, 32
      %v1957 = vpop.permute.xlu0 %1956
      %1958 = vrot.lane.b32.xlu0 %v1934, 32
      %v1959 = vpop.permute.xlu0 %1958
      %1960 = vrot.lane.b32.xlu0 %v1935, 32
      %v1961 = vpop.permute.xlu0 %1960
      %1962 = vrot.lane.b32.xlu0 %v1936, 32
      %v1963 = vpop.permute.xlu0 %1962
      %1964 = vrot.lane.b32.xlu0 %v1937, 32
      %v1965 = vpop.permute.xlu0 %1964
      %1966 = vrot.lane.b32.xlu0 %v1938, 32
      %v1967 = vpop.permute.xlu0 %1966
      %1968 = vrot.lane.b32.xlu0 %v1939, 32
      %v1969 = vpop.permute.xlu0 %1968
      %1970 = vrot.lane.b32.xlu0 %v1940, 32
      %v1971 = vpop.permute.xlu0 %1970
      %1972 = vrot.lane.b32.xlu0 %v1941, 32
      %v1973 = vpop.permute.xlu0 %1972
      %vm1990 = vcmask 326912
      %1991 = vst.msk [vmem:[#allocation2] sm:$0xff] %vm1990, %v1943
      %1992 = vst.msk [vmem:[#allocation2 + $0x8] sm:$0xff] %vm1990, %v1945
      %1993 = vst.msk [vmem:[#allocation2 + $0x10] sm:$0xff] %vm1990, %v1947
      %1994 = vst.msk [vmem:[#allocation2 + $0x18] sm:$0xff] %vm1990, %v1949
      %1995 = vst.msk [vmem:[#allocation2 + $0x20] sm:$0xff] %vm1990, %v1951
      %1996 = vst.msk [vmem:[#allocation2 + $0x28] sm:$0xff] %vm1990, %v1953
      %1997 = vst.msk [vmem:[#allocation2 + $0x30] sm:$0xff] %vm1990, %v1955
      %1998 = vst.msk [vmem:[#allocation2 + $0x38] sm:$0xff] %vm1990, %v1957
      %1999 = vst.msk [vmem:[#allocation2 + $0x40] sm:$0xff] %vm1990, %v1959
      %2000 = vst.msk [vmem:[#allocation2 + $0x48] sm:$0xff] %vm1990, %v1961
      %2001 = vst.msk [vmem:[#allocation2 + $0x50] sm:$0xff] %vm1990, %v1963
      %2002 = vst.msk [vmem:[#allocation2 + $0x58] sm:$0xff] %vm1990, %v1965
      %2003 = vst.msk [vmem:[#allocation2 + $0x60] sm:$0xff] %vm1990, %v1967
      %2004 = vst.msk [vmem:[#allocation2 + $0x68] sm:$0xff] %vm1990, %v1969
      %2005 = vst.msk [vmem:[#allocation2 + $0x70] sm:$0xff] %vm1990, %v1971
      %2006 = vst.msk [vmem:[#allocation2 + $0x78] sm:$0xff] %vm1990, %v1973
      %v2007 = vld [vmem:[%s1284] sm:$0xe]
      %v2008 = vld [vmem:[%s1284 + $0x4] sm:$0xf]
      %v2009 = vld [vmem:[%s1284 + $0x8] sm:$0x1]
      %v2010 = vld [vmem:[%s1284 + $0xc] sm:$0xe]
      %v2011 = vld [vmem:[%s1284 + $0x10] sm:$0xf]
      %v2012 = vld [vmem:[%s1284 + $0x14] sm:$0x1]
      %v2013 = vld [vmem:[%s1284 + $0x18] sm:$0xe]
      %v2014 = vld [vmem:[%s1284 + $0x1c] sm:$0xf]
      %v2015 = vld [vmem:[%s1284 + $0x20] sm:$0x1]
      %v2016 = vld [vmem:[%s1284 + $0x24] sm:$0xe]
      %v2017 = vld [vmem:[%s1284 + $0x28] sm:$0xf]
      %v2018 = vld [vmem:[%s1284 + $0x2c] sm:$0x1]
      %v2019 = vld [vmem:[%s1284 + $0x30] sm:$0xe]
      %v2020 = vld [vmem:[%s1284 + $0x34] sm:$0xf]
      %v2021 = vld [vmem:[%s1284 + $0x38] sm:$0x1]
      %v2022 = vld [vmem:[%s1284 + $0x3c] sm:$0xe]
      %v2023 = vld [vmem:[%s1284 + $0x40] sm:$0xf]
      %v2024 = vld [vmem:[%s1284 + $0x44] sm:$0x1]
      %v2025 = vld [vmem:[%s1284 + $0x48] sm:$0xe]
      %v2026 = vld [vmem:[%s1284 + $0x4c] sm:$0xf]
      %v2027 = vld [vmem:[%s1284 + $0x50] sm:$0x1]
      %v2028 = vld [vmem:[%s1284 + $0x54] sm:$0xe]
      %v2029 = vld [vmem:[%s1284 + $0x58] sm:$0xf]
      %v2030 = vld [vmem:[%s1284 + $0x5c] sm:$0x1]
      %v2031 = vld [vmem:[%s1284 + $0x60] sm:$0xe]
      %v2032 = vld [vmem:[%s1284 + $0x64] sm:$0xf]
      %v2033 = vld [vmem:[%s1284 + $0x68] sm:$0x1]
      %v2034 = vld [vmem:[%s1284 + $0x6c] sm:$0xe]
      %v2035 = vld [vmem:[%s1284 + $0x70] sm:$0xf]
      %v2036 = vld [vmem:[%s1284 + $0x74] sm:$0x1]
      %v2037 = vld [vmem:[%s1284 + $0x78] sm:$0xe]
      %v2038 = vld [vmem:[%s1284 + $0x7c] sm:$0xf]
      %v2039 = vld [vmem:[%s1284 + $0x80] sm:$0x1]
      %v2040 = vld [vmem:[%s1284 + $0x84] sm:$0xe]
      %v2041 = vld [vmem:[%s1284 + $0x88] sm:$0xf]
      %v2042 = vld [vmem:[%s1284 + $0x8c] sm:$0x1]
      %v2043 = vld [vmem:[%s1284 + $0x90] sm:$0xe]
      %v2044 = vld [vmem:[%s1284 + $0x94] sm:$0xf]
      %v2045 = vld [vmem:[%s1284 + $0x98] sm:$0x1]
      %v2046 = vld [vmem:[%s1284 + $0x9c] sm:$0xe]
      %v2047 = vld [vmem:[%s1284 + $0xa0] sm:$0xf]
      %v2048 = vld [vmem:[%s1284 + $0xa4] sm:$0x1]
      %v2049 = vld [vmem:[%s1284 + $0xa8] sm:$0xe]
      %v2050 = vld [vmem:[%s1284 + $0xac] sm:$0xf]
      %v2051 = vld [vmem:[%s1284 + $0xb0] sm:$0x1]
      %v2052 = vld [vmem:[%s1284 + $0xb4] sm:$0xe]
      %v2053 = vld [vmem:[%s1284 + $0xb8] sm:$0xf]
      %v2054 = vld [vmem:[%s1284 + $0xbc] sm:$0x1]
      %v2103 = vrot.slane %v2007, 5
      %v2104 = vrot.slane %v2103, 4
      %v2105 = vrot.slane %v2008, 5
      %v2106 = vsel %vm1055, %v2104, %v2105
      %v2107 = vrot.slane %v2105, 4
      %v2108 = vrot.slane %v2009, 5
      %v2109 = vsel %vm1055, %v2107, %v2108
      %v2110 = vrot.slane %v2010, 5
      %v2111 = vrot.slane %v2110, 4
      %v2112 = vrot.slane %v2011, 5
      %v2113 = vsel %vm1055, %v2111, %v2112
      %v2114 = vrot.slane %v2112, 4
      %v2115 = vrot.slane %v2012, 5
      %v2116 = vsel %vm1055, %v2114, %v2115
      %v2117 = vrot.slane %v2013, 5
      %v2118 = vrot.slane %v2117, 4
      %v2119 = vrot.slane %v2014, 5
      %v2120 = vsel %vm1055, %v2118, %v2119
      %v2121 = vrot.slane %v2119, 4
      %v2122 = vrot.slane %v2015, 5
      %v2123 = vsel %vm1055, %v2121, %v2122
      %v2124 = vrot.slane %v2016, 5
      %v2125 = vrot.slane %v2124, 4
      %v2126 = vrot.slane %v2017, 5
      %v2127 = vsel %vm1055, %v2125, %v2126
      %v2128 = vrot.slane %v2126, 4
      %v2129 = vrot.slane %v2018, 5
      %v2130 = vsel %vm1055, %v2128, %v2129
      %v2131 = vrot.slane %v2019, 5
      %v2132 = vrot.slane %v2131, 4
      %v2133 = vrot.slane %v2020, 5
      %v2134 = vsel %vm1055, %v2132, %v2133
      %v2135 = vrot.slane %v2133, 4
      %v2136 = vrot.slane %v2021, 5
      %v2137 = vsel %vm1055, %v2135, %v2136
      %v2138 = vrot.slane %v2022, 5
      %v2139 = vrot.slane %v2138, 4
      %v2140 = vrot.slane %v2023, 5
      %v2141 = vsel %vm1055, %v2139, %v2140
      %v2142 = vrot.slane %v2140, 4
      %v2143 = vrot.slane %v2024, 5
      %v2144 = vsel %vm1055, %v2142, %v2143
      %v2145 = vrot.slane %v2025, 5
      %v2146 = vrot.slane %v2145, 4
      %v2147 = vrot.slane %v2026, 5
      %v2148 = vsel %vm1055, %v2146, %v2147
      %v2149 = vrot.slane %v2147, 4
      %v2150 = vrot.slane %v2027, 5
      %v2151 = vsel %vm1055, %v2149, %v2150
      %v2152 = vrot.slane %v2028, 5
      %v2153 = vrot.slane %v2152, 4
      %v2154 = vrot.slane %v2029, 5
      %v2155 = vsel %vm1055, %v2153, %v2154
      %v2156 = vrot.slane %v2154, 4
      %v2157 = vrot.slane %v2030, 5
      %v2158 = vsel %vm1055, %v2156, %v2157
      %v2159 = vrot.slane %v2031, 5
      %v2160 = vrot.slane %v2159, 4
      %v2161 = vrot.slane %v2032, 5
      %v2162 = vsel %vm1055, %v2160, %v2161
      %v2163 = vrot.slane %v2161, 4
      %v2164 = vrot.slane %v2033, 5
      %v2165 = vsel %vm1055, %v2163, %v2164
      %v2166 = vrot.slane %v2034, 5
      %v2167 = vrot.slane %v2166, 4
      %v2168 = vrot.slane %v2035, 5
      %v2169 = vsel %vm1055, %v2167, %v2168
      %v2170 = vrot.slane %v2168, 4
      %v2171 = vrot.slane %v2036, 5
      %v2172 = vsel %vm1055, %v2170, %v2171
      %v2173 = vrot.slane %v2037, 5
      %v2174 = vrot.slane %v2173, 4
      %v2175 = vrot.slane %v2038, 5
      %v2176 = vsel %vm1055, %v2174, %v2175
      %v2177 = vrot.slane %v2175, 4
      %v2178 = vrot.slane %v2039, 5
      %v2179 = vsel %vm1055, %v2177, %v2178
      %v2180 = vrot.slane %v2040, 5
      %v2181 = vrot.slane %v2180, 4
      %v2182 = vrot.slane %v2041, 5
      %v2183 = vsel %vm1055, %v2181, %v2182
      %v2184 = vrot.slane %v2182, 4
      %v2185 = vrot.slane %v2042, 5
      %v2186 = vsel %vm1055, %v2184, %v2185
      %v2187 = vrot.slane %v2043, 5
      %v2188 = vrot.slane %v2187, 4
      %v2189 = vrot.slane %v2044, 5
      %v2190 = vsel %vm1055, %v2188, %v2189
      %v2191 = vrot.slane %v2189, 4
      %v2192 = vrot.slane %v2045, 5
      %v2193 = vsel %vm1055, %v2191, %v2192
      %v2194 = vrot.slane %v2046, 5
      %v2195 = vrot.slane %v2194, 4
      %v2196 = vrot.slane %v2047, 5
      %v2197 = vsel %vm1055, %v2195, %v2196
      %v2198 = vrot.slane %v2196, 4
      %v2199 = vrot.slane %v2048, 5
      %v2200 = vsel %vm1055, %v2198, %v2199
      %v2201 = vrot.slane %v2049, 5
      %v2202 = vrot.slane %v2201, 4
      %v2203 = vrot.slane %v2050, 5
      %v2204 = vsel %vm1055, %v2202, %v2203
      %v2205 = vrot.slane %v2203, 4
      %v2206 = vrot.slane %v2051, 5
      %v2207 = vsel %vm1055, %v2205, %v2206
      %v2208 = vrot.slane %v2052, 5
      %v2209 = vrot.slane %v2208, 4
      %v2210 = vrot.slane %v2053, 5
      %v2211 = vsel %vm1055, %v2209, %v2210
      %v2212 = vrot.slane %v2210, 4
      %v2213 = vrot.slane %v2054, 5
      %v2214 = vsel %vm1055, %v2212, %v2213
      %v2215 = vunpack.c.l.b16 %v2106
      %v2216 = vunpack.c.l.b16 %v2109
      %v2217 = vunpack.c.l.b16 %v2113
      %v2218 = vunpack.c.l.b16 %v2116
      %v2219 = vunpack.c.l.b16 %v2120
      %v2220 = vunpack.c.l.b16 %v2123
      %v2221 = vunpack.c.l.b16 %v2127
      %v2222 = vunpack.c.l.b16 %v2130
      %v2223 = vunpack.c.l.b16 %v2134
      %v2224 = vunpack.c.l.b16 %v2137
      %v2225 = vunpack.c.l.b16 %v2141
      %v2226 = vunpack.c.l.b16 %v2144
      %v2227 = vunpack.c.l.b16 %v2148
      %v2228 = vunpack.c.l.b16 %v2151
      %v2229 = vunpack.c.l.b16 %v2155
      %v2230 = vunpack.c.l.b16 %v2158
      %v2231 = vunpack.c.l.b16 %v2162
      %v2232 = vunpack.c.l.b16 %v2165
      %v2233 = vunpack.c.l.b16 %v2169
      %v2234 = vunpack.c.l.b16 %v2172
      %v2235 = vunpack.c.l.b16 %v2176
      %v2236 = vunpack.c.l.b16 %v2179
      %v2237 = vunpack.c.l.b16 %v2183
      %v2238 = vunpack.c.l.b16 %v2186
      %v2239 = vunpack.c.l.b16 %v2190
      %v2240 = vunpack.c.l.b16 %v2193
      %v2241 = vunpack.c.l.b16 %v2197
      %v2242 = vunpack.c.l.b16 %v2200
      %v2243 = vunpack.c.l.b16 %v2204
      %v2244 = vunpack.c.l.b16 %v2207
      %v2245 = vunpack.c.l.b16 %v2211
      %v2246 = vunpack.c.l.b16 %v2214
      %v2247 = vpack.c.b16 %v2216, %v2215
      %v2248 = vpack.c.b16 %v2218, %v2217
      %v2249 = vpack.c.b16 %v2220, %v2219
      %v2250 = vpack.c.b16 %v2222, %v2221
      %v2251 = vpack.c.b16 %v2224, %v2223
      %v2252 = vpack.c.b16 %v2226, %v2225
      %v2253 = vpack.c.b16 %v2228, %v2227
      %v2254 = vpack.c.b16 %v2230, %v2229
      %v2255 = vpack.c.b16 %v2232, %v2231
      %v2256 = vpack.c.b16 %v2234, %v2233
      %v2257 = vpack.c.b16 %v2236, %v2235
      %v2258 = vpack.c.b16 %v2238, %v2237
      %v2259 = vpack.c.b16 %v2240, %v2239
      %v2260 = vpack.c.b16 %v2242, %v2241
      %v2261 = vpack.c.b16 %v2244, %v2243
      %v2262 = vpack.c.b16 %v2246, %v2245
      %2263 = vrot.lane.b32.xlu0 %v2247, 40
      %v2264 = vpop.permute.xlu0 %2263
      %2265 = vrot.lane.b32.xlu0 %v2248, 40
      %v2266 = vpop.permute.xlu0 %2265
      %2267 = vrot.lane.b32.xlu0 %v2249, 40
      %v2268 = vpop.permute.xlu0 %2267
      %2269 = vrot.lane.b32.xlu0 %v2250, 40
      %v2270 = vpop.permute.xlu0 %2269
      %2271 = vrot.lane.b32.xlu0 %v2251, 40
      %v2272 = vpop.permute.xlu0 %2271
      %2273 = vrot.lane.b32.xlu0 %v2252, 40
      %v2274 = vpop.permute.xlu0 %2273
      %2275 = vrot.lane.b32.xlu0 %v2253, 40
      %v2276 = vpop.permute.xlu0 %2275
      %2277 = vrot.lane.b32.xlu0 %v2254, 40
      %v2278 = vpop.permute.xlu0 %2277
      %2279 = vrot.lane.b32.xlu0 %v2255, 40
      %v2280 = vpop.permute.xlu0 %2279
      %2281 = vrot.lane.b32.xlu0 %v2256, 40
      %v2282 = vpop.permute.xlu0 %2281
      %2283 = vrot.lane.b32.xlu0 %v2257, 40
      %v2284 = vpop.permute.xlu0 %2283
      %2285 = vrot.lane.b32.xlu0 %v2258, 40
      %v2286 = vpop.permute.xlu0 %2285
      %2287 = vrot.lane.b32.xlu0 %v2259, 40
      %v2288 = vpop.permute.xlu0 %2287
      %2289 = vrot.lane.b32.xlu0 %v2260, 40
      %v2290 = vpop.permute.xlu0 %2289
      %2291 = vrot.lane.b32.xlu0 %v2261, 40
      %v2292 = vpop.permute.xlu0 %2291
      %2293 = vrot.lane.b32.xlu0 %v2262, 40
      %v2294 = vpop.permute.xlu0 %2293
      %vm2311 = vcmask 392512
      %2312 = vst.msk [vmem:[#allocation2] sm:$0xff] %vm2311, %v2264
      %2313 = vst.msk [vmem:[#allocation2 + $0x8] sm:$0xff] %vm2311, %v2266
      %2314 = vst.msk [vmem:[#allocation2 + $0x10] sm:$0xff] %vm2311, %v2268
      %2315 = vst.msk [vmem:[#allocation2 + $0x18] sm:$0xff] %vm2311, %v2270
      %2316 = vst.msk [vmem:[#allocation2 + $0x20] sm:$0xff] %vm2311, %v2272
      %2317 = vst.msk [vmem:[#allocation2 + $0x28] sm:$0xff] %vm2311, %v2274
      %2318 = vst.msk [vmem:[#allocation2 + $0x30] sm:$0xff] %vm2311, %v2276
      %2319 = vst.msk [vmem:[#allocation2 + $0x38] sm:$0xff] %vm2311, %v2278
      %2320 = vst.msk [vmem:[#allocation2 + $0x40] sm:$0xff] %vm2311, %v2280
      %2321 = vst.msk [vmem:[#allocation2 + $0x48] sm:$0xff] %vm2311, %v2282
      %2322 = vst.msk [vmem:[#allocation2 + $0x50] sm:$0xff] %vm2311, %v2284
      %2323 = vst.msk [vmem:[#allocation2 + $0x58] sm:$0xff] %vm2311, %v2286
      %2324 = vst.msk [vmem:[#allocation2 + $0x60] sm:$0xff] %vm2311, %v2288
      %2325 = vst.msk [vmem:[#allocation2 + $0x68] sm:$0xff] %vm2311, %v2290
      %2326 = vst.msk [vmem:[#allocation2 + $0x70] sm:$0xff] %vm2311, %v2292
      %2327 = vst.msk [vmem:[#allocation2 + $0x78] sm:$0xff] %vm2311, %v2294
      %s2328 = sadd.s32 %s260, 2
      %s2329 = smul.u32 %s2328, 3
      %s2330 = smul.addr %s2329, 4
      %s2331 = scalar_lea.vmem %s236, %s2330
      %v2332 = vld [vmem:[%s2331] sm:$0xf]
      %v2333 = vld [vmem:[%s2331 + $0x4] sm:$0xf]
      %v2334 = vld [vmem:[%s2331 + $0xc] sm:$0xf]
      %v2335 = vld [vmem:[%s2331 + $0x10] sm:$0xf]
      %v2336 = vld [vmem:[%s2331 + $0x18] sm:$0xf]
      %v2337 = vld [vmem:[%s2331 + $0x1c] sm:$0xf]
      %v2338 = vld [vmem:[%s2331 + $0x24] sm:$0xf]
      %v2339 = vld [vmem:[%s2331 + $0x28] sm:$0xf]
      %v2340 = vld [vmem:[%s2331 + $0x30] sm:$0xf]
      %v2341 = vld [vmem:[%s2331 + $0x34] sm:$0xf]
      %v2342 = vld [vmem:[%s2331 + $0x3c] sm:$0xf]
      %v2343 = vld [vmem:[%s2331 + $0x40] sm:$0xf]
      %v2344 = vld [vmem:[%s2331 + $0x48] sm:$0xf]
      %v2345 = vld [vmem:[%s2331 + $0x4c] sm:$0xf]
      %v2346 = vld [vmem:[%s2331 + $0x54] sm:$0xf]
      %v2347 = vld [vmem:[%s2331 + $0x58] sm:$0xf]
      %v2348 = vld [vmem:[%s2331 + $0x60] sm:$0xf]
      %v2349 = vld [vmem:[%s2331 + $0x64] sm:$0xf]
      %v2350 = vld [vmem:[%s2331 + $0x6c] sm:$0xf]
      %v2351 = vld [vmem:[%s2331 + $0x70] sm:$0xf]
      %v2352 = vld [vmem:[%s2331 + $0x78] sm:$0xf]
      %v2353 = vld [vmem:[%s2331 + $0x7c] sm:$0xf]
      %v2354 = vld [vmem:[%s2331 + $0x84] sm:$0xf]
      %v2355 = vld [vmem:[%s2331 + $0x88] sm:$0xf]
      %v2356 = vld [vmem:[%s2331 + $0x90] sm:$0xf]
      %v2357 = vld [vmem:[%s2331 + $0x94] sm:$0xf]
      %v2358 = vld [vmem:[%s2331 + $0x9c] sm:$0xf]
      %v2359 = vld [vmem:[%s2331 + $0xa0] sm:$0xf]
      %v2360 = vld [vmem:[%s2331 + $0xa8] sm:$0xf]
      %v2361 = vld [vmem:[%s2331 + $0xac] sm:$0xf]
      %v2362 = vld [vmem:[%s2331 + $0xb4] sm:$0xf]
      %v2363 = vld [vmem:[%s2331 + $0xb8] sm:$0xf]
      %v2396 = vunpack.c.l.b16 %v2332
      %v2397 = vunpack.c.l.b16 %v2333
      %v2398 = vunpack.c.l.b16 %v2334
      %v2399 = vunpack.c.l.b16 %v2335
      %v2400 = vunpack.c.l.b16 %v2336
      %v2401 = vunpack.c.l.b16 %v2337
      %v2402 = vunpack.c.l.b16 %v2338
      %v2403 = vunpack.c.l.b16 %v2339
      %v2404 = vunpack.c.l.b16 %v2340
      %v2405 = vunpack.c.l.b16 %v2341
      %v2406 = vunpack.c.l.b16 %v2342
      %v2407 = vunpack.c.l.b16 %v2343
      %v2408 = vunpack.c.l.b16 %v2344
      %v2409 = vunpack.c.l.b16 %v2345
      %v2410 = vunpack.c.l.b16 %v2346
      %v2411 = vunpack.c.l.b16 %v2347
      %v2412 = vunpack.c.l.b16 %v2348
      %v2413 = vunpack.c.l.b16 %v2349
      %v2414 = vunpack.c.l.b16 %v2350
      %v2415 = vunpack.c.l.b16 %v2351
      %v2416 = vunpack.c.l.b16 %v2352
      %v2417 = vunpack.c.l.b16 %v2353
      %v2418 = vunpack.c.l.b16 %v2354
      %v2419 = vunpack.c.l.b16 %v2355
      %v2420 = vunpack.c.l.b16 %v2356
      %v2421 = vunpack.c.l.b16 %v2357
      %v2422 = vunpack.c.l.b16 %v2358
      %v2423 = vunpack.c.l.b16 %v2359
      %v2424 = vunpack.c.l.b16 %v2360
      %v2425 = vunpack.c.l.b16 %v2361
      %v2426 = vunpack.c.l.b16 %v2362
      %v2427 = vunpack.c.l.b16 %v2363
      %v2428 = vpack.c.b16 %v2397, %v2396
      %v2429 = vpack.c.b16 %v2399, %v2398
      %v2430 = vpack.c.b16 %v2401, %v2400
      %v2431 = vpack.c.b16 %v2403, %v2402
      %v2432 = vpack.c.b16 %v2405, %v2404
      %v2433 = vpack.c.b16 %v2407, %v2406
      %v2434 = vpack.c.b16 %v2409, %v2408
      %v2435 = vpack.c.b16 %v2411, %v2410
      %v2436 = vpack.c.b16 %v2413, %v2412
      %v2437 = vpack.c.b16 %v2415, %v2414
      %v2438 = vpack.c.b16 %v2417, %v2416
      %v2439 = vpack.c.b16 %v2419, %v2418
      %v2440 = vpack.c.b16 %v2421, %v2420
      %v2441 = vpack.c.b16 %v2423, %v2422
      %v2442 = vpack.c.b16 %v2425, %v2424
      %v2443 = vpack.c.b16 %v2427, %v2426
      %2444 = vrot.lane.b32.xlu0 %v2428, 48
      %v2445 = vpop.permute.xlu0 %2444
      %2446 = vrot.lane.b32.xlu0 %v2429, 48
      %v2447 = vpop.permute.xlu0 %2446
      %2448 = vrot.lane.b32.xlu0 %v2430, 48
      %v2449 = vpop.permute.xlu0 %2448
      %2450 = vrot.lane.b32.xlu0 %v2431, 48
      %v2451 = vpop.permute.xlu0 %2450
      %2452 = vrot.lane.b32.xlu0 %v2432, 48
      %v2453 = vpop.permute.xlu0 %2452
      %2454 = vrot.lane.b32.xlu0 %v2433, 48
      %v2455 = vpop.permute.xlu0 %2454
      %2456 = vrot.lane.b32.xlu0 %v2434, 48
      %v2457 = vpop.permute.xlu0 %2456
      %2458 = vrot.lane.b32.xlu0 %v2435, 48
      %v2459 = vpop.permute.xlu0 %2458
      %2460 = vrot.lane.b32.xlu0 %v2436, 48
      %v2461 = vpop.permute.xlu0 %2460
      %2462 = vrot.lane.b32.xlu0 %v2437, 48
      %v2463 = vpop.permute.xlu0 %2462
      %2464 = vrot.lane.b32.xlu0 %v2438, 48
      %v2465 = vpop.permute.xlu0 %2464
      %2466 = vrot.lane.b32.xlu0 %v2439, 48
      %v2467 = vpop.permute.xlu0 %2466
      %2468 = vrot.lane.b32.xlu0 %v2440, 48
      %v2469 = vpop.permute.xlu0 %2468
      %2470 = vrot.lane.b32.xlu0 %v2441, 48
      %v2471 = vpop.permute.xlu0 %2470
      %2472 = vrot.lane.b32.xlu0 %v2442, 48
      %v2473 = vpop.permute.xlu0 %2472
      %2474 = vrot.lane.b32.xlu0 %v2443, 48
      %v2475 = vpop.permute.xlu0 %2474
      %vm2492 = vcmask 458112
      %2493 = vst.msk [vmem:[#allocation2] sm:$0xff] %vm2492, %v2445
      %2494 = vst.msk [vmem:[#allocation2 + $0x8] sm:$0xff] %vm2492, %v2447
      %2495 = vst.msk [vmem:[#allocation2 + $0x10] sm:$0xff] %vm2492, %v2449
      %2496 = vst.msk [vmem:[#allocation2 + $0x18] sm:$0xff] %vm2492, %v2451
      %2497 = vst.msk [vmem:[#allocation2 + $0x20] sm:$0xff] %vm2492, %v2453
      %2498 = vst.msk [vmem:[#allocation2 + $0x28] sm:$0xff] %vm2492, %v2455
      %2499 = vst.msk [vmem:[#allocation2 + $0x30] sm:$0xff] %vm2492, %v2457
      %2500 = vst.msk [vmem:[#allocation2 + $0x38] sm:$0xff] %vm2492, %v2459
      %2501 = vst.msk [vmem:[#allocation2 + $0x40] sm:$0xff] %vm2492, %v2461
      %2502 = vst.msk [vmem:[#allocation2 + $0x48] sm:$0xff] %vm2492, %v2463
      %2503 = vst.msk [vmem:[#allocation2 + $0x50] sm:$0xff] %vm2492, %v2465
      %2504 = vst.msk [vmem:[#allocation2 + $0x58] sm:$0xff] %vm2492, %v2467
      %2505 = vst.msk [vmem:[#allocation2 + $0x60] sm:$0xff] %vm2492, %v2469
      %2506 = vst.msk [vmem:[#allocation2 + $0x68] sm:$0xff] %vm2492, %v2471
      %2507 = vst.msk [vmem:[#allocation2 + $0x70] sm:$0xff] %vm2492, %v2473
      %2508 = vst.msk [vmem:[#allocation2 + $0x78] sm:$0xff] %vm2492, %v2475
      %v2509 = vld [vmem:[%s2331] sm:$0xf]
      %v2510 = vld [vmem:[%s2331 + $0x4] sm:$0xf]
      %v2511 = vld [vmem:[%s2331 + $0x8] sm:$0x1]
      %v2512 = vld [vmem:[%s2331 + $0xc] sm:$0xf]
      %v2513 = vld [vmem:[%s2331 + $0x10] sm:$0xf]
      %v2514 = vld [vmem:[%s2331 + $0x14] sm:$0x1]
      %v2515 = vld [vmem:[%s2331 + $0x18] sm:$0xf]
      %v2516 = vld [vmem:[%s2331 + $0x1c] sm:$0xf]
      %v2517 = vld [vmem:[%s2331 + $0x20] sm:$0x1]
      %v2518 = vld [vmem:[%s2331 + $0x24] sm:$0xf]
      %v2519 = vld [vmem:[%s2331 + $0x28] sm:$0xf]
      %v2520 = vld [vmem:[%s2331 + $0x2c] sm:$0x1]
      %v2521 = vld [vmem:[%s2331 + $0x30] sm:$0xf]
      %v2522 = vld [vmem:[%s2331 + $0x34] sm:$0xf]
      %v2523 = vld [vmem:[%s2331 + $0x38] sm:$0x1]
      %v2524 = vld [vmem:[%s2331 + $0x3c] sm:$0xf]
      %v2525 = vld [vmem:[%s2331 + $0x40] sm:$0xf]
      %v2526 = vld [vmem:[%s2331 + $0x44] sm:$0x1]
      %v2527 = vld [vmem:[%s2331 + $0x48] sm:$0xf]
      %v2528 = vld [vmem:[%s2331 + $0x4c] sm:$0xf]
      %v2529 = vld [vmem:[%s2331 + $0x50] sm:$0x1]
      %v2530 = vld [vmem:[%s2331 + $0x54] sm:$0xf]
      %v2531 = vld [vmem:[%s2331 + $0x58] sm:$0xf]
      %v2532 = vld [vmem:[%s2331 + $0x5c] sm:$0x1]
      %v2533 = vld [vmem:[%s2331 + $0x60] sm:$0xf]
      %v2534 = vld [vmem:[%s2331 + $0x64] sm:$0xf]
      %v2535 = vld [vmem:[%s2331 + $0x68] sm:$0x1]
      %v2536 = vld [vmem:[%s2331 + $0x6c] sm:$0xf]
      %v2537 = vld [vmem:[%s2331 + $0x70] sm:$0xf]
      %v2538 = vld [vmem:[%s2331 + $0x74] sm:$0x1]
      %v2539 = vld [vmem:[%s2331 + $0x78] sm:$0xf]
      %v2540 = vld [vmem:[%s2331 + $0x7c] sm:$0xf]
      %v2541 = vld [vmem:[%s2331 + $0x80] sm:$0x1]
      %v2542 = vld [vmem:[%s2331 + $0x84] sm:$0xf]
      %v2543 = vld [vmem:[%s2331 + $0x88] sm:$0xf]
      %v2544 = vld [vmem:[%s2331 + $0x8c] sm:$0x1]
      %v2545 = vld [vmem:[%s2331 + $0x90] sm:$0xf]
      %v2546 = vld [vmem:[%s2331 + $0x94] sm:$0xf]
      %v2547 = vld [vmem:[%s2331 + $0x98] sm:$0x1]
      %v2548 = vld [vmem:[%s2331 + $0x9c] sm:$0xf]
      %v2549 = vld [vmem:[%s2331 + $0xa0] sm:$0xf]
      %v2550 = vld [vmem:[%s2331 + $0xa4] sm:$0x1]
      %v2551 = vld [vmem:[%s2331 + $0xa8] sm:$0xf]
      %v2552 = vld [vmem:[%s2331 + $0xac] sm:$0xf]
      %v2553 = vld [vmem:[%s2331 + $0xb0] sm:$0x1]
      %v2554 = vld [vmem:[%s2331 + $0xb4] sm:$0xf]
      %v2555 = vld [vmem:[%s2331 + $0xb8] sm:$0xf]
      %v2556 = vld [vmem:[%s2331 + $0xbc] sm:$0x1]
      %v2558 = vshrl.u32 %v2509, 16
      %v2560 = vrot.slane %v2558, 4
      %v2561 = vshll.u32 %v2509, 16
      %v2563 = vrot.slane %v2561, 5
      %v2564 = vor.u32 %v2560, %v2563
      %v2565 = vrot.slane %v2564, 4
      %v2567 = vshll.u32 %v2510, 16
      %v2569 = vrot.slane %v2567, 5
      %v2570 = vsel %vm459, %v2565, %v2569
      %v2571 = vshrl.u32 %v2510, 16
      %v2573 = vrot.slane %v2571, 4
      %v2574 = vor.u32 %v2573, %v2569
      %v2575 = vrot.slane %v2574, 4
      %v2577 = vshll.u32 %v2511, 16
      %v2579 = vrot.slane %v2577, 5
      %v2580 = vsel %vm459, %v2575, %v2579
      %v2582 = vshrl.u32 %v2512, 16
      %v2584 = vrot.slane %v2582, 4
      %v2585 = vshll.u32 %v2512, 16
      %v2587 = vrot.slane %v2585, 5
      %v2588 = vor.u32 %v2584, %v2587
      %v2589 = vrot.slane %v2588, 4
      %v2591 = vshll.u32 %v2513, 16
      %v2593 = vrot.slane %v2591, 5
      %v2594 = vsel %vm459, %v2589, %v2593
      %v2595 = vshrl.u32 %v2513, 16
      %v2597 = vrot.slane %v2595, 4
      %v2598 = vor.u32 %v2597, %v2593
      %v2599 = vrot.slane %v2598, 4
      %v2601 = vshll.u32 %v2514, 16
      %v2603 = vrot.slane %v2601, 5
      %v2604 = vsel %vm459, %v2599, %v2603
      %v2606 = vshrl.u32 %v2515, 16
      %v2608 = vrot.slane %v2606, 4
      %v2609 = vshll.u32 %v2515, 16
      %v2611 = vrot.slane %v2609, 5
      %v2612 = vor.u32 %v2608, %v2611
      %v2613 = vrot.slane %v2612, 4
      %v2615 = vshll.u32 %v2516, 16
      %v2617 = vrot.slane %v2615, 5
      %v2618 = vsel %vm459, %v2613, %v2617
      %v2619 = vshrl.u32 %v2516, 16
      %v2621 = vrot.slane %v2619, 4
      %v2622 = vor.u32 %v2621, %v2617
      %v2623 = vrot.slane %v2622, 4
      %v2625 = vshll.u32 %v2517, 16
      %v2627 = vrot.slane %v2625, 5
      %v2628 = vsel %vm459, %v2623, %v2627
      %v2630 = vshrl.u32 %v2518, 16
      %v2632 = vrot.slane %v2630, 4
      %v2633 = vshll.u32 %v2518, 16
      %v2635 = vrot.slane %v2633, 5
      %v2636 = vor.u32 %v2632, %v2635
      %v2637 = vrot.slane %v2636, 4
      %v2639 = vshll.u32 %v2519, 16
      %v2641 = vrot.slane %v2639, 5
      %v2642 = vsel %vm459, %v2637, %v2641
      %v2643 = vshrl.u32 %v2519, 16
      %v2645 = vrot.slane %v2643, 4
      %v2646 = vor.u32 %v2645, %v2641
      %v2647 = vrot.slane %v2646, 4
      %v2649 = vshll.u32 %v2520, 16
      %v2651 = vrot.slane %v2649, 5
      %v2652 = vsel %vm459, %v2647, %v2651
      %v2654 = vshrl.u32 %v2521, 16
      %v2656 = vrot.slane %v2654, 4
      %v2657 = vshll.u32 %v2521, 16
      %v2659 = vrot.slane %v2657, 5
      %v2660 = vor.u32 %v2656, %v2659
      %v2661 = vrot.slane %v2660, 4
      %v2663 = vshll.u32 %v2522, 16
      %v2665 = vrot.slane %v2663, 5
      %v2666 = vsel %vm459, %v2661, %v2665
      %v2667 = vshrl.u32 %v2522, 16
      %v2669 = vrot.slane %v2667, 4
      %v2670 = vor.u32 %v2669, %v2665
      %v2671 = vrot.slane %v2670, 4
      %v2673 = vshll.u32 %v2523, 16
      %v2675 = vrot.slane %v2673, 5
      %v2676 = vsel %vm459, %v2671, %v2675
      %v2678 = vshrl.u32 %v2524, 16
      %v2680 = vrot.slane %v2678, 4
      %v2681 = vshll.u32 %v2524, 16
      %v2683 = vrot.slane %v2681, 5
      %v2684 = vor.u32 %v2680, %v2683
      %v2685 = vrot.slane %v2684, 4
      %v2687 = vshll.u32 %v2525, 16
      %v2689 = vrot.slane %v2687, 5
      %v2690 = vsel %vm459, %v2685, %v2689
      %v2691 = vshrl.u32 %v2525, 16
      %v2693 = vrot.slane %v2691, 4
      %v2694 = vor.u32 %v2693, %v2689
      %v2695 = vrot.slane %v2694, 4
      %v2697 = vshll.u32 %v2526, 16
      %v2699 = vrot.slane %v2697, 5
      %v2700 = vsel %vm459, %v2695, %v2699
      %v2702 = vshrl.u32 %v2527, 16
      %v2704 = vrot.slane %v2702, 4
      %v2705 = vshll.u32 %v2527, 16
      %v2707 = vrot.slane %v2705, 5
      %v2708 = vor.u32 %v2704, %v2707
      %v2709 = vrot.slane %v2708, 4
      %v2711 = vshll.u32 %v2528, 16
      %v2713 = vrot.slane %v2711, 5
      %v2714 = vsel %vm459, %v2709, %v2713
      %v2715 = vshrl.u32 %v2528, 16
      %v2717 = vrot.slane %v2715, 4
      %v2718 = vor.u32 %v2717, %v2713
      %v2719 = vrot.slane %v2718, 4
      %v2721 = vshll.u32 %v2529, 16
      %v2723 = vrot.slane %v2721, 5
      %v2724 = vsel %vm459, %v2719, %v2723
      %v2726 = vshrl.u32 %v2530, 16
      %v2728 = vrot.slane %v2726, 4
      %v2729 = vshll.u32 %v2530, 16
      %v2731 = vrot.slane %v2729, 5
      %v2732 = vor.u32 %v2728, %v2731
      %v2733 = vrot.slane %v2732, 4
      %v2735 = vshll.u32 %v2531, 16
      %v2737 = vrot.slane %v2735, 5
      %v2738 = vsel %vm459, %v2733, %v2737
      %v2739 = vshrl.u32 %v2531, 16
      %v2741 = vrot.slane %v2739, 4
      %v2742 = vor.u32 %v2741, %v2737
      %v2743 = vrot.slane %v2742, 4
      %v2745 = vshll.u32 %v2532, 16
      %v2747 = vrot.slane %v2745, 5
      %v2748 = vsel %vm459, %v2743, %v2747
      %v2750 = vshrl.u32 %v2533, 16
      %v2752 = vrot.slane %v2750, 4
      %v2753 = vshll.u32 %v2533, 16
      %v2755 = vrot.slane %v2753, 5
      %v2756 = vor.u32 %v2752, %v2755
      %v2757 = vrot.slane %v2756, 4
      %v2759 = vshll.u32 %v2534, 16
      %v2761 = vrot.slane %v2759, 5
      %v2762 = vsel %vm459, %v2757, %v2761
      %v2763 = vshrl.u32 %v2534, 16
      %v2765 = vrot.slane %v2763, 4
      %v2766 = vor.u32 %v2765, %v2761
      %v2767 = vrot.slane %v2766, 4
      %v2769 = vshll.u32 %v2535, 16
      %v2771 = vrot.slane %v2769, 5
      %v2772 = vsel %vm459, %v2767, %v2771
      %v2774 = vshrl.u32 %v2536, 16
      %v2776 = vrot.slane %v2774, 4
      %v2777 = vshll.u32 %v2536, 16
      %v2779 = vrot.slane %v2777, 5
      %v2780 = vor.u32 %v2776, %v2779
      %v2781 = vrot.slane %v2780, 4
      %v2783 = vshll.u32 %v2537, 16
      %v2785 = vrot.slane %v2783, 5
      %v2786 = vsel %vm459, %v2781, %v2785
      %v2787 = vshrl.u32 %v2537, 16
      %v2789 = vrot.slane %v2787, 4
      %v2790 = vor.u32 %v2789, %v2785
      %v2791 = vrot.slane %v2790, 4
      %v2793 = vshll.u32 %v2538, 16
      %v2795 = vrot.slane %v2793, 5
      %v2796 = vsel %vm459, %v2791, %v2795
      %v2798 = vshrl.u32 %v2539, 16
      %v2800 = vrot.slane %v2798, 4
      %v2801 = vshll.u32 %v2539, 16
      %v2803 = vrot.slane %v2801, 5
      %v2804 = vor.u32 %v2800, %v2803
      %v2805 = vrot.slane %v2804, 4
      %v2807 = vshll.u32 %v2540, 16
      %v2809 = vrot.slane %v2807, 5
      %v2810 = vsel %vm459, %v2805, %v2809
      %v2811 = vshrl.u32 %v2540, 16
      %v2813 = vrot.slane %v2811, 4
      %v2814 = vor.u32 %v2813, %v2809
      %v2815 = vrot.slane %v2814, 4
      %v2817 = vshll.u32 %v2541, 16
      %v2819 = vrot.slane %v2817, 5
      %v2820 = vsel %vm459, %v2815, %v2819
      %v2822 = vshrl.u32 %v2542, 16
      %v2824 = vrot.slane %v2822, 4
      %v2825 = vshll.u32 %v2542, 16
      %v2827 = vrot.slane %v2825, 5
      %v2828 = vor.u32 %v2824, %v2827
      %v2829 = vrot.slane %v2828, 4
      %v2831 = vshll.u32 %v2543, 16
      %v2833 = vrot.slane %v2831, 5
      %v2834 = vsel %vm459, %v2829, %v2833
      %v2835 = vshrl.u32 %v2543, 16
      %v2837 = vrot.slane %v2835, 4
      %v2838 = vor.u32 %v2837, %v2833
      %v2839 = vrot.slane %v2838, 4
      %v2841 = vshll.u32 %v2544, 16
      %v2843 = vrot.slane %v2841, 5
      %v2844 = vsel %vm459, %v2839, %v2843
      %v2846 = vshrl.u32 %v2545, 16
      %v2848 = vrot.slane %v2846, 4
      %v2849 = vshll.u32 %v2545, 16
      %v2851 = vrot.slane %v2849, 5
      %v2852 = vor.u32 %v2848, %v2851
      %v2853 = vrot.slane %v2852, 4
      %v2855 = vshll.u32 %v2546, 16
      %v2857 = vrot.slane %v2855, 5
      %v2858 = vsel %vm459, %v2853, %v2857
      %v2859 = vshrl.u32 %v2546, 16
      %v2861 = vrot.slane %v2859, 4
      %v2862 = vor.u32 %v2861, %v2857
      %v2863 = vrot.slane %v2862, 4
      %v2865 = vshll.u32 %v2547, 16
      %v2867 = vrot.slane %v2865, 5
      %v2868 = vsel %vm459, %v2863, %v2867
      %v2870 = vshrl.u32 %v2548, 16
      %v2872 = vrot.slane %v2870, 4
      %v2873 = vshll.u32 %v2548, 16
      %v2875 = vrot.slane %v2873, 5
      %v2876 = vor.u32 %v2872, %v2875
      %v2877 = vrot.slane %v2876, 4
      %v2879 = vshll.u32 %v2549, 16
      %v2881 = vrot.slane %v2879, 5
      %v2882 = vsel %vm459, %v2877, %v2881
      %v2883 = vshrl.u32 %v2549, 16
      %v2885 = vrot.slane %v2883, 4
      %v2886 = vor.u32 %v2885, %v2881
      %v2887 = vrot.slane %v2886, 4
      %v2889 = vshll.u32 %v2550, 16
      %v2891 = vrot.slane %v2889, 5
      %v2892 = vsel %vm459, %v2887, %v2891
      %v2894 = vshrl.u32 %v2551, 16
      %v2896 = vrot.slane %v2894, 4
      %v2897 = vshll.u32 %v2551, 16
      %v2899 = vrot.slane %v2897, 5
      %v2900 = vor.u32 %v2896, %v2899
      %v2901 = vrot.slane %v2900, 4
      %v2903 = vshll.u32 %v2552, 16
      %v2905 = vrot.slane %v2903, 5
      %v2906 = vsel %vm459, %v2901, %v2905
      %v2907 = vshrl.u32 %v2552, 16
      %v2909 = vrot.slane %v2907, 4
      %v2910 = vor.u32 %v2909, %v2905
      %v2911 = vrot.slane %v2910, 4
      %v2913 = vshll.u32 %v2553, 16
      %v2915 = vrot.slane %v2913, 5
      %v2916 = vsel %vm459, %v2911, %v2915
      %v2918 = vshrl.u32 %v2554, 16
      %v2920 = vrot.slane %v2918, 4
      %v2921 = vshll.u32 %v2554, 16
      %v2923 = vrot.slane %v2921, 5
      %v2924 = vor.u32 %v2920, %v2923
      %v2925 = vrot.slane %v2924, 4
      %v2927 = vshll.u32 %v2555, 16
      %v2929 = vrot.slane %v2927, 5
      %v2930 = vsel %vm459, %v2925, %v2929
      %v2931 = vshrl.u32 %v2555, 16
      %v2933 = vrot.slane %v2931, 4
      %v2934 = vor.u32 %v2933, %v2929
      %v2935 = vrot.slane %v2934, 4
      %v2937 = vshll.u32 %v2556, 16
      %v2939 = vrot.slane %v2937, 5
      %v2940 = vsel %vm459, %v2935, %v2939
      %v2941 = vunpack.c.l.b16 %v2570
      %v2942 = vunpack.c.l.b16 %v2580
      %v2943 = vunpack.c.l.b16 %v2594
      %v2944 = vunpack.c.l.b16 %v2604
      %v2945 = vunpack.c.l.b16 %v2618
      %v2946 = vunpack.c.l.b16 %v2628
      %v2947 = vunpack.c.l.b16 %v2642
      %v2948 = vunpack.c.l.b16 %v2652
      %v2949 = vunpack.c.l.b16 %v2666
      %v2950 = vunpack.c.l.b16 %v2676
      %v2951 = vunpack.c.l.b16 %v2690
      %v2952 = vunpack.c.l.b16 %v2700
      %v2953 = vunpack.c.l.b16 %v2714
      %v2954 = vunpack.c.l.b16 %v2724
      %v2955 = vunpack.c.l.b16 %v2738
      %v2956 = vunpack.c.l.b16 %v2748
      %v2957 = vunpack.c.l.b16 %v2762
      %v2958 = vunpack.c.l.b16 %v2772
      %v2959 = vunpack.c.l.b16 %v2786
      %v2960 = vunpack.c.l.b16 %v2796
      %v2961 = vunpack.c.l.b16 %v2810
      %v2962 = vunpack.c.l.b16 %v2820
      %v2963 = vunpack.c.l.b16 %v2834
      %v2964 = vunpack.c.l.b16 %v2844
      %v2965 = vunpack.c.l.b16 %v2858
      %v2966 = vunpack.c.l.b16 %v2868
      %v2967 = vunpack.c.l.b16 %v2882
      %v2968 = vunpack.c.l.b16 %v2892
      %v2969 = vunpack.c.l.b16 %v2906
      %v2970 = vunpack.c.l.b16 %v2916
      %v2971 = vunpack.c.l.b16 %v2930
      %v2972 = vunpack.c.l.b16 %v2940
      %v2973 = vpack.c.b16 %v2942, %v2941
      %v2974 = vpack.c.b16 %v2944, %v2943
      %v2975 = vpack.c.b16 %v2946, %v2945
      %v2976 = vpack.c.b16 %v2948, %v2947
      %v2977 = vpack.c.b16 %v2950, %v2949
      %v2978 = vpack.c.b16 %v2952, %v2951
      %v2979 = vpack.c.b16 %v2954, %v2953
      %v2980 = vpack.c.b16 %v2956, %v2955
      %v2981 = vpack.c.b16 %v2958, %v2957
      %v2982 = vpack.c.b16 %v2960, %v2959
      %v2983 = vpack.c.b16 %v2962, %v2961
      %v2984 = vpack.c.b16 %v2964, %v2963
      %v2985 = vpack.c.b16 %v2966, %v2965
      %v2986 = vpack.c.b16 %v2968, %v2967
      %v2987 = vpack.c.b16 %v2970, %v2969
      %v2988 = vpack.c.b16 %v2972, %v2971
      %2989 = vrot.lane.b32.xlu0 %v2973, 56
      %v2990 = vpop.permute.xlu0 %2989
      %2991 = vrot.lane.b32.xlu0 %v2974, 56
      %v2992 = vpop.permute.xlu0 %2991
      %2993 = vrot.lane.b32.xlu0 %v2975, 56
      %v2994 = vpop.permute.xlu0 %2993
      %2995 = vrot.lane.b32.xlu0 %v2976, 56
      %v2996 = vpop.permute.xlu0 %2995
      %2997 = vrot.lane.b32.xlu0 %v2977, 56
      %v2998 = vpop.permute.xlu0 %2997
      %2999 = vrot.lane.b32.xlu0 %v2978, 56
      %v3000 = vpop.permute.xlu0 %2999
      %3001 = vrot.lane.b32.xlu0 %v2979, 56
      %v3002 = vpop.permute.xlu0 %3001
      %3003 = vrot.lane.b32.xlu0 %v2980, 56
      %v3004 = vpop.permute.xlu0 %3003
      %3005 = vrot.lane.b32.xlu0 %v2981, 56
      %v3006 = vpop.permute.xlu0 %3005
      %3007 = vrot.lane.b32.xlu0 %v2982, 56
      %v3008 = vpop.permute.xlu0 %3007
      %3009 = vrot.lane.b32.xlu0 %v2983, 56
      %v3010 = vpop.permute.xlu0 %3009
      %3011 = vrot.lane.b32.xlu0 %v2984, 56
      %v3012 = vpop.permute.xlu0 %3011
      %3013 = vrot.lane.b32.xlu0 %v2985, 56
      %v3014 = vpop.permute.xlu0 %3013
      %3015 = vrot.lane.b32.xlu0 %v2986, 56
      %v3016 = vpop.permute.xlu0 %3015
      %3017 = vrot.lane.b32.xlu0 %v2987, 56
      %v3018 = vpop.permute.xlu0 %3017
      %3019 = vrot.lane.b32.xlu0 %v2988, 56
      %v3020 = vpop.permute.xlu0 %3019
      %vm3037 = vcmask 523712
      %3038 = vst.msk [vmem:[#allocation2] sm:$0xff] %vm3037, %v2990
      %3039 = vst.msk [vmem:[#allocation2 + $0x8] sm:$0xff] %vm3037, %v2992
      %3040 = vst.msk [vmem:[#allocation2 + $0x10] sm:$0xff] %vm3037, %v2994
      %3041 = vst.msk [vmem:[#allocation2 + $0x18] sm:$0xff] %vm3037, %v2996
      %3042 = vst.msk [vmem:[#allocation2 + $0x20] sm:$0xff] %vm3037, %v2998
      %3043 = vst.msk [vmem:[#allocation2 + $0x28] sm:$0xff] %vm3037, %v3000
      %3044 = vst.msk [vmem:[#allocation2 + $0x30] sm:$0xff] %vm3037, %v3002
      %3045 = vst.msk [vmem:[#allocation2 + $0x38] sm:$0xff] %vm3037, %v3004
      %3046 = vst.msk [vmem:[#allocation2 + $0x40] sm:$0xff] %vm3037, %v3006
      %3047 = vst.msk [vmem:[#allocation2 + $0x48] sm:$0xff] %vm3037, %v3008
      %3048 = vst.msk [vmem:[#allocation2 + $0x50] sm:$0xff] %vm3037, %v3010
      %3049 = vst.msk [vmem:[#allocation2 + $0x58] sm:$0xff] %vm3037, %v3012
      %3050 = vst.msk [vmem:[#allocation2 + $0x60] sm:$0xff] %vm3037, %v3014
      %3051 = vst.msk [vmem:[#allocation2 + $0x68] sm:$0xff] %vm3037, %v3016
      %3052 = vst.msk [vmem:[#allocation2 + $0x70] sm:$0xff] %vm3037, %v3018
      %3053 = vst.msk [vmem:[#allocation2 + $0x78] sm:$0xff] %vm3037, %v3020
      %v3054 = vld [vmem:[%s2331] sm:$0xe]
      %v3055 = vld [vmem:[%s2331 + $0x4] sm:$0xf]
      %v3056 = vld [vmem:[%s2331 + $0x8] sm:$0x1]
      %v3057 = vld [vmem:[%s2331 + $0xc] sm:$0xe]
      %v3058 = vld [vmem:[%s2331 + $0x10] sm:$0xf]
      %v3059 = vld [vmem:[%s2331 + $0x14] sm:$0x1]
      %v3060 = vld [vmem:[%s2331 + $0x18] sm:$0xe]
      %v3061 = vld [vmem:[%s2331 + $0x1c] sm:$0xf]
      %v3062 = vld [vmem:[%s2331 + $0x20] sm:$0x1]
      %v3063 = vld [vmem:[%s2331 + $0x24] sm:$0xe]
      %v3064 = vld [vmem:[%s2331 + $0x28] sm:$0xf]
      %v3065 = vld [vmem:[%s2331 + $0x2c] sm:$0x1]
      %v3066 = vld [vmem:[%s2331 + $0x30] sm:$0xe]
      %v3067 = vld [vmem:[%s2331 + $0x34] sm:$0xf]
      %v3068 = vld [vmem:[%s2331 + $0x38] sm:$0x1]
      %v3069 = vld [vmem:[%s2331 + $0x3c] sm:$0xe]
      %v3070 = vld [vmem:[%s2331 + $0x40] sm:$0xf]
      %v3071 = vld [vmem:[%s2331 + $0x44] sm:$0x1]
      %v3072 = vld [vmem:[%s2331 + $0x48] sm:$0xe]
      %v3073 = vld [vmem:[%s2331 + $0x4c] sm:$0xf]
      %v3074 = vld [vmem:[%s2331 + $0x50] sm:$0x1]
      %v3075 = vld [vmem:[%s2331 + $0x54] sm:$0xe]
      %v3076 = vld [vmem:[%s2331 + $0x58] sm:$0xf]
      %v3077 = vld [vmem:[%s2331 + $0x5c] sm:$0x1]
      %v3078 = vld [vmem:[%s2331 + $0x60] sm:$0xe]
      %v3079 = vld [vmem:[%s2331 + $0x64] sm:$0xf]
      %v3080 = vld [vmem:[%s2331 + $0x68] sm:$0x1]
      %v3081 = vld [vmem:[%s2331 + $0x6c] sm:$0xe]
      %v3082 = vld [vmem:[%s2331 + $0x70] sm:$0xf]
      %v3083 = vld [vmem:[%s2331 + $0x74] sm:$0x1]
      %v3084 = vld [vmem:[%s2331 + $0x78] sm:$0xe]
      %v3085 = vld [vmem:[%s2331 + $0x7c] sm:$0xf]
      %v3086 = vld [vmem:[%s2331 + $0x80] sm:$0x1]
      %v3087 = vld [vmem:[%s2331 + $0x84] sm:$0xe]
      %v3088 = vld [vmem:[%s2331 + $0x88] sm:$0xf]
      %v3089 = vld [vmem:[%s2331 + $0x8c] sm:$0x1]
      %v3090 = vld [vmem:[%s2331 + $0x90] sm:$0xe]
      %v3091 = vld [vmem:[%s2331 + $0x94] sm:$0xf]
      %v3092 = vld [vmem:[%s2331 + $0x98] sm:$0x1]
      %v3093 = vld [vmem:[%s2331 + $0x9c] sm:$0xe]
      %v3094 = vld [vmem:[%s2331 + $0xa0] sm:$0xf]
      %v3095 = vld [vmem:[%s2331 + $0xa4] sm:$0x1]
      %v3096 = vld [vmem:[%s2331 + $0xa8] sm:$0xe]
      %v3097 = vld [vmem:[%s2331 + $0xac] sm:$0xf]
      %v3098 = vld [vmem:[%s2331 + $0xb0] sm:$0x1]
      %v3099 = vld [vmem:[%s2331 + $0xb4] sm:$0xe]
      %v3100 = vld [vmem:[%s2331 + $0xb8] sm:$0xf]
      %v3101 = vld [vmem:[%s2331 + $0xbc] sm:$0x1]
      %v3150 = vrot.slane %v3054, 5
      %v3151 = vrot.slane %v3150, 4
      %v3152 = vrot.slane %v3055, 5
      %v3153 = vsel %vm1055, %v3151, %v3152
      %v3154 = vrot.slane %v3152, 4
      %v3155 = vrot.slane %v3056, 5
      %v3156 = vsel %vm1055, %v3154, %v3155
      %v3157 = vrot.slane %v3057, 5
      %v3158 = vrot.slane %v3157, 4
      %v3159 = vrot.slane %v3058, 5
      %v3160 = vsel %vm1055, %v3158, %v3159
      %v3161 = vrot.slane %v3159, 4
      %v3162 = vrot.slane %v3059, 5
      %v3163 = vsel %vm1055, %v3161, %v3162
      %v3164 = vrot.slane %v3060, 5
      %v3165 = vrot.slane %v3164, 4
      %v3166 = vrot.slane %v3061, 5
      %v3167 = vsel %vm1055, %v3165, %v3166
      %v3168 = vrot.slane %v3166, 4
      %v3169 = vrot.slane %v3062, 5
      %v3170 = vsel %vm1055, %v3168, %v3169
      %v3171 = vrot.slane %v3063, 5
      %v3172 = vrot.slane %v3171, 4
      %v3173 = vrot.slane %v3064, 5
      %v3174 = vsel %vm1055, %v3172, %v3173
      %v3175 = vrot.slane %v3173, 4
      %v3176 = vrot.slane %v3065, 5
      %v3177 = vsel %vm1055, %v3175, %v3176
      %v3178 = vrot.slane %v3066, 5
      %v3179 = vrot.slane %v3178, 4
      %v3180 = vrot.slane %v3067, 5
      %v3181 = vsel %vm1055, %v3179, %v3180
      %v3182 = vrot.slane %v3180, 4
      %v3183 = vrot.slane %v3068, 5
      %v3184 = vsel %vm1055, %v3182, %v3183
      %v3185 = vrot.slane %v3069, 5
      %v3186 = vrot.slane %v3185, 4
      %v3187 = vrot.slane %v3070, 5
      %v3188 = vsel %vm1055, %v3186, %v3187
      %v3189 = vrot.slane %v3187, 4
      %v3190 = vrot.slane %v3071, 5
      %v3191 = vsel %vm1055, %v3189, %v3190
      %v3192 = vrot.slane %v3072, 5
      %v3193 = vrot.slane %v3192, 4
      %v3194 = vrot.slane %v3073, 5
      %v3195 = vsel %vm1055, %v3193, %v3194
      %v3196 = vrot.slane %v3194, 4
      %v3197 = vrot.slane %v3074, 5
      %v3198 = vsel %vm1055, %v3196, %v3197
      %v3199 = vrot.slane %v3075, 5
      %v3200 = vrot.slane %v3199, 4
      %v3201 = vrot.slane %v3076, 5
      %v3202 = vsel %vm1055, %v3200, %v3201
      %v3203 = vrot.slane %v3201, 4
      %v3204 = vrot.slane %v3077, 5
      %v3205 = vsel %vm1055, %v3203, %v3204
      %v3206 = vrot.slane %v3078, 5
      %v3207 = vrot.slane %v3206, 4
      %v3208 = vrot.slane %v3079, 5
      %v3209 = vsel %vm1055, %v3207, %v3208
      %v3210 = vrot.slane %v3208, 4
      %v3211 = vrot.slane %v3080, 5
      %v3212 = vsel %vm1055, %v3210, %v3211
      %v3213 = vrot.slane %v3081, 5
      %v3214 = vrot.slane %v3213, 4
      %v3215 = vrot.slane %v3082, 5
      %v3216 = vsel %vm1055, %v3214, %v3215
      %v3217 = vrot.slane %v3215, 4
      %v3218 = vrot.slane %v3083, 5
      %v3219 = vsel %vm1055, %v3217, %v3218
      %v3220 = vrot.slane %v3084, 5
      %v3221 = vrot.slane %v3220, 4
      %v3222 = vrot.slane %v3085, 5
      %v3223 = vsel %vm1055, %v3221, %v3222
      %v3224 = vrot.slane %v3222, 4
      %v3225 = vrot.slane %v3086, 5
      %v3226 = vsel %vm1055, %v3224, %v3225
      %v3227 = vrot.slane %v3087, 5
      %v3228 = vrot.slane %v3227, 4
      %v3229 = vrot.slane %v3088, 5
      %v3230 = vsel %vm1055, %v3228, %v3229
      %v3231 = vrot.slane %v3229, 4
      %v3232 = vrot.slane %v3089, 5
      %v3233 = vsel %vm1055, %v3231, %v3232
      %v3234 = vrot.slane %v3090, 5
      %v3235 = vrot.slane %v3234, 4
      %v3236 = vrot.slane %v3091, 5
      %v3237 = vsel %vm1055, %v3235, %v3236
      %v3238 = vrot.slane %v3236, 4
      %v3239 = vrot.slane %v3092, 5
      %v3240 = vsel %vm1055, %v3238, %v3239
      %v3241 = vrot.slane %v3093, 5
      %v3242 = vrot.slane %v3241, 4
      %v3243 = vrot.slane %v3094, 5
      %v3244 = vsel %vm1055, %v3242, %v3243
      %v3245 = vrot.slane %v3243, 4
      %v3246 = vrot.slane %v3095, 5
      %v3247 = vsel %vm1055, %v3245, %v3246
      %v3248 = vrot.slane %v3096, 5
      %v3249 = vrot.slane %v3248, 4
      %v3250 = vrot.slane %v3097, 5
      %v3251 = vsel %vm1055, %v3249, %v3250
      %v3252 = vrot.slane %v3250, 4
      %v3253 = vrot.slane %v3098, 5
      %v3254 = vsel %vm1055, %v3252, %v3253
      %v3255 = vrot.slane %v3099, 5
      %v3256 = vrot.slane %v3255, 4
      %v3257 = vrot.slane %v3100, 5
      %v3258 = vsel %vm1055, %v3256, %v3257
      %v3259 = vrot.slane %v3257, 4
      %v3260 = vrot.slane %v3101, 5
      %v3261 = vsel %vm1055, %v3259, %v3260
      %v3262 = vunpack.c.l.b16 %v3153
      %v3263 = vunpack.c.l.b16 %v3156
      %v3264 = vunpack.c.l.b16 %v3160
      %v3265 = vunpack.c.l.b16 %v3163
      %v3266 = vunpack.c.l.b16 %v3167
      %v3267 = vunpack.c.l.b16 %v3170
      %v3268 = vunpack.c.l.b16 %v3174
      %v3269 = vunpack.c.l.b16 %v3177
      %v3270 = vunpack.c.l.b16 %v3181
      %v3271 = vunpack.c.l.b16 %v3184
      %v3272 = vunpack.c.l.b16 %v3188
      %v3273 = vunpack.c.l.b16 %v3191
      %v3274 = vunpack.c.l.b16 %v3195
      %v3275 = vunpack.c.l.b16 %v3198
      %v3276 = vunpack.c.l.b16 %v3202
      %v3277 = vunpack.c.l.b16 %v3205
      %v3278 = vunpack.c.l.b16 %v3209
      %v3279 = vunpack.c.l.b16 %v3212
      %v3280 = vunpack.c.l.b16 %v3216
      %v3281 = vunpack.c.l.b16 %v3219
      %v3282 = vunpack.c.l.b16 %v3223
      %v3283 = vunpack.c.l.b16 %v3226
      %v3284 = vunpack.c.l.b16 %v3230
      %v3285 = vunpack.c.l.b16 %v3233
      %v3286 = vunpack.c.l.b16 %v3237
      %v3287 = vunpack.c.l.b16 %v3240
      %v3288 = vunpack.c.l.b16 %v3244
      %v3289 = vunpack.c.l.b16 %v3247
      %v3290 = vunpack.c.l.b16 %v3251
      %v3291 = vunpack.c.l.b16 %v3254
      %v3292 = vunpack.c.l.b16 %v3258
      %v3293 = vunpack.c.l.b16 %v3261
      %v3294 = vpack.c.b16 %v3263, %v3262
      %v3295 = vpack.c.b16 %v3265, %v3264
      %v3296 = vpack.c.b16 %v3267, %v3266
      %v3297 = vpack.c.b16 %v3269, %v3268
      %v3298 = vpack.c.b16 %v3271, %v3270
      %v3299 = vpack.c.b16 %v3273, %v3272
      %v3300 = vpack.c.b16 %v3275, %v3274
      %v3301 = vpack.c.b16 %v3277, %v3276
      %v3302 = vpack.c.b16 %v3279, %v3278
      %v3303 = vpack.c.b16 %v3281, %v3280
      %v3304 = vpack.c.b16 %v3283, %v3282
      %v3305 = vpack.c.b16 %v3285, %v3284
      %v3306 = vpack.c.b16 %v3287, %v3286
      %v3307 = vpack.c.b16 %v3289, %v3288
      %v3308 = vpack.c.b16 %v3291, %v3290
      %v3309 = vpack.c.b16 %v3293, %v3292
      %3310 = vrot.lane.b32.xlu0 %v3294, 64
      %v3311 = vpop.permute.xlu0 %3310
      %3312 = vrot.lane.b32.xlu0 %v3295, 64
      %v3313 = vpop.permute.xlu0 %3312
      %3314 = vrot.lane.b32.xlu0 %v3296, 64
      %v3315 = vpop.permute.xlu0 %3314
      %3316 = vrot.lane.b32.xlu0 %v3297, 64
      %v3317 = vpop.permute.xlu0 %3316
      %3318 = vrot.lane.b32.xlu0 %v3298, 64
      %v3319 = vpop.permute.xlu0 %3318
      %3320 = vrot.lane.b32.xlu0 %v3299, 64
      %v3321 = vpop.permute.xlu0 %3320
      %3322 = vrot.lane.b32.xlu0 %v3300, 64
      %v3323 = vpop.permute.xlu0 %3322
      %3324 = vrot.lane.b32.xlu0 %v3301, 64
      %v3325 = vpop.permute.xlu0 %3324
      %3326 = vrot.lane.b32.xlu0 %v3302, 64
      %v3327 = vpop.permute.xlu0 %3326
      %3328 = vrot.lane.b32.xlu0 %v3303, 64
      %v3329 = vpop.permute.xlu0 %3328
      %3330 = vrot.lane.b32.xlu0 %v3304, 64
      %v3331 = vpop.permute.xlu0 %3330
      %3332 = vrot.lane.b32.xlu0 %v3305, 64
      %v3333 = vpop.permute.xlu0 %3332
      %3334 = vrot.lane.b32.xlu0 %v3306, 64
      %v3335 = vpop.permute.xlu0 %3334
      %3336 = vrot.lane.b32.xlu0 %v3307, 64
      %v3337 = vpop.permute.xlu0 %3336
      %3338 = vrot.lane.b32.xlu0 %v3308, 64
      %v3339 = vpop.permute.xlu0 %3338
      %3340 = vrot.lane.b32.xlu0 %v3309, 64
      %v3341 = vpop.permute.xlu0 %3340
      %vm3358 = vcmask 589312
      %3359 = vst.msk [vmem:[#allocation2] sm:$0xff] %vm3358, %v3311
      %3360 = vst.msk [vmem:[#allocation2 + $0x8] sm:$0xff] %vm3358, %v3313
      %3361 = vst.msk [vmem:[#allocation2 + $0x10] sm:$0xff] %vm3358, %v3315
      %3362 = vst.msk [vmem:[#allocation2 + $0x18] sm:$0xff] %vm3358, %v3317
      %3363 = vst.msk [vmem:[#allocation2 + $0x20] sm:$0xff] %vm3358, %v3319
      %3364 = vst.msk [vmem:[#allocation2 + $0x28] sm:$0xff] %vm3358, %v3321
      %3365 = vst.msk [vmem:[#allocation2 + $0x30] sm:$0xff] %vm3358, %v3323
      %3366 = vst.msk [vmem:[#allocation2 + $0x38] sm:$0xff] %vm3358, %v3325
      %3367 = vst.msk [vmem:[#allocation2 + $0x40] sm:$0xff] %vm3358, %v3327
      %3368 = vst.msk [vmem:[#allocation2 + $0x48] sm:$0xff] %vm3358, %v3329
      %3369 = vst.msk [vmem:[#allocation2 + $0x50] sm:$0xff] %vm3358, %v3331
      %3370 = vst.msk [vmem:[#allocation2 + $0x58] sm:$0xff] %vm3358, %v3333
      %3371 = vst.msk [vmem:[#allocation2 + $0x60] sm:$0xff] %vm3358, %v3335
      %3372 = vst.msk [vmem:[#allocation2 + $0x68] sm:$0xff] %vm3358, %v3337
      %3373 = vst.msk [vmem:[#allocation2 + $0x70] sm:$0xff] %vm3358, %v3339
      %3374 = vst.msk [vmem:[#allocation2 + $0x78] sm:$0xff] %vm3358, %v3341
      %v3375 = vld [vmem:[#allocation2] sm:$0xff]
      %v3376 = vld [vmem:[#allocation2 + $0x8] sm:$0xff]
      %v3377 = vld [vmem:[#allocation2 + $0x10] sm:$0xff]
      %v3378 = vld [vmem:[#allocation2 + $0x18] sm:$0xff]
      %v3379 = vld [vmem:[#allocation2 + $0x20] sm:$0xff]
      %v3380 = vld [vmem:[#allocation2 + $0x28] sm:$0xff]
      %v3381 = vld [vmem:[#allocation2 + $0x30] sm:$0xff]
      %v3382 = vld [vmem:[#allocation2 + $0x38] sm:$0xff]
      %v3383 = vld [vmem:[#allocation2 + $0x40] sm:$0xff]
      %v3384 = vld [vmem:[#allocation2 + $0x48] sm:$0xff]
      %v3385 = vld [vmem:[#allocation2 + $0x50] sm:$0xff]
      %v3386 = vld [vmem:[#allocation2 + $0x58] sm:$0xff]
      %v3387 = vld [vmem:[#allocation2 + $0x60] sm:$0xff]
      %v3388 = vld [vmem:[#allocation2 + $0x68] sm:$0xff]
      %v3389 = vld [vmem:[#allocation2 + $0x70] sm:$0xff]
      %v3390 = vld [vmem:[#allocation2 + $0x78] sm:$0xff]
      %v3391 = vld [vmem:[%s241] sm:$0xf]
      %v3392 = vld [vmem:[%s241 + $0x4] sm:$0xf]
      %v3393 = vld [vmem:[%s241 + $0x8] sm:$0xf]
      %v3394 = vld [vmem:[%s241 + $0xc] sm:$0xf]
      %v3395 = vld [vmem:[%s241 + $0x10] sm:$0xf]
      %v3396 = vld [vmem:[%s241 + $0x14] sm:$0xf]
      %v3397 = vld [vmem:[%s241 + $0x18] sm:$0xf]
      %v3398 = vld [vmem:[%s241 + $0x1c] sm:$0xf]
      %v3399 = vld [vmem:[%s241 + $0x20] sm:$0xf]
      %v3400 = vld [vmem:[%s244] sm:$0x1]
      %v3402 = vlaneseq
      %v3403 = vshrl.u32 %v3402, 7
      %v3404 = vsub.s32 0, %v3403
      %v3405 = vrot.slane %v3400, %v3404
      %v3416 = vunpack.c.l.b16 %v3391
      %v3417 = vunpack.c.l.b16 %v3392
      %v3418 = vunpack.c.l.b16 %v3393
      %v3419 = vunpack.c.l.b16 %v3394
      %v3420 = vunpack.c.l.b16 %v3395
      %v3421 = vunpack.c.l.b16 %v3396
      %v3422 = vunpack.c.l.b16 %v3397
      %v3423 = vunpack.c.l.b16 %v3398
      %v3424 = vunpack.c.l.b16 %v3399
      %v3425 = vpack.c.b16 %v3417, %v3416
      %v3426 = vpack.c.b16 %v3419, %v3418
      %v3427 = vpack.c.b16 %v3421, %v3420
      %v3428 = vpack.c.b16 %v3423, %v3422
      %v3429 = vpack.c.b16 %v3424, %v3424
      %vm3434 = vcmask 588800
      %v3436 = vsel %vm3434, %v3375, 0
      %v3439 = vsel %vm3434, %v3376, 0
      %v3442 = vsel %vm3434, %v3377, 0
      %v3445 = vsel %vm3434, %v3378, 0
      %v3448 = vsel %vm3434, %v3379, 0
      %v3451 = vsel %vm3434, %v3380, 0
      %v3454 = vsel %vm3434, %v3381, 0
      %v3457 = vsel %vm3434, %v3382, 0
      %v3460 = vsel %vm3434, %v3383, 0
      %v3463 = vsel %vm3434, %v3384, 0
      %v3466 = vsel %vm3434, %v3385, 0
      %v3469 = vsel %vm3434, %v3386, 0
      %v3472 = vsel %vm3434, %v3387, 0
      %v3475 = vsel %vm3434, %v3388, 0
      %v3478 = vsel %vm3434, %v3389, 0
      %v3481 = vsel %vm3434, %v3390, 0
      %vm3483 = vcmask 1043456
      %v3485 = vsel %vm3483, %v3429, 0
      %3487 = vmatprep.subr.bf16.mxu0 0
      %3488 = vmatpush1.bf16.msra.mxu0 %v3425
      %3489 = vmatprep.subr.bf16.mxu0 0
      %3490 = vmatpush1.bf16.msra.mxu0 %v3426
      %3491 = vmatprep.subr.bf16.mxu0 0
      %3492 = vmatpush1.bf16.msra.mxu0 %v3427
      %3493 = vmatprep.subr.bf16.mxu0 0
      %3494 = vmatpush1.bf16.msra.mxu0 %v3428
      %3495 = vmatprep.subr.bf16.mxu0 0
      %3496 = vmatpush1.bf16.msra.mxu0 %v3485
      %3497 = vmatprep.subr.bf16.mxu0 0
      %3498 = vmatpush1.bf16.msra.mxu0 0
      %3499 = vmatprep.subr.bf16.mxu0 0
      %3500 = vmatpush1.bf16.msra.mxu0 0
      %3501 = vmatprep.subr.bf16.mxu0 0
      %3502 = vmatpush1.bf16.msra.mxu0 0
      %3503 = vmatprep.subr.bf16.mxu0 0
      %3504 = vmatpush1.bf16.msra.mxu0 0
      %3505 = vmatprep.subr.bf16.mxu0 0
      %3506 = vmatpush1.bf16.msra.mxu0 0
      %3507 = vmatprep.subr.bf16.mxu0 0
      %3508 = vmatpush1.bf16.msra.mxu0 0
      %3509 = vmatprep.subr.bf16.mxu0 0
      %3510 = vmatpush1.bf16.msra.mxu0 0
      %3511 = vmatprep.subr.bf16.mxu0 0
      %3512 = vmatpush1.bf16.msra.mxu0 0
      %3513 = vmatprep.subr.bf16.mxu0 0
      %3514 = vmatpush1.bf16.msra.mxu0 0
      %3515 = vmatprep.subr.bf16.mxu0 0
      %3516 = vmatpush1.bf16.msra.mxu0 0
      %3517 = vmatprep.subr.bf16.mxu0 0
      %3518 = vmatpush1.bf16.msra.mxu0 0
      %3519 = vmatprep.mubr.bf16.mxu0 0
      %3520 = vmatmul.mubr.bf16.gmra.mrb[0].mxu0 %v3436
      %v3521 = vpop.f32.mrb[0].mxu0
      %v3522 = vadd.f32 %v3405, %v3521
      %v3523 = vpop.f32.mrb[0].mxu0
      %v3524 = vpop.f32.mrb[0].mxu0
      %v3525 = vadd.f32 %v3405, %v3524
      %v3526 = vpop.f32.mrb[0].mxu0
      %3527 = vmatprep.mubr.bf16.mxu0 0
      %3528 = vmatmul.mubr.bf16.gmra.mrb[0].mxu0 %v3439
      %v3529 = vpop.f32.mrb[0].mxu0
      %v3530 = vadd.f32 %v3405, %v3529
      %v3531 = vpop.f32.mrb[0].mxu0
      %v3532 = vpop.f32.mrb[0].mxu0
      %v3533 = vadd.f32 %v3405, %v3532
      %v3534 = vpop.f32.mrb[0].mxu0
      %3535 = vmatprep.mubr.bf16.mxu0 0
      %3536 = vmatmul.mubr.bf16.gmra.mrb[0].mxu0 %v3442
      %v3537 = vpop.f32.mrb[0].mxu0
      %v3538 = vadd.f32 %v3405, %v3537
      %v3539 = vpop.f32.mrb[0].mxu0
      %v3540 = vpop.f32.mrb[0].mxu0
      %v3541 = vadd.f32 %v3405, %v3540
      %v3542 = vpop.f32.mrb[0].mxu0
      %3543 = vmatprep.mubr.bf16.mxu0 0
      %3544 = vmatmul.mubr.bf16.gmra.mrb[0].mxu0 %v3445
      %v3545 = vpop.f32.mrb[0].mxu0
      %v3546 = vadd.f32 %v3405, %v3545
      %v3547 = vpop.f32.mrb[0].mxu0
      %v3548 = vpop.f32.mrb[0].mxu0
      %v3549 = vadd.f32 %v3405, %v3548
      %v3550 = vpop.f32.mrb[0].mxu0
      %3551 = vmatprep.mubr.bf16.mxu0 0
      %3552 = vmatmul.mubr.bf16.gmra.mrb[0].mxu0 %v3448
      %v3553 = vpop.f32.mrb[0].mxu0
      %v3554 = vadd.f32 %v3405, %v3553
      %v3555 = vpop.f32.mrb[0].mxu0
      %v3556 = vpop.f32.mrb[0].mxu0
      %v3557 = vadd.f32 %v3405, %v3556
      %v3558 = vpop.f32.mrb[0].mxu0
      %3559 = vmatprep.mubr.bf16.mxu0 0
      %3560 = vmatmul.mubr.bf16.gmra.mrb[0].mxu0 %v3451
      %v3561 = vpop.f32.mrb[0].mxu0
      %v3562 = vadd.f32 %v3405, %v3561
      %v3563 = vpop.f32.mrb[0].mxu0
      %v3564 = vpop.f32.mrb[0].mxu0
      %v3565 = vadd.f32 %v3405, %v3564
      %v3566 = vpop.f32.mrb[0].mxu0
      %3567 = vmatprep.mubr.bf16.mxu0 0
      %3568 = vmatmul.mubr.bf16.gmra.mrb[0].mxu0 %v3454
      %v3569 = vpop.f32.mrb[0].mxu0
      %v3570 = vadd.f32 %v3405, %v3569
      %v3571 = vpop.f32.mrb[0].mxu0
      %v3572 = vpop.f32.mrb[0].mxu0
      %v3573 = vadd.f32 %v3405, %v3572
      %v3574 = vpop.f32.mrb[0].mxu0
      %3575 = vmatprep.mubr.bf16.mxu0 0
      %3576 = vmatmul.mubr.bf16.gmra.mrb[0].mxu0 %v3457
      %v3577 = vpop.f32.mrb[0].mxu0
      %v3578 = vadd.f32 %v3405, %v3577
      %v3579 = vpop.f32.mrb[0].mxu0
      %v3580 = vpop.f32.mrb[0].mxu0
      %v3581 = vadd.f32 %v3405, %v3580
      %v3582 = vpop.f32.mrb[0].mxu0
      %3583 = vmatprep.mubr.bf16.mxu0 0
      %3584 = vmatmul.mubr.bf16.gmra.mrb[0].mxu0 %v3460
      %v3585 = vpop.f32.mrb[0].mxu0
      %v3586 = vadd.f32 %v3405, %v3585
      %v3587 = vpop.f32.mrb[0].mxu0
      %v3588 = vpop.f32.mrb[0].mxu0
      %v3589 = vadd.f32 %v3405, %v3588
      %v3590 = vpop.f32.mrb[0].mxu0
      %3591 = vmatprep.mubr.bf16.mxu0 0
      %3592 = vmatmul.mubr.bf16.gmra.mrb[0].mxu0 %v3463
      %v3593 = vpop.f32.mrb[0].mxu0
      %v3594 = vadd.f32 %v3405, %v3593
      %v3595 = vpop.f32.mrb[0].mxu0
      %v3596 = vpop.f32.mrb[0].mxu0
      %v3597 = vadd.f32 %v3405, %v3596
      %v3598 = vpop.f32.mrb[0].mxu0
      %3599 = vmatprep.mubr.bf16.mxu0 0
      %3600 = vmatmul.mubr.bf16.gmra.mrb[0].mxu0 %v3466
      %v3601 = vpop.f32.mrb[0].mxu0
      %v3602 = vadd.f32 %v3405, %v3601
      %v3603 = vpop.f32.mrb[0].mxu0
      %v3604 = vpop.f32.mrb[0].mxu0
      %v3605 = vadd.f32 %v3405, %v3604
      %v3606 = vpop.f32.mrb[0].mxu0
      %3607 = vmatprep.mubr.bf16.mxu0 0
      %3608 = vmatmul.mubr.bf16.gmra.mrb[0].mxu0 %v3469
      %v3609 = vpop.f32.mrb[0].mxu0
      %v3610 = vadd.f32 %v3405, %v3609
      %v3611 = vpop.f32.mrb[0].mxu0
      %v3612 = vpop.f32.mrb[0].mxu0
      %v3613 = vadd.f32 %v3405, %v3612
      %v3614 = vpop.f32.mrb[0].mxu0
      %3615 = vmatprep.mubr.bf16.mxu0 0
      %3616 = vmatmul.mubr.bf16.gmra.mrb[0].mxu0 %v3472
      %v3617 = vpop.f32.mrb[0].mxu0
      %v3618 = vadd.f32 %v3405, %v3617
      %v3619 = vpop.f32.mrb[0].mxu0
      %v3620 = vpop.f32.mrb[0].mxu0
      %v3621 = vadd.f32 %v3405, %v3620
      %v3622 = vpop.f32.mrb[0].mxu0
      %3623 = vmatprep.mubr.bf16.mxu0 0
      %3624 = vmatmul.mubr.bf16.gmra.mrb[0].mxu0 %v3475
      %v3625 = vpop.f32.mrb[0].mxu0
      %v3626 = vadd.f32 %v3405, %v3625
      %v3627 = vpop.f32.mrb[0].mxu0
      %v3628 = vpop.f32.mrb[0].mxu0
      %v3629 = vadd.f32 %v3405, %v3628
      %v3630 = vpop.f32.mrb[0].mxu0
      %3631 = vmatprep.mubr.bf16.mxu0 0
      %3632 = vmatmul.mubr.bf16.gmra.mrb[0].mxu0 %v3478
      %v3633 = vpop.f32.mrb[0].mxu0
      %v3634 = vadd.f32 %v3405, %v3633
      %v3635 = vpop.f32.mrb[0].mxu0
      %v3636 = vpop.f32.mrb[0].mxu0
      %v3637 = vadd.f32 %v3405, %v3636
      %v3638 = vpop.f32.mrb[0].mxu0
      %3639 = vmatprep.mubr.bf16.mxu0 0
      %3640 = vmatmul.mubr.bf16.gmra.mrb[0].mxu0 %v3481
      %v3641 = vpop.f32.mrb[0].mxu0
      %v3642 = vadd.f32 %v3405, %v3641
      %v3643 = vpop.f32.mrb[0].mxu0
      %v3644 = vpop.f32.mrb[0].mxu0
      %v3645 = vadd.f32 %v3405, %v3644
      %v3646 = vpop.f32.mrb[0].mxu0
      %3647 = vdwg.mxu0
      %vm3648 = vcmask 130048
      %3649 = vst.msk [vmem:[%s257] sm:$0xff] %vm3648, %v3522
      %3650 = vst.msk [vmem:[%s257 + $0x8] sm:$0xff] %vm3648, %v3525
      %3651 = vst.msk [vmem:[%s257 + $0x10] sm:$0xff] %vm3648, %v3530
      %3652 = vst.msk [vmem:[%s257 + $0x18] sm:$0xff] %vm3648, %v3533
      %3653 = vst.msk [vmem:[%s257 + $0x20] sm:$0xff] %vm3648, %v3538
      %3654 = vst.msk [vmem:[%s257 + $0x28] sm:$0xff] %vm3648, %v3541
      %3655 = vst.msk [vmem:[%s257 + $0x30] sm:$0xff] %vm3648, %v3546
      %3656 = vst.msk [vmem:[%s257 + $0x38] sm:$0xff] %vm3648, %v3549
      %3657 = vst.msk [vmem:[%s257 + $0x40] sm:$0xff] %vm3648, %v3554
      %3658 = vst.msk [vmem:[%s257 + $0x48] sm:$0xff] %vm3648, %v3557
      %3659 = vst.msk [vmem:[%s257 + $0x50] sm:$0xff] %vm3648, %v3562
      %3660 = vst.msk [vmem:[%s257 + $0x58] sm:$0xff] %vm3648, %v3565
      %3661 = vst.msk [vmem:[%s257 + $0x60] sm:$0xff] %vm3648, %v3570
      %3662 = vst.msk [vmem:[%s257 + $0x68] sm:$0xff] %vm3648, %v3573
      %3663 = vst.msk [vmem:[%s257 + $0x70] sm:$0xff] %vm3648, %v3578
      %3664 = vst.msk [vmem:[%s257 + $0x78] sm:$0xff] %vm3648, %v3581
      %3665 = vst.msk [vmem:[%s257 + $0x80] sm:$0xff] %vm3648, %v3586
      %3666 = vst.msk [vmem:[%s257 + $0x88] sm:$0xff] %vm3648, %v3589
      %3667 = vst.msk [vmem:[%s257 + $0x90] sm:$0xff] %vm3648, %v3594
      %3668 = vst.msk [vmem:[%s257 + $0x98] sm:$0xff] %vm3648, %v3597
      %3669 = vst.msk [vmem:[%s257 + $0xa0] sm:$0xff] %vm3648, %v3602
      %3670 = vst.msk [vmem:[%s257 + $0xa8] sm:$0xff] %vm3648, %v3605
      %3671 = vst.msk [vmem:[%s257 + $0xb0] sm:$0xff] %vm3648, %v3610
      %3672 = vst.msk [vmem:[%s257 + $0xb8] sm:$0xff] %vm3648, %v3613
      %3673 = vst.msk [vmem:[%s257 + $0xc0] sm:$0xff] %vm3648, %v3618
      %3674 = vst.msk [vmem:[%s257 + $0xc8] sm:$0xff] %vm3648, %v3621
      %3675 = vst.msk [vmem:[%s257 + $0xd0] sm:$0xff] %vm3648, %v3626
      %3676 = vst.msk [vmem:[%s257 + $0xd8] sm:$0xff] %vm3648, %v3629
      %3677 = vst.msk [vmem:[%s257 + $0xe0] sm:$0xff] %vm3648, %v3634
      %3678 = vst.msk [vmem:[%s257 + $0xe8] sm:$0xff] %vm3648, %v3637
      %3679 = vst.msk [vmem:[%s257 + $0xf0] sm:$0xff] %vm3648, %v3642
      %3680 = vst.msk [vmem:[%s257 + $0xf8] sm:$0xff] %vm3648, %v3645
      %s3681 = smul.u32 32, %s21
      %p3682 = scmp.lt.s32.totalorder %s20, 1
      %s3683 = scalar_select %p3682, %s20, 1
      %p3684 = scmp.lt.s32.totalorder %s19, 0
      %s3685 = scalar_select %p3684, %s19, 0
      %p3686 = scmp.lt.s32.totalorder %s3681, 31
      %s3687 = scalar_select %p3686, %s3681, 31
      %s3688 = smul.addr %s3685, 32
      %s3689 = sadd.s32 %s3687, %s3688
      %s3690 = smul.addr %s3683, 32
      %s3691 = sadd.s32 %s3689, %s3690
      %s3692 = smul.addr %s3691, 8
      %s3693 = scalar_lea.vmem %s3, %s3692
      // Predicated region
      $region33: #{rcp_o4_conv2d_forward.1} parent=31 // pred_check
        %p3694 = pneg %p135
      $region34: #{rcp_o4_conv2d_forward.1} parent=31 // pred_check_branch
        %3696 = sbr.rel (%p3694) target = $region36
      $region35: #{rcp_o4_conv2d_forward.1} parent=31 // pred_region
        %s3697 = smul.u32 32, %s21
      $region36: #{rcp_o4_conv2d_forward.1} parent=31 // pred_fallthru
        _
    $region32: #{rcp_o4_conv2d_forward.1} parent=5 // pred_fallthru
      _
    %p3698 = scmp.le.s32.totalorder 2, %s9
    // Predicated region
    $region37: #{rcp_o4_conv2d_forward.1} parent=5 // pred_check
      %p3699 = pneg %p3698
    $region38: #{rcp_o4_conv2d_forward.1} parent=5 // pred_check_branch
      %3701 = sbr.rel (%p3699) target = $region40
    $region39: #{rcp_o4_conv2d_forward.1} parent=5 // pred_region
      %s3702 = ssub.s32 %s9, 2
      // Predicated region
      $region41: #{rcp_o4_conv2d_forward.1} parent=39 // pred_check
        %p3703 = pneg %p141
      $region42: #{rcp_o4_conv2d_forward.1} parent=39 // pred_check_branch
        %3705 = sbr.rel (%p3703) target = $region44
      $region43: #{rcp_o4_conv2d_forward.1} parent=39 // pred_region
        %s3706 = smul.u32 32, %s24
        %p3707 = scmp.lt.s32.totalorder %s23, 1
        %s3708 = scalar_select %p3707, %s23, 1
        %p3709 = scmp.lt.s32.totalorder %s22, 0
        %s3710 = scalar_select %p3709, %s22, 0
        %p3711 = scmp.lt.s32.totalorder %s3706, 31
        %s3712 = scalar_select %p3711, %s3706, 31
        %s3713 = smul.addr %s3710, 32
        %s3714 = sadd.s32 %s3712, %s3713
        %s3715 = smul.addr %s3708, 32
        %s3716 = sadd.s32 %s3714, %s3715
        %s3717 = smul.addr %s3716, 8
        %s3718 = scalar_lea.vmem %s3, %s3717
      $region44: #{rcp_o4_conv2d_forward.1} parent=39 // pred_fallthru
        _
    $region40: #{rcp_o4_conv2d_forward.1} parent=5 // pred_fallthru
      _
  $region6: #{rcp_o4_conv2d_forward.1} parent=0 // loop_footer
    %s13 = sadd.s32 1, %s9
  $region7: #{rcp_o4_conv2d_forward.1} parent=0 // loop_footer_branch
    %8 = sbr.rel target = $region3
  $region8: #{rcp_o4_conv2d_forward.1} parent=0 // loop_exit
    _

</llo_original>
